<compile_context>
chip_gen: v5e
topology: v5e:2x2
jax: 0.10.0
libtpu: 0.0.40
codegen_flags: <defaults>
</compile_context>

<pallas_src>
import functools
import math

import jax
import jax.numpy as jnp
from jax.experimental import pallas as pl
from jax.experimental.pallas import tpu as pltpu

_MXU_DTYPE = jnp.bfloat16      # MXU operand dtype (f32 accumulation everywhere)
_NEG_INF = -1e9


# ----------------------------------------------------------------------------
# In-kernel helpers
# ----------------------------------------------------------------------------

def _mm(a, b):
    """MXU matmul: bf16 operands, f32 accumulation."""
    return jnp.dot(a.astype(_MXU_DTYPE), b.astype(_MXU_DTYPE),
                   preferred_element_type=jnp.float32)


def _mm_nt(a, b):
    """a @ b.T (contract last dims of both) -- MXU-friendly 'NT' matmul."""
    return jax.lax.dot_general(a.astype(_MXU_DTYPE), b.astype(_MXU_DTYPE),
                               (((1,), (1,)), ((), ())),
                               preferred_element_type=jnp.float32)


def _layernorm(v, g, b, eps=1e-5):
    mu = jnp.mean(v, axis=-1, keepdims=True)
    d = v - mu
    var = jnp.mean(d * d, axis=-1, keepdims=True)
    return d * jax.lax.rsqrt(var + eps) * g + b


def _softmax_last(v):
    m = jnp.max(v, axis=-1, keepdims=True)
    e = jnp.exp(v - m)
    return e / jnp.sum(e, axis=-1, keepdims=True)


# ----------------------------------------------------------------------------
# Parameter flattening / BlockSpec helpers
# ----------------------------------------------------------------------------

_ENC_DEC_NAMES = (
    "cls",
    "wq", "bq", "wk", "bk", "wv", "bv", "wo", "bo",
    "ln1g", "ln1b", "w1", "b1", "w2", "b2", "ln2g", "ln2b",
    "dlng", "dlnb", "dw1", "db1", "dw2", "db2",
)


def _weight_names(num_gcn_layer):
    names = ["w0cat", "b0cat"]
    for i in range(1, num_gcn_layer):
        names += [f"we{i}", f"be{i}", f"wa{i}", f"ba{i}"]
    return names + list(_ENC_DEC_NAMES)


def _const_spec(arr):
    """Full-array block with constant index_map -> weight stays VMEM-resident."""
    nd = arr.ndim
    return pl.BlockSpec(arr.shape, lambda i, _nd=nd: (0,) * _nd)


# ----------------------------------------------------------------------------
# Fully fused forward pass (one pallas_call, grid over the batch)
# ----------------------------------------------------------------------------

def model_forward(x, adj, params, *, num_gcn_layer, heads):
    B, N, in_dim = x.shape
    hid = params["cls"].shape[-1]
    A = params["pos_embedding"].shape[1] - 1        # assign_dim
    a0 = params["w0cat"].shape[-1] - hid            # assign width of merged layer 0
    depth, _, _, Dh = params["wq"].shape
    S = A + 1                                       # pooled clusters + cls token
    scale = 1.0 / math.sqrt(Dh)

    names = _weight_names(num_gcn_layer)
    arrays = [params[n] for n in names]
    n_w = len(names)

    def kernel(*refs):
        assert len(refs) == n_w + 8
        x_ref, adj_ref = refs[0], refs[1]
        w = dict(zip(names, refs[2:2 + n_w]))
        emb_ref, asn_ref, dec_ref, avg_ref = refs[2 + n_w:6 + n_w]
        bias_scr, oh_scr = refs[6 + n_w], refs[7 + n_w]

        xv = x_ref[...]                                           # (N, in_dim)
        adjv = adj_ref[...]                                       # (N, N)

        # --- adjacency: self loops + row normalisation (in-kernel, no XLA glue)
        rr = jax.lax.broadcasted_iota(jnp.int32, (N, N), 0)
        cc = jax.lax.broadcasted_iota(jnp.int32, (N, N), 1)
        adj_sl = adjv + (rr == cc).astype(jnp.float32)
        adj_norm = adj_sl / jnp.maximum(
            jnp.sum(adj_sl, axis=-1, keepdims=True), 1e-6)

        # --- GCN layer 0: embed & assign branches share x and adj_norm, so
        #     their weights are concatenated along Dout (one wider matmul).
        # TODO(synk): SoftAssignment source not provided; ReLU GCN layers with
        # a row-softmax on the last assignment layer assumed (cat=True not
        # modeled).
        pre0 = _mm(adj_norm, _mm(xv, w["w0cat"][...]) + w["b0cat"][...])
        h_e = jnp.maximum(pre0[:, :hid], 0.0)
        pre_a = pre0[:, hid:hid + a0]
        if num_gcn_layer == 1:
            s_assign = _softmax_last(pre_a)
        else:
            h_a = jnp.maximum(pre_a, 0.0)
            for i in range(1, num_gcn_layer):
                h_e = jnp.maximum(
                    _mm(adj_norm, _mm(h_e, w[f"we{i}"][...]) + w[f"be{i}"][...]),
                    0.0)
                pa = _mm(adj_norm, _mm(h_a, w[f"wa{i}"][...]) + w[f"ba{i}"][...])
                if i == num_gcn_layer - 1:
                    s_assign = _softmax_last(pa)          # (N, A) assignment
                else:
                    h_a = jnp.maximum(pa, 0.0)
        emb_ref[...] = h_e

        # --- DiffPool pooling: assign = S^T H, new_adj = S^T A S.
        #     Kept f32: tiny (N<=16) transposed contractions; avoids a packed
        #     bf16 transpose relayout for negligible gain.
        asn = jax.lax.dot_general(s_assign, h_e, (((0,), (0,)), ((), ())),
                                  preferred_element_type=jnp.float32)   # (A, hid)
        tmp = jax.lax.dot_general(s_assign, adjv, (((0,), (0,)), ((), ())),
                                  preferred_element_type=jnp.float32)   # (A, N)
        new_adj = jnp.dot(tmp, s_assign,
                          preferred_element_type=jnp.float32)           # (A, A)
        asn_ref[...] = asn

        # --- Transformer encoder (post-norm, adjacency-masked attention).
        # TODO(synk): exact use of `new_adj` inside the reference
        # TransformerEncoder unknown; cls token fully connected assumed.
        bias_scr[...] = jnp.zeros((S, S), jnp.float32)
        bias_scr[0:A, 0:A] = jnp.where(new_adj > 0.0, 0.0, _NEG_INF)
        biasv = bias_scr[...]                                    # (S, S)
        hcur = jnp.concatenate([asn, w["cls"][...]], axis=0)     # (S, hid)

        for l in range(depth):
            # Per-head attention with pre-split (D, Dh) projections.  Each
            # head's (S, Dh) output lands in its column block of oh_scr, then
            # ONE (S, D) @ (D, D) output projection after the head loop.
            for hh in range(heads):
                qh = _mm(hcur, w["wq"][l, hh]) + w["bq"][l, hh]
                kh = _mm(hcur, w["wk"][l, hh]) + w["bk"][l, hh]
                vh = _mm(hcur, w["wv"][l, hh]) + w["bv"][l, hh]
                sc = _mm_nt(qh, kh) * scale + biasv
                oh_scr[:, hh * Dh:(hh + 1) * Dh] = _mm(_softmax_last(sc), vh)
            attn = _mm(oh_scr[...], w["wo"][l]) + w["bo"][l]
            h1 = _layernorm(hcur + attn, w["ln1g"][l], w["ln1b"][l])
            ff = jnp.maximum(_mm(h1, w["w1"][l]) + w["b1"][l], 0.0)
            ff = _mm(ff, w["w2"][l]) + w["b2"][l]
            hcur = _layernorm(h1 + ff, w["ln2g"][l], w["ln2b"][l])

        # --- readout + decoder (LN -> Linear -> GELU -> Linear), fused.
        avg_ref[...] = jnp.mean(hcur[:A, :], axis=0, keepdims=True)
        dh = _layernorm(hcur[A:A + 1, :], w["dlng"][...], w["dlnb"][...])
        # TODO(synk): PyTorch nn.GELU defaults to the erf form; tanh approx
        # used here for guaranteed Mosaic lowering.
        dh = jax.nn.gelu(_mm(dh, w["dw1"][...]) + w["db1"][...], approximate=True)
        dec_ref[...] = _mm(dh, w["dw2"][...]) + w["db2"][...]

    in_specs = [
        pl.BlockSpec((None, N, in_dim), lambda i: (i, 0, 0)),
        pl.BlockSpec((None, N, N), lambda i: (i, 0, 0)),
    ] + [_const_spec(a) for a in arrays]

    out_shape = (
        jax.ShapeDtypeStruct((B, N, hid), jnp.float32),   # embedding_tensor
        jax.ShapeDtypeStruct((B, A, hid), jnp.float32),   # assign_tensor
        jax.ShapeDtypeStruct((B, 1, hid), jnp.float32),   # decoder(cls)
        jax.ShapeDtypeStruct((B, 1, hid), jnp.float32),   # average_pooling
    )
    out_specs = (
        pl.BlockSpec((None, N, hid), lambda i: (i, 0, 0)),
        pl.BlockSpec((None, A, hid), lambda i: (i, 0, 0)),
        pl.BlockSpec((None, 1, hid), lambda i: (i, 0, 0)),
        pl.BlockSpec((None, 1, hid), lambda i: (i, 0, 0)),
    )

    emb, asn, dec, avg = pl.pallas_call(
        kernel,
        out_shape=out_shape,
        grid=(B,),
        in_specs=in_specs,
        out_specs=out_specs,
        scratch_shapes=[
            pltpu.VMEM((S, S), jnp.float32),      # attention bias (adj mask)
            pltpu.VMEM((S, hid), jnp.float32),    # per-head output concat
        ],
        compiler_params=pltpu.CompilerParams(
            dimension_semantics=("parallel",)),   # batch across TCs on v7x
    )(x, adj, *arrays)

    return emb, asn, dec[:, 0], avg[:, 0]


# ----------------------------------------------------------------------------
# Deterministic parameter initialization
# ----------------------------------------------------------------------------

def init_params(key, num_gcn_layer, in_dim, hid_dim, dim_feedforward,
                assign_dim, depth, heads):
    keys = iter(jax.random.split(key, 64))
    Dh = hid_dim // heads

    def nrm(shape, dtype=_MXU_DTYPE, scale=0.1):
        return (scale * jax.random.normal(next(keys), shape, jnp.float32)
                ).astype(dtype)

    def zeros(shape):
        return jnp.zeros(shape, jnp.float32)

    embed_dims = [in_dim] + [hid_dim] * num_gcn_layer
    assign_dims = [in_dim] + [hid_dim] * (num_gcn_layer - 1) + [assign_dim]

    p = {}
    # GCN layer 0: embed and assign branch weights concatenated along Dout.
    p["w0cat"] = nrm((in_dim, embed_dims[1] + assign_dims[1]))
    p["b0cat"] = zeros((1, embed_dims[1] + assign_dims[1]))
    for i in range(1, num_gcn_layer):
        p[f"we{i}"] = nrm((embed_dims[i], embed_dims[i + 1]))
        p[f"be{i}"] = zeros((1, embed_dims[i + 1]))
        p[f"wa{i}"] = nrm((assign_dims[i], assign_dims[i + 1]))
        p[f"ba{i}"] = zeros((1, assign_dims[i + 1]))

    p["cls"] = nrm((1, hid_dim), dtype=jnp.float32)
    # Defined by the PyTorch module but never used in forward(); kept for parity.
    p["pos_embedding"] = nrm((1, assign_dim + 1, hid_dim), dtype=jnp.float32)

    # Transformer encoder: per-head pre-split projections, stacked over depth.
    p["wq"] = nrm((depth, heads, hid_dim, Dh))
    p["wk"] = nrm((depth, heads, hid_dim, Dh))
    p["wv"] = nrm((depth, heads, hid_dim, Dh))
    p["bq"] = zeros((depth, heads, 1, Dh))
    p["bk"] = zeros((depth, heads, 1, Dh))
    p["bv"] = zeros((depth, heads, 1, Dh))
    p["wo"] = nrm((depth, hid_dim, hid_dim))
    p["bo"] = zeros((depth, 1, hid_dim))
    p["ln1g"] = jnp.ones((depth, 1, hid_dim), jnp.float32)
    p["ln1b"] = zeros((depth, 1, hid_dim))
    p["w1"] = nrm((depth, hid_dim, dim_feedforward))
    p["b1"] = zeros((depth, 1, dim_feedforward))
    p["w2"] = nrm((depth, dim_feedforward, hid_dim))
    p["b2"] = zeros((depth, 1, hid_dim))
    p["ln2g"] = jnp.ones((depth, 1, hid_dim), jnp.float32)
    p["ln2b"] = zeros((depth, 1, hid_dim))

    # Decoder: LayerNorm -> Linear -> GELU -> (Dropout=id) -> Linear.
    p["dlng"] = jnp.ones((1, hid_dim), jnp.float32)
    p["dlnb"] = zeros((1, hid_dim))
    p["dw1"] = nrm((hid_dim, hid_dim))
    p["db1"] = zeros((1, hid_dim))
    p["dw2"] = nrm((hid_dim, hid_dim))
    p["db2"] = zeros((1, hid_dim))
    return p


# ----------------------------------------------------------------------------
# Main
# ----------------------------------------------------------------------------

if __name__ == "__main__":
    # Small, forward-consistent shapes.
    B, N = 2, 16
    num_gcn_layer = 2
    in_dim = 6
    hid_dim = 32
    dim_feedforward = 64
    assign_dim = 8
    depth = 2
    heads = 4

    key = jax.random.PRNGKey(0)
    k_x, k_adj, k_p = jax.random.split(key, 3)

    x = jax.random.normal(k_x, (B, N, in_dim), jnp.float32)
    # Symmetric random binary adjacency.
    a = (jax.random.uniform(k_adj, (B, N, N)) < 0.4).astype(jnp.float32)
    adj = jnp.clip(a + jnp.transpose(a, (0, 2, 1)), 0.0, 1.0)

    params = init_params(k_p, num_gcn_layer, in_dim, hid_dim, dim_feedforward,
                         assign_dim, depth, heads)

    fwd = jax.jit(functools.partial(model_forward,
                                    num_gcn_layer=num_gcn_layer, heads=heads))
    embedding_tensor, assign_tensor, decoded, average_pooling = fwd(x, adj, params)
    jax.block_until_ready(
        (embedding_tensor, assign_tensor, decoded, average_pooling))

    assert embedding_tensor.shape == (B, N, hid_dim)
    assert assign_tensor.shape == (B, assign_dim, hid_dim)
    assert decoded.shape == (B, hid_dim)
    assert average_pooling.shape == (B, hid_dim)
    print("KERNEL_OK")
</pallas_src>

<mosaic_0001>
module attributes {stable_mosaic.version = 11 : i64} {
  func.func @kernel(%arg0: i32, %arg1: memref<1x16x6xf32, #tpu.memory_space<vmem>>, %arg2: memref<1x16x16xf32, #tpu.memory_space<vmem>>, %arg3: memref<6x64xbf16, #tpu.memory_space<vmem>>, %arg4: memref<1x64xf32, #tpu.memory_space<vmem>>, %arg5: memref<32x32xbf16, #tpu.memory_space<vmem>>, %arg6: memref<1x32xf32, #tpu.memory_space<vmem>>, %arg7: memref<32x8xbf16, #tpu.memory_space<vmem>>, %arg8: memref<1x8xf32, #tpu.memory_space<vmem>>, %arg9: memref<1x32xf32, #tpu.memory_space<vmem>>, %arg10: memref<2x4x32x8xbf16, #tpu.memory_space<vmem>>, %arg11: memref<2x4x1x8xf32, #tpu.memory_space<vmem>>, %arg12: memref<2x4x32x8xbf16, #tpu.memory_space<vmem>>, %arg13: memref<2x4x1x8xf32, #tpu.memory_space<vmem>>, %arg14: memref<2x4x32x8xbf16, #tpu.memory_space<vmem>>, %arg15: memref<2x4x1x8xf32, #tpu.memory_space<vmem>>, %arg16: memref<2x32x32xbf16, #tpu.memory_space<vmem>>, %arg17: memref<2x1x32xf32, #tpu.memory_space<vmem>>, %arg18: memref<2x1x32xf32, #tpu.memory_space<vmem>>, %arg19: memref<2x1x32xf32, #tpu.memory_space<vmem>>, %arg20: memref<2x32x64xbf16, #tpu.memory_space<vmem>>, %arg21: memref<2x1x64xf32, #tpu.memory_space<vmem>>, %arg22: memref<2x64x32xbf16, #tpu.memory_space<vmem>>, %arg23: memref<2x1x32xf32, #tpu.memory_space<vmem>>, %arg24: memref<2x1x32xf32, #tpu.memory_space<vmem>>, %arg25: memref<2x1x32xf32, #tpu.memory_space<vmem>>, %arg26: memref<1x32xf32, #tpu.memory_space<vmem>>, %arg27: memref<1x32xf32, #tpu.memory_space<vmem>>, %arg28: memref<32x32xbf16, #tpu.memory_space<vmem>>, %arg29: memref<1x32xf32, #tpu.memory_space<vmem>>, %arg30: memref<32x32xbf16, #tpu.memory_space<vmem>>, %arg31: memref<1x32xf32, #tpu.memory_space<vmem>>, %arg32: memref<1x16x32xf32, #tpu.memory_space<vmem>>, %arg33: memref<1x8x32xf32, #tpu.memory_space<vmem>>, %arg34: memref<1x1x32xf32, #tpu.memory_space<vmem>>, %arg35: memref<1x1x32xf32, #tpu.memory_space<vmem>>, %arg36: memref<9x9xf32, #tpu.memory_space<vmem>>, %arg37: memref<9x32xf32, #tpu.memory_space<vmem>>) attributes {dimension_semantics = [#tpu.dimension_semantics<parallel>], iteration_bounds = array<i64: 2>, scalar_prefetch = 0 : i64, scratch_operands = 2 : i64, tpu.core_type = #tpu.core_type<tc>, window_params = [{transform_indices = @transform_0, window_bounds = array<i64: 1, 16, 6>}, {transform_indices = @transform_1, window_bounds = array<i64: 1, 16, 16>}, {pipeline_mode = #tpu.pipeline_mode<synchronous>, transform_indices = @transform_2, window_bounds = array<i64: 6, 64>}, {pipeline_mode = #tpu.pipeline_mode<synchronous>, transform_indices = @transform_3, window_bounds = array<i64: 1, 64>}, {pipeline_mode = #tpu.pipeline_mode<synchronous>, transform_indices = @transform_4, window_bounds = array<i64: 32, 32>}, {pipeline_mode = #tpu.pipeline_mode<synchronous>, transform_indices = @transform_5, window_bounds = array<i64: 1, 32>}, {pipeline_mode = #tpu.pipeline_mode<synchronous>, transform_indices = @transform_6, window_bounds = array<i64: 32, 8>}, {pipeline_mode = #tpu.pipeline_mode<synchronous>, transform_indices = @transform_7, window_bounds = array<i64: 1, 8>}, {pipeline_mode = #tpu.pipeline_mode<synchronous>, transform_indices = @transform_8, window_bounds = array<i64: 1, 32>}, {pipeline_mode = #tpu.pipeline_mode<synchronous>, transform_indices = @transform_9, window_bounds = array<i64: 2, 4, 32, 8>}, {pipeline_mode = #tpu.pipeline_mode<synchronous>, transform_indices = @transform_10, window_bounds = array<i64: 2, 4, 1, 8>}, {pipeline_mode = #tpu.pipeline_mode<synchronous>, transform_indices = @transform_11, window_bounds = array<i64: 2, 4, 32, 8>}, {pipeline_mode = #tpu.pipeline_mode<synchronous>, transform_indices = @transform_12, window_bounds = array<i64: 2, 4, 1, 8>}, {pipeline_mode = #tpu.pipeline_mode<synchronous>, transform_indices = @transform_13, window_bounds = array<i64: 2, 4, 32, 8>}, {pipeline_mode = #tpu.pipeline_mode<synchronous>, transform_indices = @transform_14, window_bounds = array<i64: 2, 4, 1, 8>}, {pipeline_mode = #tpu.pipeline_mode<synchronous>, transform_indices = @transform_15, window_bounds = array<i64: 2, 32, 32>}, {pipeline_mode = #tpu.pipeline_mode<synchronous>, transform_indices = @transform_16, window_bounds = array<i64: 2, 1, 32>}, {pipeline_mode = #tpu.pipeline_mode<synchronous>, transform_indices = @transform_17, window_bounds = array<i64: 2, 1, 32>}, {pipeline_mode = #tpu.pipeline_mode<synchronous>, transform_indices = @transform_18, window_bounds = array<i64: 2, 1, 32>}, {pipeline_mode = #tpu.pipeline_mode<synchronous>, transform_indices = @transform_19, window_bounds = array<i64: 2, 32, 64>}, {pipeline_mode = #tpu.pipeline_mode<synchronous>, transform_indices = @transform_20, window_bounds = array<i64: 2, 1, 64>}, {pipeline_mode = #tpu.pipeline_mode<synchronous>, transform_indices = @transform_21, window_bounds = array<i64: 2, 64, 32>}, {pipeline_mode = #tpu.pipeline_mode<synchronous>, transform_indices = @transform_22, window_bounds = array<i64: 2, 1, 32>}, {pipeline_mode = #tpu.pipeline_mode<synchronous>, transform_indices = @transform_23, window_bounds = array<i64: 2, 1, 32>}, {pipeline_mode = #tpu.pipeline_mode<synchronous>, transform_indices = @transform_24, window_bounds = array<i64: 2, 1, 32>}, {pipeline_mode = #tpu.pipeline_mode<synchronous>, transform_indices = @transform_25, window_bounds = array<i64: 1, 32>}, {pipeline_mode = #tpu.pipeline_mode<synchronous>, transform_indices = @transform_26, window_bounds = array<i64: 1, 32>}, {pipeline_mode = #tpu.pipeline_mode<synchronous>, transform_indices = @transform_27, window_bounds = array<i64: 32, 32>}, {pipeline_mode = #tpu.pipeline_mode<synchronous>, transform_indices = @transform_28, window_bounds = array<i64: 1, 32>}, {pipeline_mode = #tpu.pipeline_mode<synchronous>, transform_indices = @transform_29, window_bounds = array<i64: 32, 32>}, {pipeline_mode = #tpu.pipeline_mode<synchronous>, transform_indices = @transform_30, window_bounds = array<i64: 1, 32>}, {transform_indices = @transform_31, window_bounds = array<i64: 1, 16, 32>}, {transform_indices = @transform_32, window_bounds = array<i64: 1, 8, 32>}, {transform_indices = @transform_33, window_bounds = array<i64: 1, 1, 32>}, {transform_indices = @transform_34, window_bounds = array<i64: 1, 1, 32>}]} {
    %c0 = arith.constant 0 : index
    %c0_0 = arith.constant 0 : index
    %c0_1 = arith.constant 0 : index
    %0 = vector.load %arg1[%c0, %c0_0, %c0_1] : memref<1x16x6xf32, #tpu.memory_space<vmem>>, vector<1x16x6xf32>
    %1 = vector.shape_cast %0 : vector<1x16x6xf32> to vector<16x6xf32>
    %c0_2 = arith.constant 0 : index
    %c0_3 = arith.constant 0 : index
    %c0_4 = arith.constant 0 : index
    %2 = vector.load %arg2[%c0_2, %c0_3, %c0_4] : memref<1x16x16xf32, #tpu.memory_space<vmem>>, vector<1x16x16xf32>
    %3 = vector.shape_cast %2 : vector<1x16x16xf32> to vector<16x16xf32>
    %4 = tpu.iota {dimensions = array<i32: 0>} : vector<16x16xi32>
    %5 = tpu.iota {dimensions = array<i32: 1>} : vector<16x16xi32>
    %6 = arith.cmpi eq, %4, %5 : vector<16x16xi32>
    %7 = arith.extui %6 : vector<16x16xi1> to vector<16x16xi32>
    %8 = arith.sitofp %7 : vector<16x16xi32> to vector<16x16xf32>
    %9 = arith.addf %3, %8 : vector<16x16xf32>
    %cst = arith.constant dense<0.000000e+00> : vector<16xf32>
    %10 = vector.multi_reduction <add>, %9, %cst [1] : vector<16x16xf32> to vector<16xf32>
    %11 = vector.shape_cast %10 : vector<16xf32> to vector<16x1xf32>
    %cst_5 = arith.constant 9.99999997E-7 : f32
    %12 = vector.broadcast %cst_5 : f32 to vector<16x1xf32>
    %13 = arith.maximumf %11, %12 : vector<16x1xf32>
    %14 = vector.broadcast %13 : vector<16x1xf32> to vector<16x16xf32>
    %15 = arith.divf %9, %14 : vector<16x16xf32>
    %c0_6 = arith.constant 0 : index
    %c0_7 = arith.constant 0 : index
    %16 = vector.load %arg3[%c0_6, %c0_7] : memref<6x64xbf16, #tpu.memory_space<vmem>>, vector<6x64xbf16>
    %17 = arith.truncf %1 : vector<16x6xf32> to vector<16x6xbf16>
    %cst_8 = arith.constant dense<0.000000e+00> : vector<16x64xf32>
    %18 = tpu.matmul %17, %16, %cst_8 {dimension_numbers = #tpu.dot_dimension_numbers<[1], [0], [0], [1], [0, 0, 1, 1], [], []>} : vector<16x6xbf16>, vector<6x64xbf16>, vector<16x64xf32> -> vector<16x64xf32>
    %c0_9 = arith.constant 0 : index
    %c0_10 = arith.constant 0 : index
    %19 = vector.load %arg4[%c0_9, %c0_10] : memref<1x64xf32, #tpu.memory_space<vmem>>, vector<1x64xf32>
    %20 = vector.broadcast %19 : vector<1x64xf32> to vector<16x64xf32>
    %21 = arith.addf %18, %20 : vector<16x64xf32>
    %22 = arith.truncf %15 : vector<16x16xf32> to vector<16x16xbf16>
    %23 = arith.truncf %21 : vector<16x64xf32> to vector<16x64xbf16>
    %cst_11 = arith.constant dense<0.000000e+00> : vector<16x64xf32>
    %24 = tpu.matmul %22, %23, %cst_11 {dimension_numbers = #tpu.dot_dimension_numbers<[1], [0], [0], [1], [0, 0, 1, 1], [], []>} : vector<16x16xbf16>, vector<16x64xbf16>, vector<16x64xf32> -> vector<16x64xf32>
    %25 = vector.extract_strided_slice %24 {offsets = [0, 0], sizes = [16, 32], strides = [1, 1]} : vector<16x64xf32> to vector<16x32xf32>
    %cst_12 = arith.constant 0.000000e+00 : f32
    %26 = vector.broadcast %cst_12 : f32 to vector<16x32xf32>
    %27 = arith.maximumf %25, %26 : vector<16x32xf32>
    %28 = vector.extract_strided_slice %24 {offsets = [0, 32], sizes = [16, 32], strides = [1, 1]} : vector<16x64xf32> to vector<16x32xf32>
    %cst_13 = arith.constant 0.000000e+00 : f32
    %29 = vector.broadcast %cst_13 : f32 to vector<16x32xf32>
    %30 = arith.maximumf %28, %29 : vector<16x32xf32>
    %c0_14 = arith.constant 0 : index
    %c0_15 = arith.constant 0 : index
    %31 = vector.load %arg5[%c0_14, %c0_15] : memref<32x32xbf16, #tpu.memory_space<vmem>>, vector<32x32xbf16>
    %32 = arith.truncf %27 : vector<16x32xf32> to vector<16x32xbf16>
    %cst_16 = arith.constant dense<0.000000e+00> : vector<16x32xf32>
    %33 = tpu.matmul %32, %31, %cst_16 {dimension_numbers = #tpu.dot_dimension_numbers<[1], [0], [0], [1], [0, 0, 1, 1], [], []>} : vector<16x32xbf16>, vector<32x32xbf16>, vector<16x32xf32> -> vector<16x32xf32>
    %c0_17 = arith.constant 0 : index
    %c0_18 = arith.constant 0 : index
    %34 = vector.load %arg6[%c0_17, %c0_18] : memref<1x32xf32, #tpu.memory_space<vmem>>, vector<1x32xf32>
    %35 = vector.broadcast %34 : vector<1x32xf32> to vector<16x32xf32>
    %36 = arith.addf %33, %35 : vector<16x32xf32>
    %37 = arith.truncf %15 : vector<16x16xf32> to vector<16x16xbf16>
    %38 = arith.truncf %36 : vector<16x32xf32> to vector<16x32xbf16>
    %cst_19 = arith.constant dense<0.000000e+00> : vector<16x32xf32>
    %39 = tpu.matmul %37, %38, %cst_19 {dimension_numbers = #tpu.dot_dimension_numbers<[1], [0], [0], [1], [0, 0, 1, 1], [], []>} : vector<16x16xbf16>, vector<16x32xbf16>, vector<16x32xf32> -> vector<16x32xf32>
    %cst_20 = arith.constant 0.000000e+00 : f32
    %40 = vector.broadcast %cst_20 : f32 to vector<16x32xf32>
    %41 = arith.maximumf %39, %40 : vector<16x32xf32>
    %c0_21 = arith.constant 0 : index
    %c0_22 = arith.constant 0 : index
    %42 = vector.load %arg7[%c0_21, %c0_22] : memref<32x8xbf16, #tpu.memory_space<vmem>>, vector<32x8xbf16>
    %43 = arith.truncf %30 : vector<16x32xf32> to vector<16x32xbf16>
    %cst_23 = arith.constant dense<0.000000e+00> : vector<16x8xf32>
    %44 = tpu.matmul %43, %42, %cst_23 {dimension_numbers = #tpu.dot_dimension_numbers<[1], [0], [0], [1], [0, 0, 1, 1], [], []>} : vector<16x32xbf16>, vector<32x8xbf16>, vector<16x8xf32> -> vector<16x8xf32>
    %c0_24 = arith.constant 0 : index
    %c0_25 = arith.constant 0 : index
    %45 = vector.load %arg8[%c0_24, %c0_25] : memref<1x8xf32, #tpu.memory_space<vmem>>, vector<1x8xf32>
    %46 = vector.broadcast %45 : vector<1x8xf32> to vector<16x8xf32>
    %47 = arith.addf %44, %46 : vector<16x8xf32>
    %48 = arith.truncf %15 : vector<16x16xf32> to vector<16x16xbf16>
    %49 = arith.truncf %47 : vector<16x8xf32> to vector<16x8xbf16>
    %cst_26 = arith.constant dense<0.000000e+00> : vector<16x8xf32>
    %50 = tpu.matmul %48, %49, %cst_26 {dimension_numbers = #tpu.dot_dimension_numbers<[1], [0], [0], [1], [0, 0, 1, 1], [], []>} : vector<16x16xbf16>, vector<16x8xbf16>, vector<16x8xf32> -> vector<16x8xf32>
    %cst_27 = arith.constant dense<0xFF800000> : vector<16xf32>
    %51 = vector.multi_reduction <maximumf>, %50, %cst_27 [1] : vector<16x8xf32> to vector<16xf32>
    %52 = vector.shape_cast %51 : vector<16xf32> to vector<16x1xf32>
    %53 = vector.broadcast %52 : vector<16x1xf32> to vector<16x8xf32>
    %54 = arith.subf %50, %53 : vector<16x8xf32>
    %55 = math.exp %54 : vector<16x8xf32>
    %cst_28 = arith.constant dense<0.000000e+00> : vector<16xf32>
    %56 = vector.multi_reduction <add>, %55, %cst_28 [1] : vector<16x8xf32> to vector<16xf32>
    %57 = vector.shape_cast %56 : vector<16xf32> to vector<16x1xf32>
    %58 = vector.broadcast %57 : vector<16x1xf32> to vector<16x8xf32>
    %59 = arith.divf %55, %58 : vector<16x8xf32>
    %c0_29 = arith.constant 0 : index
    %c0_30 = arith.constant 0 : index
    %c0_31 = arith.constant 0 : index
    %60 = vector.load %arg32[%c0_29, %c0_30, %c0_31] : memref<1x16x32xf32, #tpu.memory_space<vmem>>, vector<1x16x32xf32>
    %61 = vector.shape_cast %60 : vector<1x16x32xf32> to vector<16x32xf32>
    %62 = vector.shape_cast %41 : vector<16x32xf32> to vector<1x16x32xf32>
    tpu.vector_store %arg32[%c0_29, %c0_30, %c0_31], %62 {strides = array<i32>} : memref<1x16x32xf32, #tpu.memory_space<vmem>>, vector<1x16x32xf32>,
    %cst_32 = arith.constant dense<0.000000e+00> : vector<8x32xf32>
    %63 = tpu.matmul %59, %41, %cst_32 {dimension_numbers = #tpu.dot_dimension_numbers<[0], [0], [1], [1], [0, 1, 1, 1], [], []>} : vector<16x8xf32>, vector<16x32xf32>, vector<8x32xf32> -> vector<8x32xf32>
    %cst_33 = arith.constant dense<0.000000e+00> : vector<8x16xf32>
    %64 = tpu.matmul %59, %3, %cst_33 {dimension_numbers = #tpu.dot_dimension_numbers<[0], [0], [1], [1], [0, 1, 1, 1], [], []>} : vector<16x8xf32>, vector<16x16xf32>, vector<8x16xf32> -> vector<8x16xf32>
    %cst_34 = arith.constant dense<0.000000e+00> : vector<8x8xf32>
    %65 = tpu.matmul %64, %59, %cst_34 {dimension_numbers = #tpu.dot_dimension_numbers<[1], [0], [0], [1], [0, 0, 1, 1], [], []>} : vector<8x16xf32>, vector<16x8xf32>, vector<8x8xf32> -> vector<8x8xf32>
    %c0_35 = arith.constant 0 : index
    %c0_36 = arith.constant 0 : index
    %c0_37 = arith.constant 0 : index
    %66 = vector.load %arg33[%c0_35, %c0_36, %c0_37] : memref<1x8x32xf32, #tpu.memory_space<vmem>>, vector<1x8x32xf32>
    %67 = vector.shape_cast %66 : vector<1x8x32xf32> to vector<8x32xf32>
    %68 = vector.shape_cast %63 : vector<8x32xf32> to vector<1x8x32xf32>
    tpu.vector_store %arg33[%c0_35, %c0_36, %c0_37], %68 {strides = array<i32>} : memref<1x8x32xf32, #tpu.memory_space<vmem>>, vector<1x8x32xf32>,
    %cst_38 = arith.constant 0.000000e+00 : f32
    %69 = vector.broadcast %cst_38 : f32 to vector<9x9xf32>
    %c0_39 = arith.constant 0 : index
    %c0_40 = arith.constant 0 : index
    %70 = vector.load %arg36[%c0_39, %c0_40] : memref<9x9xf32, #tpu.memory_space<vmem>>, vector<9x9xf32>
    tpu.vector_store %arg36[%c0_39, %c0_40], %69 {strides = array<i32>} : memref<9x9xf32, #tpu.memory_space<vmem>>, vector<9x9xf32>,
    %cst_41 = arith.constant 0.000000e+00 : f32
    %71 = vector.broadcast %cst_41 : f32 to vector<8x8xf32>
    %72 = arith.cmpf ogt, %65, %71 : vector<8x8xf32>
    %cst_42 = arith.constant 0.000000e+00 : f32
    %cst_43 = arith.constant -1.000000e+09 : f32
    %73 = vector.broadcast %cst_42 : f32 to vector<8x8xf32>
    %74 = vector.broadcast %cst_43 : f32 to vector<8x8xf32>
    %75 = arith.select %72, %73, %74 : vector<8x8xi1>, vector<8x8xf32>
    %c0_44 = arith.constant 0 : index
    %c0_45 = arith.constant 0 : index
    %76 = vector.load %arg36[%c0_44, %c0_45] : memref<9x9xf32, #tpu.memory_space<vmem>>, vector<8x8xf32>
    tpu.vector_store %arg36[%c0_44, %c0_45], %75 {strides = array<i32>} : memref<9x9xf32, #tpu.memory_space<vmem>>, vector<8x8xf32>,
    %c0_46 = arith.constant 0 : index
    %c0_47 = arith.constant 0 : index
    %77 = vector.load %arg36[%c0_46, %c0_47] : memref<9x9xf32, #tpu.memory_space<vmem>>, vector<9x9xf32>
    %c0_48 = arith.constant 0 : index
    %c0_49 = arith.constant 0 : index
    %78 = vector.load %arg9[%c0_48, %c0_49] : memref<1x32xf32, #tpu.memory_space<vmem>>, vector<1x32xf32>
    %79 = tpu.concatenate %63, %78 in 0 : vector<8x32xf32>, vector<1x32xf32> -> vector<9x32xf32>
    %c0_50 = arith.constant 0 : index
    %c0_51 = arith.constant 0 : index
    %c0_52 = arith.constant 0 : index
    %c0_53 = arith.constant 0 : index
    %80 = vector.load %arg10[%c0_50, %c0_51, %c0_52, %c0_53] : memref<2x4x32x8xbf16, #tpu.memory_space<vmem>>, vector<1x1x32x8xbf16>
    %81 = vector.shape_cast %80 : vector<1x1x32x8xbf16> to vector<32x8xbf16>
    %82 = arith.truncf %79 : vector<9x32xf32> to vector<9x32xbf16>
    %cst_54 = arith.constant dense<0.000000e+00> : vector<9x8xf32>
    %83 = tpu.matmul %82, %81, %cst_54 {dimension_numbers = #tpu.dot_dimension_numbers<[1], [0], [0], [1], [0, 0, 1, 1], [], []>} : vector<9x32xbf16>, vector<32x8xbf16>, vector<9x8xf32> -> vector<9x8xf32>
    %c0_55 = arith.constant 0 : index
    %c0_56 = arith.constant 0 : index
    %c0_57 = arith.constant 0 : index
    %c0_58 = arith.constant 0 : index
    %84 = vector.load %arg11[%c0_55, %c0_56, %c0_57, %c0_58] : memref<2x4x1x8xf32, #tpu.memory_space<vmem>>, vector<1x1x1x8xf32>
    %85 = vector.shape_cast %84 : vector<1x1x1x8xf32> to vector<1x8xf32>
    %86 = vector.broadcast %85 : vector<1x8xf32> to vector<9x8xf32>
    %87 = arith.addf %83, %86 : vector<9x8xf32>
    %c0_59 = arith.constant 0 : index
    %c0_60 = arith.constant 0 : index
    %c0_61 = arith.constant 0 : index
    %c0_62 = arith.constant 0 : index
    %88 = vector.load %arg12[%c0_59, %c0_60, %c0_61, %c0_62] : memref<2x4x32x8xbf16, #tpu.memory_space<vmem>>, vector<1x1x32x8xbf16>
    %89 = vector.shape_cast %88 : vector<1x1x32x8xbf16> to vector<32x8xbf16>
    %90 = arith.truncf %79 : vector<9x32xf32> to vector<9x32xbf16>
    %cst_63 = arith.constant dense<0.000000e+00> : vector<9x8xf32>
    %91 = tpu.matmul %90, %89, %cst_63 {dimension_numbers = #tpu.dot_dimension_numbers<[1], [0], [0], [1], [0, 0, 1, 1], [], []>} : vector<9x32xbf16>, vector<32x8xbf16>, vector<9x8xf32> -> vector<9x8xf32>
    %c0_64 = arith.constant 0 : index
    %c0_65 = arith.constant 0 : index
    %c0_66 = arith.constant 0 : index
    %c0_67 = arith.constant 0 : index
    %92 = vector.load %arg13[%c0_64, %c0_65, %c0_66, %c0_67] : memref<2x4x1x8xf32, #tpu.memory_space<vmem>>, vector<1x1x1x8xf32>
    %93 = vector.shape_cast %92 : vector<1x1x1x8xf32> to vector<1x8xf32>
    %94 = vector.broadcast %93 : vector<1x8xf32> to vector<9x8xf32>
    %95 = arith.addf %91, %94 : vector<9x8xf32>
    %c0_68 = arith.constant 0 : index
    %c0_69 = arith.constant 0 : index
    %c0_70 = arith.constant 0 : index
    %c0_71 = arith.constant 0 : index
    %96 = vector.load %arg14[%c0_68, %c0_69, %c0_70, %c0_71] : memref<2x4x32x8xbf16, #tpu.memory_space<vmem>>, vector<1x1x32x8xbf16>
    %97 = vector.shape_cast %96 : vector<1x1x32x8xbf16> to vector<32x8xbf16>
    %98 = arith.truncf %79 : vector<9x32xf32> to vector<9x32xbf16>
    %cst_72 = arith.constant dense<0.000000e+00> : vector<9x8xf32>
    %99 = tpu.matmul %98, %97, %cst_72 {dimension_numbers = #tpu.dot_dimension_numbers<[1], [0], [0], [1], [0, 0, 1, 1], [], []>} : vector<9x32xbf16>, vector<32x8xbf16>, vector<9x8xf32> -> vector<9x8xf32>
    %c0_73 = arith.constant 0 : index
    %c0_74 = arith.constant 0 : index
    %c0_75 = arith.constant 0 : index
    %c0_76 = arith.constant 0 : index
    %100 = vector.load %arg15[%c0_73, %c0_74, %c0_75, %c0_76] : memref<2x4x1x8xf32, #tpu.memory_space<vmem>>, vector<1x1x1x8xf32>
    %101 = vector.shape_cast %100 : vector<1x1x1x8xf32> to vector<1x8xf32>
    %102 = vector.broadcast %101 : vector<1x8xf32> to vector<9x8xf32>
    %103 = arith.addf %99, %102 : vector<9x8xf32>
    %104 = arith.truncf %87 : vector<9x8xf32> to vector<9x8xbf16>
    %105 = arith.truncf %95 : vector<9x8xf32> to vector<9x8xbf16>
    %cst_77 = arith.constant dense<0.000000e+00> : vector<9x9xf32>
    %106 = tpu.matmul %104, %105, %cst_77 {dimension_numbers = #tpu.dot_dimension_numbers<[1], [1], [0], [0], [0, 0, 1, 0], [], []>} : vector<9x8xbf16>, vector<9x8xbf16>, vector<9x9xf32> -> vector<9x9xf32>
    %cst_78 = arith.constant 0.353553385 : f32
    %107 = vector.broadcast %cst_78 : f32 to vector<9x9xf32>
    %108 = arith.mulf %106, %107 : vector<9x9xf32>
    %109 = arith.addf %108, %77 : vector<9x9xf32>
    %cst_79 = arith.constant dense<0xFF800000> : vector<9xf32>
    %110 = vector.multi_reduction <maximumf>, %109, %cst_79 [1] : vector<9x9xf32> to vector<9xf32>
    %111 = vector.shape_cast %110 : vector<9xf32> to vector<9x1xf32>
    %112 = vector.broadcast %111 : vector<9x1xf32> to vector<9x9xf32>
    %113 = arith.subf %109, %112 : vector<9x9xf32>
    %114 = math.exp %113 : vector<9x9xf32>
    %cst_80 = arith.constant dense<0.000000e+00> : vector<9xf32>
    %115 = vector.multi_reduction <add>, %114, %cst_80 [1] : vector<9x9xf32> to vector<9xf32>
    %116 = vector.shape_cast %115 : vector<9xf32> to vector<9x1xf32>
    %117 = vector.broadcast %116 : vector<9x1xf32> to vector<9x9xf32>
    %118 = arith.divf %114, %117 : vector<9x9xf32>
    %119 = arith.truncf %118 : vector<9x9xf32> to vector<9x9xbf16>
    %120 = arith.truncf %103 : vector<9x8xf32> to vector<9x8xbf16>
    %cst_81 = arith.constant dense<0.000000e+00> : vector<9x8xf32>
    %121 = tpu.matmul %119, %120, %cst_81 {dimension_numbers = #tpu.dot_dimension_numbers<[1], [0], [0], [1], [0, 0, 1, 1], [], []>} : vector<9x9xbf16>, vector<9x8xbf16>, vector<9x8xf32> -> vector<9x8xf32>
    %c0_82 = arith.constant 0 : index
    %c0_83 = arith.constant 0 : index
    %122 = vector.load %arg37[%c0_82, %c0_83] : memref<9x32xf32, #tpu.memory_space<vmem>>, vector<9x8xf32>
    tpu.vector_store %arg37[%c0_82, %c0_83], %121 {strides = array<i32>} : memref<9x32xf32, #tpu.memory_space<vmem>>, vector<9x8xf32>,
    %c0_84 = arith.constant 0 : index
    %c1 = arith.constant 1 : index
    %c0_85 = arith.constant 0 : index
    %c0_86 = arith.constant 0 : index
    %123 = vector.load %arg10[%c0_84, %c1, %c0_85, %c0_86] : memref<2x4x32x8xbf16, #tpu.memory_space<vmem>>, vector<1x1x32x8xbf16>
    %124 = vector.shape_cast %123 : vector<1x1x32x8xbf16> to vector<32x8xbf16>
    %125 = arith.truncf %79 : vector<9x32xf32> to vector<9x32xbf16>
    %cst_87 = arith.constant dense<0.000000e+00> : vector<9x8xf32>
    %126 = tpu.matmul %125, %124, %cst_87 {dimension_numbers = #tpu.dot_dimension_numbers<[1], [0], [0], [1], [0, 0, 1, 1], [], []>} : vector<9x32xbf16>, vector<32x8xbf16>, vector<9x8xf32> -> vector<9x8xf32>
    %c0_88 = arith.constant 0 : index
    %c1_89 = arith.constant 1 : index
    %c0_90 = arith.constant 0 : index
    %c0_91 = arith.constant 0 : index
    %127 = vector.load %arg11[%c0_88, %c1_89, %c0_90, %c0_91] : memref<2x4x1x8xf32, #tpu.memory_space<vmem>>, vector<1x1x1x8xf32>
    %128 = vector.shape_cast %127 : vector<1x1x1x8xf32> to vector<1x8xf32>
    %129 = vector.broadcast %128 : vector<1x8xf32> to vector<9x8xf32>
    %130 = arith.addf %126, %129 : vector<9x8xf32>
    %c0_92 = arith.constant 0 : index
    %c1_93 = arith.constant 1 : index
    %c0_94 = arith.constant 0 : index
    %c0_95 = arith.constant 0 : index
    %131 = vector.load %arg12[%c0_92, %c1_93, %c0_94, %c0_95] : memref<2x4x32x8xbf16, #tpu.memory_space<vmem>>, vector<1x1x32x8xbf16>
    %132 = vector.shape_cast %131 : vector<1x1x32x8xbf16> to vector<32x8xbf16>
    %133 = arith.truncf %79 : vector<9x32xf32> to vector<9x32xbf16>
    %cst_96 = arith.constant dense<0.000000e+00> : vector<9x8xf32>
    %134 = tpu.matmul %133, %132, %cst_96 {dimension_numbers = #tpu.dot_dimension_numbers<[1], [0], [0], [1], [0, 0, 1, 1], [], []>} : vector<9x32xbf16>, vector<32x8xbf16>, vector<9x8xf32> -> vector<9x8xf32>
    %c0_97 = arith.constant 0 : index
    %c1_98 = arith.constant 1 : index
    %c0_99 = arith.constant 0 : index
    %c0_100 = arith.constant 0 : index
    %135 = vector.load %arg13[%c0_97, %c1_98, %c0_99, %c0_100] : memref<2x4x1x8xf32, #tpu.memory_space<vmem>>, vector<1x1x1x8xf32>
    %136 = vector.shape_cast %135 : vector<1x1x1x8xf32> to vector<1x8xf32>
    %137 = vector.broadcast %136 : vector<1x8xf32> to vector<9x8xf32>
    %138 = arith.addf %134, %137 : vector<9x8xf32>
    %c0_101 = arith.constant 0 : index
    %c1_102 = arith.constant 1 : index
    %c0_103 = arith.constant 0 : index
    %c0_104 = arith.constant 0 : index
    %139 = vector.load %arg14[%c0_101, %c1_102, %c0_103, %c0_104] : memref<2x4x32x8xbf16, #tpu.memory_space<vmem>>, vector<1x1x32x8xbf16>
    %140 = vector.shape_cast %139 : vector<1x1x32x8xbf16> to vector<32x8xbf16>
    %141 = arith.truncf %79 : vector<9x32xf32> to vector<9x32xbf16>
    %cst_105 = arith.constant dense<0.000000e+00> : vector<9x8xf32>
    %142 = tpu.matmul %141, %140, %cst_105 {dimension_numbers = #tpu.dot_dimension_numbers<[1], [0], [0], [1], [0, 0, 1, 1], [], []>} : vector<9x32xbf16>, vector<32x8xbf16>, vector<9x8xf32> -> vector<9x8xf32>
    %c0_106 = arith.constant 0 : index
    %c1_107 = arith.constant 1 : index
    %c0_108 = arith.constant 0 : index
    %c0_109 = arith.constant 0 : index
    %143 = vector.load %arg15[%c0_106, %c1_107, %c0_108, %c0_109] : memref<2x4x1x8xf32, #tpu.memory_space<vmem>>, vector<1x1x1x8xf32>
    %144 = vector.shape_cast %143 : vector<1x1x1x8xf32> to vector<1x8xf32>
    %145 = vector.broadcast %144 : vector<1x8xf32> to vector<9x8xf32>
    %146 = arith.addf %142, %145 : vector<9x8xf32>
    %147 = arith.truncf %130 : vector<9x8xf32> to vector<9x8xbf16>
    %148 = arith.truncf %138 : vector<9x8xf32> to vector<9x8xbf16>
    %cst_110 = arith.constant dense<0.000000e+00> : vector<9x9xf32>
    %149 = tpu.matmul %147, %148, %cst_110 {dimension_numbers = #tpu.dot_dimension_numbers<[1], [1], [0], [0], [0, 0, 1, 0], [], []>} : vector<9x8xbf16>, vector<9x8xbf16>, vector<9x9xf32> -> vector<9x9xf32>
    %cst_111 = arith.constant 0.353553385 : f32
    %150 = vector.broadcast %cst_111 : f32 to vector<9x9xf32>
    %151 = arith.mulf %149, %150 : vector<9x9xf32>
    %152 = arith.addf %151, %77 : vector<9x9xf32>
    %cst_112 = arith.constant dense<0xFF800000> : vector<9xf32>
    %153 = vector.multi_reduction <maximumf>, %152, %cst_112 [1] : vector<9x9xf32> to vector<9xf32>
    %154 = vector.shape_cast %153 : vector<9xf32> to vector<9x1xf32>
    %155 = vector.broadcast %154 : vector<9x1xf32> to vector<9x9xf32>
    %156 = arith.subf %152, %155 : vector<9x9xf32>
    %157 = math.exp %156 : vector<9x9xf32>
    %cst_113 = arith.constant dense<0.000000e+00> : vector<9xf32>
    %158 = vector.multi_reduction <add>, %157, %cst_113 [1] : vector<9x9xf32> to vector<9xf32>
    %159 = vector.shape_cast %158 : vector<9xf32> to vector<9x1xf32>
    %160 = vector.broadcast %159 : vector<9x1xf32> to vector<9x9xf32>
    %161 = arith.divf %157, %160 : vector<9x9xf32>
    %162 = arith.truncf %161 : vector<9x9xf32> to vector<9x9xbf16>
    %163 = arith.truncf %146 : vector<9x8xf32> to vector<9x8xbf16>
    %cst_114 = arith.constant dense<0.000000e+00> : vector<9x8xf32>
    %164 = tpu.matmul %162, %163, %cst_114 {dimension_numbers = #tpu.dot_dimension_numbers<[1], [0], [0], [1], [0, 0, 1, 1], [], []>} : vector<9x9xbf16>, vector<9x8xbf16>, vector<9x8xf32> -> vector<9x8xf32>
    %c0_115 = arith.constant 0 : index
    %c8 = arith.constant 8 : index
    %165 = vector.load %arg37[%c0_115, %c8] : memref<9x32xf32, #tpu.memory_space<vmem>>, vector<9x8xf32>
    tpu.vector_store %arg37[%c0_115, %c8], %164 {strides = array<i32>} : memref<9x32xf32, #tpu.memory_space<vmem>>, vector<9x8xf32>,
    %c0_116 = arith.constant 0 : index
    %c2 = arith.constant 2 : index
    %c0_117 = arith.constant 0 : index
    %c0_118 = arith.constant 0 : index
    %166 = vector.load %arg10[%c0_116, %c2, %c0_117, %c0_118] : memref<2x4x32x8xbf16, #tpu.memory_space<vmem>>, vector<1x1x32x8xbf16>
    %167 = vector.shape_cast %166 : vector<1x1x32x8xbf16> to vector<32x8xbf16>
    %168 = arith.truncf %79 : vector<9x32xf32> to vector<9x32xbf16>
    %cst_119 = arith.constant dense<0.000000e+00> : vector<9x8xf32>
    %169 = tpu.matmul %168, %167, %cst_119 {dimension_numbers = #tpu.dot_dimension_numbers<[1], [0], [0], [1], [0, 0, 1, 1], [], []>} : vector<9x32xbf16>, vector<32x8xbf16>, vector<9x8xf32> -> vector<9x8xf32>
    %c0_120 = arith.constant 0 : index
    %c2_121 = arith.constant 2 : index
    %c0_122 = arith.constant 0 : index
    %c0_123 = arith.constant 0 : index
    %170 = vector.load %arg11[%c0_120, %c2_121, %c0_122, %c0_123] : memref<2x4x1x8xf32, #tpu.memory_space<vmem>>, vector<1x1x1x8xf32>
    %171 = vector.shape_cast %170 : vector<1x1x1x8xf32> to vector<1x8xf32>
    %172 = vector.broadcast %171 : vector<1x8xf32> to vector<9x8xf32>
    %173 = arith.addf %169, %172 : vector<9x8xf32>
    %c0_124 = arith.constant 0 : index
    %c2_125 = arith.constant 2 : index
    %c0_126 = arith.constant 0 : index
    %c0_127 = arith.constant 0 : index
    %174 = vector.load %arg12[%c0_124, %c2_125, %c0_126, %c0_127] : memref<2x4x32x8xbf16, #tpu.memory_space<vmem>>, vector<1x1x32x8xbf16>
    %175 = vector.shape_cast %174 : vector<1x1x32x8xbf16> to vector<32x8xbf16>
    %176 = arith.truncf %79 : vector<9x32xf32> to vector<9x32xbf16>
    %cst_128 = arith.constant dense<0.000000e+00> : vector<9x8xf32>
    %177 = tpu.matmul %176, %175, %cst_128 {dimension_numbers = #tpu.dot_dimension_numbers<[1], [0], [0], [1], [0, 0, 1, 1], [], []>} : vector<9x32xbf16>, vector<32x8xbf16>, vector<9x8xf32> -> vector<9x8xf32>
    %c0_129 = arith.constant 0 : index
    %c2_130 = arith.constant 2 : index
    %c0_131 = arith.constant 0 : index
    %c0_132 = arith.constant 0 : index
    %178 = vector.load %arg13[%c0_129, %c2_130, %c0_131, %c0_132] : memref<2x4x1x8xf32, #tpu.memory_space<vmem>>, vector<1x1x1x8xf32>
    %179 = vector.shape_cast %178 : vector<1x1x1x8xf32> to vector<1x8xf32>
    %180 = vector.broadcast %179 : vector<1x8xf32> to vector<9x8xf32>
    %181 = arith.addf %177, %180 : vector<9x8xf32>
    %c0_133 = arith.constant 0 : index
    %c2_134 = arith.constant 2 : index
    %c0_135 = arith.constant 0 : index
    %c0_136 = arith.constant 0 : index
    %182 = vector.load %arg14[%c0_133, %c2_134, %c0_135, %c0_136] : memref<2x4x32x8xbf16, #tpu.memory_space<vmem>>, vector<1x1x32x8xbf16>
    %183 = vector.shape_cast %182 : vector<1x1x32x8xbf16> to vector<32x8xbf16>
    %184 = arith.truncf %79 : vector<9x32xf32> to vector<9x32xbf16>
    %cst_137 = arith.constant dense<0.000000e+00> : vector<9x8xf32>
    %185 = tpu.matmul %184, %183, %cst_137 {dimension_numbers = #tpu.dot_dimension_numbers<[1], [0], [0], [1], [0, 0, 1, 1], [], []>} : vector<9x32xbf16>, vector<32x8xbf16>, vector<9x8xf32> -> vector<9x8xf32>
    %c0_138 = arith.constant 0 : index
    %c2_139 = arith.constant 2 : index
    %c0_140 = arith.constant 0 : index
    %c0_141 = arith.constant 0 : index
    %186 = vector.load %arg15[%c0_138, %c2_139, %c0_140, %c0_141] : memref<2x4x1x8xf32, #tpu.memory_space<vmem>>, vector<1x1x1x8xf32>
    %187 = vector.shape_cast %186 : vector<1x1x1x8xf32> to vector<1x8xf32>
    %188 = vector.broadcast %187 : vector<1x8xf32> to vector<9x8xf32>
    %189 = arith.addf %185, %188 : vector<9x8xf32>
    %190 = arith.truncf %173 : vector<9x8xf32> to vector<9x8xbf16>
    %191 = arith.truncf %181 : vector<9x8xf32> to vector<9x8xbf16>
    %cst_142 = arith.constant dense<0.000000e+00> : vector<9x9xf32>
    %192 = tpu.matmul %190, %191, %cst_142 {dimension_numbers = #tpu.dot_dimension_numbers<[1], [1], [0], [0], [0, 0, 1, 0], [], []>} : vector<9x8xbf16>, vector<9x8xbf16>, vector<9x9xf32> -> vector<9x9xf32>
    %cst_143 = arith.constant 0.353553385 : f32
    %193 = vector.broadcast %cst_143 : f32 to vector<9x9xf32>
    %194 = arith.mulf %192, %193 : vector<9x9xf32>
    %195 = arith.addf %194, %77 : vector<9x9xf32>
    %cst_144 = arith.constant dense<0xFF800000> : vector<9xf32>
    %196 = vector.multi_reduction <maximumf>, %195, %cst_144 [1] : vector<9x9xf32> to vector<9xf32>
    %197 = vector.shape_cast %196 : vector<9xf32> to vector<9x1xf32>
    %198 = vector.broadcast %197 : vector<9x1xf32> to vector<9x9xf32>
    %199 = arith.subf %195, %198 : vector<9x9xf32>
    %200 = math.exp %199 : vector<9x9xf32>
    %cst_145 = arith.constant dense<0.000000e+00> : vector<9xf32>
    %201 = vector.multi_reduction <add>, %200, %cst_145 [1] : vector<9x9xf32> to vector<9xf32>
    %202 = vector.shape_cast %201 : vector<9xf32> to vector<9x1xf32>
    %203 = vector.broadcast %202 : vector<9x1xf32> to vector<9x9xf32>
    %204 = arith.divf %200, %203 : vector<9x9xf32>
    %205 = arith.truncf %204 : vector<9x9xf32> to vector<9x9xbf16>
    %206 = arith.truncf %189 : vector<9x8xf32> to vector<9x8xbf16>
    %cst_146 = arith.constant dense<0.000000e+00> : vector<9x8xf32>
    %207 = tpu.matmul %205, %206, %cst_146 {dimension_numbers = #tpu.dot_dimension_numbers<[1], [0], [0], [1], [0, 0, 1, 1], [], []>} : vector<9x9xbf16>, vector<9x8xbf16>, vector<9x8xf32> -> vector<9x8xf32>
    %c0_147 = arith.constant 0 : index
    %c16 = arith.constant 16 : index
    %208 = vector.load %arg37[%c0_147, %c16] : memref<9x32xf32, #tpu.memory_space<vmem>>, vector<9x8xf32>
    tpu.vector_store %arg37[%c0_147, %c16], %207 {strides = array<i32>} : memref<9x32xf32, #tpu.memory_space<vmem>>, vector<9x8xf32>,
    %c0_148 = arith.constant 0 : index
    %c3 = arith.constant 3 : index
    %c0_149 = arith.constant 0 : index
    %c0_150 = arith.constant 0 : index
    %209 = vector.load %arg10[%c0_148, %c3, %c0_149, %c0_150] : memref<2x4x32x8xbf16, #tpu.memory_space<vmem>>, vector<1x1x32x8xbf16>
    %210 = vector.shape_cast %209 : vector<1x1x32x8xbf16> to vector<32x8xbf16>
    %211 = arith.truncf %79 : vector<9x32xf32> to vector<9x32xbf16>
    %cst_151 = arith.constant dense<0.000000e+00> : vector<9x8xf32>
    %212 = tpu.matmul %211, %210, %cst_151 {dimension_numbers = #tpu.dot_dimension_numbers<[1], [0], [0], [1], [0, 0, 1, 1], [], []>} : vector<9x32xbf16>, vector<32x8xbf16>, vector<9x8xf32> -> vector<9x8xf32>
    %c0_152 = arith.constant 0 : index
    %c3_153 = arith.constant 3 : index
    %c0_154 = arith.constant 0 : index
    %c0_155 = arith.constant 0 : index
    %213 = vector.load %arg11[%c0_152, %c3_153, %c0_154, %c0_155] : memref<2x4x1x8xf32, #tpu.memory_space<vmem>>, vector<1x1x1x8xf32>
    %214 = vector.shape_cast %213 : vector<1x1x1x8xf32> to vector<1x8xf32>
    %215 = vector.broadcast %214 : vector<1x8xf32> to vector<9x8xf32>
    %216 = arith.addf %212, %215 : vector<9x8xf32>
    %c0_156 = arith.constant 0 : index
    %c3_157 = arith.constant 3 : index
    %c0_158 = arith.constant 0 : index
    %c0_159 = arith.constant 0 : index
    %217 = vector.load %arg12[%c0_156, %c3_157, %c0_158, %c0_159] : memref<2x4x32x8xbf16, #tpu.memory_space<vmem>>, vector<1x1x32x8xbf16>
    %218 = vector.shape_cast %217 : vector<1x1x32x8xbf16> to vector<32x8xbf16>
    %219 = arith.truncf %79 : vector<9x32xf32> to vector<9x32xbf16>
    %cst_160 = arith.constant dense<0.000000e+00> : vector<9x8xf32>
    %220 = tpu.matmul %219, %218, %cst_160 {dimension_numbers = #tpu.dot_dimension_numbers<[1], [0], [0], [1], [0, 0, 1, 1], [], []>} : vector<9x32xbf16>, vector<32x8xbf16>, vector<9x8xf32> -> vector<9x8xf32>
    %c0_161 = arith.constant 0 : index
    %c3_162 = arith.constant 3 : index
    %c0_163 = arith.constant 0 : index
    %c0_164 = arith.constant 0 : index
    %221 = vector.load %arg13[%c0_161, %c3_162, %c0_163, %c0_164] : memref<2x4x1x8xf32, #tpu.memory_space<vmem>>, vector<1x1x1x8xf32>
    %222 = vector.shape_cast %221 : vector<1x1x1x8xf32> to vector<1x8xf32>
    %223 = vector.broadcast %222 : vector<1x8xf32> to vector<9x8xf32>
    %224 = arith.addf %220, %223 : vector<9x8xf32>
    %c0_165 = arith.constant 0 : index
    %c3_166 = arith.constant 3 : index
    %c0_167 = arith.constant 0 : index
    %c0_168 = arith.constant 0 : index
    %225 = vector.load %arg14[%c0_165, %c3_166, %c0_167, %c0_168] : memref<2x4x32x8xbf16, #tpu.memory_space<vmem>>, vector<1x1x32x8xbf16>
    %226 = vector.shape_cast %225 : vector<1x1x32x8xbf16> to vector<32x8xbf16>
    %227 = arith.truncf %79 : vector<9x32xf32> to vector<9x32xbf16>
    %cst_169 = arith.constant dense<0.000000e+00> : vector<9x8xf32>
    %228 = tpu.matmul %227, %226, %cst_169 {dimension_numbers = #tpu.dot_dimension_numbers<[1], [0], [0], [1], [0, 0, 1, 1], [], []>} : vector<9x32xbf16>, vector<32x8xbf16>, vector<9x8xf32> -> vector<9x8xf32>
    %c0_170 = arith.constant 0 : index
    %c3_171 = arith.constant 3 : index
    %c0_172 = arith.constant 0 : index
    %c0_173 = arith.constant 0 : index
    %229 = vector.load %arg15[%c0_170, %c3_171, %c0_172, %c0_173] : memref<2x4x1x8xf32, #tpu.memory_space<vmem>>, vector<1x1x1x8xf32>
    %230 = vector.shape_cast %229 : vector<1x1x1x8xf32> to vector<1x8xf32>
    %231 = vector.broadcast %230 : vector<1x8xf32> to vector<9x8xf32>
    %232 = arith.addf %228, %231 : vector<9x8xf32>
    %233 = arith.truncf %216 : vector<9x8xf32> to vector<9x8xbf16>
    %234 = arith.truncf %224 : vector<9x8xf32> to vector<9x8xbf16>
    %cst_174 = arith.constant dense<0.000000e+00> : vector<9x9xf32>
    %235 = tpu.matmul %233, %234, %cst_174 {dimension_numbers = #tpu.dot_dimension_numbers<[1], [1], [0], [0], [0, 0, 1, 0], [], []>} : vector<9x8xbf16>, vector<9x8xbf16>, vector<9x9xf32> -> vector<9x9xf32>
    %cst_175 = arith.constant 0.353553385 : f32
    %236 = vector.broadcast %cst_175 : f32 to vector<9x9xf32>
    %237 = arith.mulf %235, %236 : vector<9x9xf32>
    %238 = arith.addf %237, %77 : vector<9x9xf32>
    %cst_176 = arith.constant dense<0xFF800000> : vector<9xf32>
    %239 = vector.multi_reduction <maximumf>, %238, %cst_176 [1] : vector<9x9xf32> to vector<9xf32>
    %240 = vector.shape_cast %239 : vector<9xf32> to vector<9x1xf32>
    %241 = vector.broadcast %240 : vector<9x1xf32> to vector<9x9xf32>
    %242 = arith.subf %238, %241 : vector<9x9xf32>
    %243 = math.exp %242 : vector<9x9xf32>
    %cst_177 = arith.constant dense<0.000000e+00> : vector<9xf32>
    %244 = vector.multi_reduction <add>, %243, %cst_177 [1] : vector<9x9xf32> to vector<9xf32>
    %245 = vector.shape_cast %244 : vector<9xf32> to vector<9x1xf32>
    %246 = vector.broadcast %245 : vector<9x1xf32> to vector<9x9xf32>
    %247 = arith.divf %243, %246 : vector<9x9xf32>
    %248 = arith.truncf %247 : vector<9x9xf32> to vector<9x9xbf16>
    %249 = arith.truncf %232 : vector<9x8xf32> to vector<9x8xbf16>
    %cst_178 = arith.constant dense<0.000000e+00> : vector<9x8xf32>
    %250 = tpu.matmul %248, %249, %cst_178 {dimension_numbers = #tpu.dot_dimension_numbers<[1], [0], [0], [1], [0, 0, 1, 1], [], []>} : vector<9x9xbf16>, vector<9x8xbf16>, vector<9x8xf32> -> vector<9x8xf32>
    %c0_179 = arith.constant 0 : index
    %c24 = arith.constant 24 : index
    %251 = vector.load %arg37[%c0_179, %c24] : memref<9x32xf32, #tpu.memory_space<vmem>>, vector<9x8xf32>
    tpu.vector_store %arg37[%c0_179, %c24], %250 {strides = array<i32>} : memref<9x32xf32, #tpu.memory_space<vmem>>, vector<9x8xf32>,
    %c0_180 = arith.constant 0 : index
    %c0_181 = arith.constant 0 : index
    %252 = vector.load %arg37[%c0_180, %c0_181] : memref<9x32xf32, #tpu.memory_space<vmem>>, vector<9x32xf32>
    %c0_182 = arith.constant 0 : index
    %c0_183 = arith.constant 0 : index
    %c0_184 = arith.constant 0 : index
    %253 = vector.load %arg16[%c0_182, %c0_183, %c0_184] : memref<2x32x32xbf16, #tpu.memory_space<vmem>>, vector<1x32x32xbf16>
    %254 = vector.shape_cast %253 : vector<1x32x32xbf16> to vector<32x32xbf16>
    %255 = arith.truncf %252 : vector<9x32xf32> to vector<9x32xbf16>
    %cst_185 = arith.constant dense<0.000000e+00> : vector<9x32xf32>
    %256 = tpu.matmul %255, %254, %cst_185 {dimension_numbers = #tpu.dot_dimension_numbers<[1], [0], [0], [1], [0, 0, 1, 1], [], []>} : vector<9x32xbf16>, vector<32x32xbf16>, vector<9x32xf32> -> vector<9x32xf32>
    %c0_186 = arith.constant 0 : index
    %c0_187 = arith.constant 0 : index
    %c0_188 = arith.constant 0 : index
    %257 = vector.load %arg17[%c0_186, %c0_187, %c0_188] : memref<2x1x32xf32, #tpu.memory_space<vmem>>, vector<1x1x32xf32>
    %258 = vector.shape_cast %257 : vector<1x1x32xf32> to vector<1x32xf32>
    %259 = vector.broadcast %258 : vector<1x32xf32> to vector<9x32xf32>
    %260 = arith.addf %256, %259 : vector<9x32xf32>
    %261 = arith.addf %79, %260 : vector<9x32xf32>
    %c0_189 = arith.constant 0 : index
    %c0_190 = arith.constant 0 : index
    %c0_191 = arith.constant 0 : index
    %262 = vector.load %arg18[%c0_189, %c0_190, %c0_191] : memref<2x1x32xf32, #tpu.memory_space<vmem>>, vector<1x1x32xf32>
    %263 = vector.shape_cast %262 : vector<1x1x32xf32> to vector<1x32xf32>
    %c0_192 = arith.constant 0 : index
    %c0_193 = arith.constant 0 : index
    %c0_194 = arith.constant 0 : index
    %264 = vector.load %arg19[%c0_192, %c0_193, %c0_194] : memref<2x1x32xf32, #tpu.memory_space<vmem>>, vector<1x1x32xf32>
    %265 = vector.shape_cast %264 : vector<1x1x32xf32> to vector<1x32xf32>
    %cst_195 = arith.constant dense<0.000000e+00> : vector<9xf32>
    %266 = vector.multi_reduction <add>, %261, %cst_195 [1] : vector<9x32xf32> to vector<9xf32>
    %267 = vector.shape_cast %266 : vector<9xf32> to vector<9x1xf32>
    %cst_196 = arith.constant 3.200000e+01 : f32
    %268 = vector.broadcast %cst_196 : f32 to vector<9x1xf32>
    %269 = arith.divf %267, %268 : vector<9x1xf32>
    %270 = vector.broadcast %269 : vector<9x1xf32> to vector<9x32xf32>
    %271 = arith.subf %261, %270 : vector<9x32xf32>
    %272 = arith.mulf %271, %271 : vector<9x32xf32>
    %cst_197 = arith.constant dense<0.000000e+00> : vector<9xf32>
    %273 = vector.multi_reduction <add>, %272, %cst_197 [1] : vector<9x32xf32> to vector<9xf32>
    %274 = vector.shape_cast %273 : vector<9xf32> to vector<9x1xf32>
    %cst_198 = arith.constant 3.200000e+01 : f32
    %275 = vector.broadcast %cst_198 : f32 to vector<9x1xf32>
    %276 = arith.divf %274, %275 : vector<9x1xf32>
    %cst_199 = arith.constant 9.99999974E-6 : f32
    %277 = vector.broadcast %cst_199 : f32 to vector<9x1xf32>
    %278 = arith.addf %276, %277 : vector<9x1xf32>
    %279 = math.rsqrt %278 : vector<9x1xf32>
    %280 = vector.broadcast %279 : vector<9x1xf32> to vector<9x32xf32>
    %281 = arith.mulf %271, %280 : vector<9x32xf32>
    %282 = vector.broadcast %263 : vector<1x32xf32> to vector<9x32xf32>
    %283 = arith.mulf %281, %282 : vector<9x32xf32>
    %284 = vector.broadcast %265 : vector<1x32xf32> to vector<9x32xf32>
    %285 = arith.addf %283, %284 : vector<9x32xf32>
    %c0_200 = arith.constant 0 : index
    %c0_201 = arith.constant 0 : index
    %c0_202 = arith.constant 0 : index
    %286 = vector.load %arg20[%c0_200, %c0_201, %c0_202] : memref<2x32x64xbf16, #tpu.memory_space<vmem>>, vector<1x32x64xbf16>
    %287 = vector.shape_cast %286 : vector<1x32x64xbf16> to vector<32x64xbf16>
    %288 = arith.truncf %285 : vector<9x32xf32> to vector<9x32xbf16>
    %cst_203 = arith.constant dense<0.000000e+00> : vector<9x64xf32>
    %289 = tpu.matmul %288, %287, %cst_203 {dimension_numbers = #tpu.dot_dimension_numbers<[1], [0], [0], [1], [0, 0, 1, 1], [], []>} : vector<9x32xbf16>, vector<32x64xbf16>, vector<9x64xf32> -> vector<9x64xf32>
    %c0_204 = arith.constant 0 : index
    %c0_205 = arith.constant 0 : index
    %c0_206 = arith.constant 0 : index
    %290 = vector.load %arg21[%c0_204, %c0_205, %c0_206] : memref<2x1x64xf32, #tpu.memory_space<vmem>>, vector<1x1x64xf32>
    %291 = vector.shape_cast %290 : vector<1x1x64xf32> to vector<1x64xf32>
    %292 = vector.broadcast %291 : vector<1x64xf32> to vector<9x64xf32>
    %293 = arith.addf %289, %292 : vector<9x64xf32>
    %cst_207 = arith.constant 0.000000e+00 : f32
    %294 = vector.broadcast %cst_207 : f32 to vector<9x64xf32>
    %295 = arith.maximumf %293, %294 : vector<9x64xf32>
    %c0_208 = arith.constant 0 : index
    %c0_209 = arith.constant 0 : index
    %c0_210 = arith.constant 0 : index
    %296 = vector.load %arg22[%c0_208, %c0_209, %c0_210] : memref<2x64x32xbf16, #tpu.memory_space<vmem>>, vector<1x64x32xbf16>
    %297 = vector.shape_cast %296 : vector<1x64x32xbf16> to vector<64x32xbf16>
    %298 = arith.truncf %295 : vector<9x64xf32> to vector<9x64xbf16>
    %cst_211 = arith.constant dense<0.000000e+00> : vector<9x32xf32>
    %299 = tpu.matmul %298, %297, %cst_211 {dimension_numbers = #tpu.dot_dimension_numbers<[1], [0], [0], [1], [0, 0, 1, 1], [], []>} : vector<9x64xbf16>, vector<64x32xbf16>, vector<9x32xf32> -> vector<9x32xf32>
    %c0_212 = arith.constant 0 : index
    %c0_213 = arith.constant 0 : index
    %c0_214 = arith.constant 0 : index
    %300 = vector.load %arg23[%c0_212, %c0_213, %c0_214] : memref<2x1x32xf32, #tpu.memory_space<vmem>>, vector<1x1x32xf32>
    %301 = vector.shape_cast %300 : vector<1x1x32xf32> to vector<1x32xf32>
    %302 = vector.broadcast %301 : vector<1x32xf32> to vector<9x32xf32>
    %303 = arith.addf %299, %302 : vector<9x32xf32>
    %304 = arith.addf %285, %303 : vector<9x32xf32>
    %c0_215 = arith.constant 0 : index
    %c0_216 = arith.constant 0 : index
    %c0_217 = arith.constant 0 : index
    %305 = vector.load %arg24[%c0_215, %c0_216, %c0_217] : memref<2x1x32xf32, #tpu.memory_space<vmem>>, vector<1x1x32xf32>
    %306 = vector.shape_cast %305 : vector<1x1x32xf32> to vector<1x32xf32>
    %c0_218 = arith.constant 0 : index
    %c0_219 = arith.constant 0 : index
    %c0_220 = arith.constant 0 : index
    %307 = vector.load %arg25[%c0_218, %c0_219, %c0_220] : memref<2x1x32xf32, #tpu.memory_space<vmem>>, vector<1x1x32xf32>
    %308 = vector.shape_cast %307 : vector<1x1x32xf32> to vector<1x32xf32>
    %cst_221 = arith.constant dense<0.000000e+00> : vector<9xf32>
    %309 = vector.multi_reduction <add>, %304, %cst_221 [1] : vector<9x32xf32> to vector<9xf32>
    %310 = vector.shape_cast %309 : vector<9xf32> to vector<9x1xf32>
    %cst_222 = arith.constant 3.200000e+01 : f32
    %311 = vector.broadcast %cst_222 : f32 to vector<9x1xf32>
    %312 = arith.divf %310, %311 : vector<9x1xf32>
    %313 = vector.broadcast %312 : vector<9x1xf32> to vector<9x32xf32>
    %314 = arith.subf %304, %313 : vector<9x32xf32>
    %315 = arith.mulf %314, %314 : vector<9x32xf32>
    %cst_223 = arith.constant dense<0.000000e+00> : vector<9xf32>
    %316 = vector.multi_reduction <add>, %315, %cst_223 [1] : vector<9x32xf32> to vector<9xf32>
    %317 = vector.shape_cast %316 : vector<9xf32> to vector<9x1xf32>
    %cst_224 = arith.constant 3.200000e+01 : f32
    %318 = vector.broadcast %cst_224 : f32 to vector<9x1xf32>
    %319 = arith.divf %317, %318 : vector<9x1xf32>
    %cst_225 = arith.constant 9.99999974E-6 : f32
    %320 = vector.broadcast %cst_225 : f32 to vector<9x1xf32>
    %321 = arith.addf %319, %320 : vector<9x1xf32>
    %322 = math.rsqrt %321 : vector<9x1xf32>
    %323 = vector.broadcast %322 : vector<9x1xf32> to vector<9x32xf32>
    %324 = arith.mulf %314, %323 : vector<9x32xf32>
    %325 = vector.broadcast %306 : vector<1x32xf32> to vector<9x32xf32>
    %326 = arith.mulf %324, %325 : vector<9x32xf32>
    %327 = vector.broadcast %308 : vector<1x32xf32> to vector<9x32xf32>
    %328 = arith.addf %326, %327 : vector<9x32xf32>
    %c1_226 = arith.constant 1 : index
    %c0_227 = arith.constant 0 : index
    %c0_228 = arith.constant 0 : index
    %c0_229 = arith.constant 0 : index
    %329 = vector.load %arg10[%c1_226, %c0_227, %c0_228, %c0_229] : memref<2x4x32x8xbf16, #tpu.memory_space<vmem>>, vector<1x1x32x8xbf16>
    %330 = vector.shape_cast %329 : vector<1x1x32x8xbf16> to vector<32x8xbf16>
    %331 = arith.truncf %328 : vector<9x32xf32> to vector<9x32xbf16>
    %cst_230 = arith.constant dense<0.000000e+00> : vector<9x8xf32>
    %332 = tpu.matmul %331, %330, %cst_230 {dimension_numbers = #tpu.dot_dimension_numbers<[1], [0], [0], [1], [0, 0, 1, 1], [], []>} : vector<9x32xbf16>, vector<32x8xbf16>, vector<9x8xf32> -> vector<9x8xf32>
    %c1_231 = arith.constant 1 : index
    %c0_232 = arith.constant 0 : index
    %c0_233 = arith.constant 0 : index
    %c0_234 = arith.constant 0 : index
    %333 = vector.load %arg11[%c1_231, %c0_232, %c0_233, %c0_234] : memref<2x4x1x8xf32, #tpu.memory_space<vmem>>, vector<1x1x1x8xf32>
    %334 = vector.shape_cast %333 : vector<1x1x1x8xf32> to vector<1x8xf32>
    %335 = vector.broadcast %334 : vector<1x8xf32> to vector<9x8xf32>
    %336 = arith.addf %332, %335 : vector<9x8xf32>
    %c1_235 = arith.constant 1 : index
    %c0_236 = arith.constant 0 : index
    %c0_237 = arith.constant 0 : index
    %c0_238 = arith.constant 0 : index
    %337 = vector.load %arg12[%c1_235, %c0_236, %c0_237, %c0_238] : memref<2x4x32x8xbf16, #tpu.memory_space<vmem>>, vector<1x1x32x8xbf16>
    %338 = vector.shape_cast %337 : vector<1x1x32x8xbf16> to vector<32x8xbf16>
    %339 = arith.truncf %328 : vector<9x32xf32> to vector<9x32xbf16>
    %cst_239 = arith.constant dense<0.000000e+00> : vector<9x8xf32>
    %340 = tpu.matmul %339, %338, %cst_239 {dimension_numbers = #tpu.dot_dimension_numbers<[1], [0], [0], [1], [0, 0, 1, 1], [], []>} : vector<9x32xbf16>, vector<32x8xbf16>, vector<9x8xf32> -> vector<9x8xf32>
    %c1_240 = arith.constant 1 : index
    %c0_241 = arith.constant 0 : index
    %c0_242 = arith.constant 0 : index
    %c0_243 = arith.constant 0 : index
    %341 = vector.load %arg13[%c1_240, %c0_241, %c0_242, %c0_243] : memref<2x4x1x8xf32, #tpu.memory_space<vmem>>, vector<1x1x1x8xf32>
    %342 = vector.shape_cast %341 : vector<1x1x1x8xf32> to vector<1x8xf32>
    %343 = vector.broadcast %342 : vector<1x8xf32> to vector<9x8xf32>
    %344 = arith.addf %340, %343 : vector<9x8xf32>
    %c1_244 = arith.constant 1 : index
    %c0_245 = arith.constant 0 : index
    %c0_246 = arith.constant 0 : index
    %c0_247 = arith.constant 0 : index
    %345 = vector.load %arg14[%c1_244, %c0_245, %c0_246, %c0_247] : memref<2x4x32x8xbf16, #tpu.memory_space<vmem>>, vector<1x1x32x8xbf16>
    %346 = vector.shape_cast %345 : vector<1x1x32x8xbf16> to vector<32x8xbf16>
    %347 = arith.truncf %328 : vector<9x32xf32> to vector<9x32xbf16>
    %cst_248 = arith.constant dense<0.000000e+00> : vector<9x8xf32>
    %348 = tpu.matmul %347, %346, %cst_248 {dimension_numbers = #tpu.dot_dimension_numbers<[1], [0], [0], [1], [0, 0, 1, 1], [], []>} : vector<9x32xbf16>, vector<32x8xbf16>, vector<9x8xf32> -> vector<9x8xf32>
    %c1_249 = arith.constant 1 : index
    %c0_250 = arith.constant 0 : index
    %c0_251 = arith.constant 0 : index
    %c0_252 = arith.constant 0 : index
    %349 = vector.load %arg15[%c1_249, %c0_250, %c0_251, %c0_252] : memref<2x4x1x8xf32, #tpu.memory_space<vmem>>, vector<1x1x1x8xf32>
    %350 = vector.shape_cast %349 : vector<1x1x1x8xf32> to vector<1x8xf32>
    %351 = vector.broadcast %350 : vector<1x8xf32> to vector<9x8xf32>
    %352 = arith.addf %348, %351 : vector<9x8xf32>
    %353 = arith.truncf %336 : vector<9x8xf32> to vector<9x8xbf16>
    %354 = arith.truncf %344 : vector<9x8xf32> to vector<9x8xbf16>
    %cst_253 = arith.constant dense<0.000000e+00> : vector<9x9xf32>
    %355 = tpu.matmul %353, %354, %cst_253 {dimension_numbers = #tpu.dot_dimension_numbers<[1], [1], [0], [0], [0, 0, 1, 0], [], []>} : vector<9x8xbf16>, vector<9x8xbf16>, vector<9x9xf32> -> vector<9x9xf32>
    %cst_254 = arith.constant 0.353553385 : f32
    %356 = vector.broadcast %cst_254 : f32 to vector<9x9xf32>
    %357 = arith.mulf %355, %356 : vector<9x9xf32>
    %358 = arith.addf %357, %77 : vector<9x9xf32>
    %cst_255 = arith.constant dense<0xFF800000> : vector<9xf32>
    %359 = vector.multi_reduction <maximumf>, %358, %cst_255 [1] : vector<9x9xf32> to vector<9xf32>
    %360 = vector.shape_cast %359 : vector<9xf32> to vector<9x1xf32>
    %361 = vector.broadcast %360 : vector<9x1xf32> to vector<9x9xf32>
    %362 = arith.subf %358, %361 : vector<9x9xf32>
    %363 = math.exp %362 : vector<9x9xf32>
    %cst_256 = arith.constant dense<0.000000e+00> : vector<9xf32>
    %364 = vector.multi_reduction <add>, %363, %cst_256 [1] : vector<9x9xf32> to vector<9xf32>
    %365 = vector.shape_cast %364 : vector<9xf32> to vector<9x1xf32>
    %366 = vector.broadcast %365 : vector<9x1xf32> to vector<9x9xf32>
    %367 = arith.divf %363, %366 : vector<9x9xf32>
    %368 = arith.truncf %367 : vector<9x9xf32> to vector<9x9xbf16>
    %369 = arith.truncf %352 : vector<9x8xf32> to vector<9x8xbf16>
    %cst_257 = arith.constant dense<0.000000e+00> : vector<9x8xf32>
    %370 = tpu.matmul %368, %369, %cst_257 {dimension_numbers = #tpu.dot_dimension_numbers<[1], [0], [0], [1], [0, 0, 1, 1], [], []>} : vector<9x9xbf16>, vector<9x8xbf16>, vector<9x8xf32> -> vector<9x8xf32>
    %c0_258 = arith.constant 0 : index
    %c0_259 = arith.constant 0 : index
    %371 = vector.load %arg37[%c0_258, %c0_259] : memref<9x32xf32, #tpu.memory_space<vmem>>, vector<9x8xf32>
    tpu.vector_store %arg37[%c0_258, %c0_259], %370 {strides = array<i32>} : memref<9x32xf32, #tpu.memory_space<vmem>>, vector<9x8xf32>,
    %c1_260 = arith.constant 1 : index
    %c1_261 = arith.constant 1 : index
    %c0_262 = arith.constant 0 : index
    %c0_263 = arith.constant 0 : index
    %372 = vector.load %arg10[%c1_260, %c1_261, %c0_262, %c0_263] : memref<2x4x32x8xbf16, #tpu.memory_space<vmem>>, vector<1x1x32x8xbf16>
    %373 = vector.shape_cast %372 : vector<1x1x32x8xbf16> to vector<32x8xbf16>
    %374 = arith.truncf %328 : vector<9x32xf32> to vector<9x32xbf16>
    %cst_264 = arith.constant dense<0.000000e+00> : vector<9x8xf32>
    %375 = tpu.matmul %374, %373, %cst_264 {dimension_numbers = #tpu.dot_dimension_numbers<[1], [0], [0], [1], [0, 0, 1, 1], [], []>} : vector<9x32xbf16>, vector<32x8xbf16>, vector<9x8xf32> -> vector<9x8xf32>
    %c1_265 = arith.constant 1 : index
    %c1_266 = arith.constant 1 : index
    %c0_267 = arith.constant 0 : index
    %c0_268 = arith.constant 0 : index
    %376 = vector.load %arg11[%c1_265, %c1_266, %c0_267, %c0_268] : memref<2x4x1x8xf32, #tpu.memory_space<vmem>>, vector<1x1x1x8xf32>
    %377 = vector.shape_cast %376 : vector<1x1x1x8xf32> to vector<1x8xf32>
    %378 = vector.broadcast %377 : vector<1x8xf32> to vector<9x8xf32>
    %379 = arith.addf %375, %378 : vector<9x8xf32>
    %c1_269 = arith.constant 1 : index
    %c1_270 = arith.constant 1 : index
    %c0_271 = arith.constant 0 : index
    %c0_272 = arith.constant 0 : index
    %380 = vector.load %arg12[%c1_269, %c1_270, %c0_271, %c0_272] : memref<2x4x32x8xbf16, #tpu.memory_space<vmem>>, vector<1x1x32x8xbf16>
    %381 = vector.shape_cast %380 : vector<1x1x32x8xbf16> to vector<32x8xbf16>
    %382 = arith.truncf %328 : vector<9x32xf32> to vector<9x32xbf16>
    %cst_273 = arith.constant dense<0.000000e+00> : vector<9x8xf32>
    %383 = tpu.matmul %382, %381, %cst_273 {dimension_numbers = #tpu.dot_dimension_numbers<[1], [0], [0], [1], [0, 0, 1, 1], [], []>} : vector<9x32xbf16>, vector<32x8xbf16>, vector<9x8xf32> -> vector<9x8xf32>
    %c1_274 = arith.constant 1 : index
    %c1_275 = arith.constant 1 : index
    %c0_276 = arith.constant 0 : index
    %c0_277 = arith.constant 0 : index
    %384 = vector.load %arg13[%c1_274, %c1_275, %c0_276, %c0_277] : memref<2x4x1x8xf32, #tpu.memory_space<vmem>>, vector<1x1x1x8xf32>
    %385 = vector.shape_cast %384 : vector<1x1x1x8xf32> to vector<1x8xf32>
    %386 = vector.broadcast %385 : vector<1x8xf32> to vector<9x8xf32>
    %387 = arith.addf %383, %386 : vector<9x8xf32>
    %c1_278 = arith.constant 1 : index
    %c1_279 = arith.constant 1 : index
    %c0_280 = arith.constant 0 : index
    %c0_281 = arith.constant 0 : index
    %388 = vector.load %arg14[%c1_278, %c1_279, %c0_280, %c0_281] : memref<2x4x32x8xbf16, #tpu.memory_space<vmem>>, vector<1x1x32x8xbf16>
    %389 = vector.shape_cast %388 : vector<1x1x32x8xbf16> to vector<32x8xbf16>
    %390 = arith.truncf %328 : vector<9x32xf32> to vector<9x32xbf16>
    %cst_282 = arith.constant dense<0.000000e+00> : vector<9x8xf32>
    %391 = tpu.matmul %390, %389, %cst_282 {dimension_numbers = #tpu.dot_dimension_numbers<[1], [0], [0], [1], [0, 0, 1, 1], [], []>} : vector<9x32xbf16>, vector<32x8xbf16>, vector<9x8xf32> -> vector<9x8xf32>
    %c1_283 = arith.constant 1 : index
    %c1_284 = arith.constant 1 : index
    %c0_285 = arith.constant 0 : index
    %c0_286 = arith.constant 0 : index
    %392 = vector.load %arg15[%c1_283, %c1_284, %c0_285, %c0_286] : memref<2x4x1x8xf32, #tpu.memory_space<vmem>>, vector<1x1x1x8xf32>
    %393 = vector.shape_cast %392 : vector<1x1x1x8xf32> to vector<1x8xf32>
    %394 = vector.broadcast %393 : vector<1x8xf32> to vector<9x8xf32>
    %395 = arith.addf %391, %394 : vector<9x8xf32>
    %396 = arith.truncf %379 : vector<9x8xf32> to vector<9x8xbf16>
    %397 = arith.truncf %387 : vector<9x8xf32> to vector<9x8xbf16>
    %cst_287 = arith.constant dense<0.000000e+00> : vector<9x9xf32>
    %398 = tpu.matmul %396, %397, %cst_287 {dimension_numbers = #tpu.dot_dimension_numbers<[1], [1], [0], [0], [0, 0, 1, 0], [], []>} : vector<9x8xbf16>, vector<9x8xbf16>, vector<9x9xf32> -> vector<9x9xf32>
    %cst_288 = arith.constant 0.353553385 : f32
    %399 = vector.broadcast %cst_288 : f32 to vector<9x9xf32>
    %400 = arith.mulf %398, %399 : vector<9x9xf32>
    %401 = arith.addf %400, %77 : vector<9x9xf32>
    %cst_289 = arith.constant dense<0xFF800000> : vector<9xf32>
    %402 = vector.multi_reduction <maximumf>, %401, %cst_289 [1] : vector<9x9xf32> to vector<9xf32>
    %403 = vector.shape_cast %402 : vector<9xf32> to vector<9x1xf32>
    %404 = vector.broadcast %403 : vector<9x1xf32> to vector<9x9xf32>
    %405 = arith.subf %401, %404 : vector<9x9xf32>
    %406 = math.exp %405 : vector<9x9xf32>
    %cst_290 = arith.constant dense<0.000000e+00> : vector<9xf32>
    %407 = vector.multi_reduction <add>, %406, %cst_290 [1] : vector<9x9xf32> to vector<9xf32>
    %408 = vector.shape_cast %407 : vector<9xf32> to vector<9x1xf32>
    %409 = vector.broadcast %408 : vector<9x1xf32> to vector<9x9xf32>
    %410 = arith.divf %406, %409 : vector<9x9xf32>
    %411 = arith.truncf %410 : vector<9x9xf32> to vector<9x9xbf16>
    %412 = arith.truncf %395 : vector<9x8xf32> to vector<9x8xbf16>
    %cst_291 = arith.constant dense<0.000000e+00> : vector<9x8xf32>
    %413 = tpu.matmul %411, %412, %cst_291 {dimension_numbers = #tpu.dot_dimension_numbers<[1], [0], [0], [1], [0, 0, 1, 1], [], []>} : vector<9x9xbf16>, vector<9x8xbf16>, vector<9x8xf32> -> vector<9x8xf32>
    %c0_292 = arith.constant 0 : index
    %c8_293 = arith.constant 8 : index
    %414 = vector.load %arg37[%c0_292, %c8_293] : memref<9x32xf32, #tpu.memory_space<vmem>>, vector<9x8xf32>
    tpu.vector_store %arg37[%c0_292, %c8_293], %413 {strides = array<i32>} : memref<9x32xf32, #tpu.memory_space<vmem>>, vector<9x8xf32>,
    %c1_294 = arith.constant 1 : index
    %c2_295 = arith.constant 2 : index
    %c0_296 = arith.constant 0 : index
    %c0_297 = arith.constant 0 : index
    %415 = vector.load %arg10[%c1_294, %c2_295, %c0_296, %c0_297] : memref<2x4x32x8xbf16, #tpu.memory_space<vmem>>, vector<1x1x32x8xbf16>
    %416 = vector.shape_cast %415 : vector<1x1x32x8xbf16> to vector<32x8xbf16>
    %417 = arith.truncf %328 : vector<9x32xf32> to vector<9x32xbf16>
    %cst_298 = arith.constant dense<0.000000e+00> : vector<9x8xf32>
    %418 = tpu.matmul %417, %416, %cst_298 {dimension_numbers = #tpu.dot_dimension_numbers<[1], [0], [0], [1], [0, 0, 1, 1], [], []>} : vector<9x32xbf16>, vector<32x8xbf16>, vector<9x8xf32> -> vector<9x8xf32>
    %c1_299 = arith.constant 1 : index
    %c2_300 = arith.constant 2 : index
    %c0_301 = arith.constant 0 : index
    %c0_302 = arith.constant 0 : index
    %419 = vector.load %arg11[%c1_299, %c2_300, %c0_301, %c0_302] : memref<2x4x1x8xf32, #tpu.memory_space<vmem>>, vector<1x1x1x8xf32>
    %420 = vector.shape_cast %419 : vector<1x1x1x8xf32> to vector<1x8xf32>
    %421 = vector.broadcast %420 : vector<1x8xf32> to vector<9x8xf32>
    %422 = arith.addf %418, %421 : vector<9x8xf32>
    %c1_303 = arith.constant 1 : index
    %c2_304 = arith.constant 2 : index
    %c0_305 = arith.constant 0 : index
    %c0_306 = arith.constant 0 : index
    %423 = vector.load %arg12[%c1_303, %c2_304, %c0_305, %c0_306] : memref<2x4x32x8xbf16, #tpu.memory_space<vmem>>, vector<1x1x32x8xbf16>
    %424 = vector.shape_cast %423 : vector<1x1x32x8xbf16> to vector<32x8xbf16>
    %425 = arith.truncf %328 : vector<9x32xf32> to vector<9x32xbf16>
    %cst_307 = arith.constant dense<0.000000e+00> : vector<9x8xf32>
    %426 = tpu.matmul %425, %424, %cst_307 {dimension_numbers = #tpu.dot_dimension_numbers<[1], [0], [0], [1], [0, 0, 1, 1], [], []>} : vector<9x32xbf16>, vector<32x8xbf16>, vector<9x8xf32> -> vector<9x8xf32>
    %c1_308 = arith.constant 1 : index
    %c2_309 = arith.constant 2 : index
    %c0_310 = arith.constant 0 : index
    %c0_311 = arith.constant 0 : index
    %427 = vector.load %arg13[%c1_308, %c2_309, %c0_310, %c0_311] : memref<2x4x1x8xf32, #tpu.memory_space<vmem>>, vector<1x1x1x8xf32>
    %428 = vector.shape_cast %427 : vector<1x1x1x8xf32> to vector<1x8xf32>
    %429 = vector.broadcast %428 : vector<1x8xf32> to vector<9x8xf32>
    %430 = arith.addf %426, %429 : vector<9x8xf32>
    %c1_312 = arith.constant 1 : index
    %c2_313 = arith.constant 2 : index
    %c0_314 = arith.constant 0 : index
    %c0_315 = arith.constant 0 : index
    %431 = vector.load %arg14[%c1_312, %c2_313, %c0_314, %c0_315] : memref<2x4x32x8xbf16, #tpu.memory_space<vmem>>, vector<1x1x32x8xbf16>
    %432 = vector.shape_cast %431 : vector<1x1x32x8xbf16> to vector<32x8xbf16>
    %433 = arith.truncf %328 : vector<9x32xf32> to vector<9x32xbf16>
    %cst_316 = arith.constant dense<0.000000e+00> : vector<9x8xf32>
    %434 = tpu.matmul %433, %432, %cst_316 {dimension_numbers = #tpu.dot_dimension_numbers<[1], [0], [0], [1], [0, 0, 1, 1], [], []>} : vector<9x32xbf16>, vector<32x8xbf16>, vector<9x8xf32> -> vector<9x8xf32>
    %c1_317 = arith.constant 1 : index
    %c2_318 = arith.constant 2 : index
    %c0_319 = arith.constant 0 : index
    %c0_320 = arith.constant 0 : index
    %435 = vector.load %arg15[%c1_317, %c2_318, %c0_319, %c0_320] : memref<2x4x1x8xf32, #tpu.memory_space<vmem>>, vector<1x1x1x8xf32>
    %436 = vector.shape_cast %435 : vector<1x1x1x8xf32> to vector<1x8xf32>
    %437 = vector.broadcast %436 : vector<1x8xf32> to vector<9x8xf32>
    %438 = arith.addf %434, %437 : vector<9x8xf32>
    %439 = arith.truncf %422 : vector<9x8xf32> to vector<9x8xbf16>
    %440 = arith.truncf %430 : vector<9x8xf32> to vector<9x8xbf16>
    %cst_321 = arith.constant dense<0.000000e+00> : vector<9x9xf32>
    %441 = tpu.matmul %439, %440, %cst_321 {dimension_numbers = #tpu.dot_dimension_numbers<[1], [1], [0], [0], [0, 0, 1, 0], [], []>} : vector<9x8xbf16>, vector<9x8xbf16>, vector<9x9xf32> -> vector<9x9xf32>
    %cst_322 = arith.constant 0.353553385 : f32
    %442 = vector.broadcast %cst_322 : f32 to vector<9x9xf32>
    %443 = arith.mulf %441, %442 : vector<9x9xf32>
    %444 = arith.addf %443, %77 : vector<9x9xf32>
    %cst_323 = arith.constant dense<0xFF800000> : vector<9xf32>
    %445 = vector.multi_reduction <maximumf>, %444, %cst_323 [1] : vector<9x9xf32> to vector<9xf32>
    %446 = vector.shape_cast %445 : vector<9xf32> to vector<9x1xf32>
    %447 = vector.broadcast %446 : vector<9x1xf32> to vector<9x9xf32>
    %448 = arith.subf %444, %447 : vector<9x9xf32>
    %449 = math.exp %448 : vector<9x9xf32>
    %cst_324 = arith.constant dense<0.000000e+00> : vector<9xf32>
    %450 = vector.multi_reduction <add>, %449, %cst_324 [1] : vector<9x9xf32> to vector<9xf32>
    %451 = vector.shape_cast %450 : vector<9xf32> to vector<9x1xf32>
    %452 = vector.broadcast %451 : vector<9x1xf32> to vector<9x9xf32>
    %453 = arith.divf %449, %452 : vector<9x9xf32>
    %454 = arith.truncf %453 : vector<9x9xf32> to vector<9x9xbf16>
    %455 = arith.truncf %438 : vector<9x8xf32> to vector<9x8xbf16>
    %cst_325 = arith.constant dense<0.000000e+00> : vector<9x8xf32>
    %456 = tpu.matmul %454, %455, %cst_325 {dimension_numbers = #tpu.dot_dimension_numbers<[1], [0], [0], [1], [0, 0, 1, 1], [], []>} : vector<9x9xbf16>, vector<9x8xbf16>, vector<9x8xf32> -> vector<9x8xf32>
    %c0_326 = arith.constant 0 : index
    %c16_327 = arith.constant 16 : index
    %457 = vector.load %arg37[%c0_326, %c16_327] : memref<9x32xf32, #tpu.memory_space<vmem>>, vector<9x8xf32>
    tpu.vector_store %arg37[%c0_326, %c16_327], %456 {strides = array<i32>} : memref<9x32xf32, #tpu.memory_space<vmem>>, vector<9x8xf32>,
    %c1_328 = arith.constant 1 : index
    %c3_329 = arith.constant 3 : index
    %c0_330 = arith.constant 0 : index
    %c0_331 = arith.constant 0 : index
    %458 = vector.load %arg10[%c1_328, %c3_329, %c0_330, %c0_331] : memref<2x4x32x8xbf16, #tpu.memory_space<vmem>>, vector<1x1x32x8xbf16>
    %459 = vector.shape_cast %458 : vector<1x1x32x8xbf16> to vector<32x8xbf16>
    %460 = arith.truncf %328 : vector<9x32xf32> to vector<9x32xbf16>
    %cst_332 = arith.constant dense<0.000000e+00> : vector<9x8xf32>
    %461 = tpu.matmul %460, %459, %cst_332 {dimension_numbers = #tpu.dot_dimension_numbers<[1], [0], [0], [1], [0, 0, 1, 1], [], []>} : vector<9x32xbf16>, vector<32x8xbf16>, vector<9x8xf32> -> vector<9x8xf32>
    %c1_333 = arith.constant 1 : index
    %c3_334 = arith.constant 3 : index
    %c0_335 = arith.constant 0 : index
    %c0_336 = arith.constant 0 : index
    %462 = vector.load %arg11[%c1_333, %c3_334, %c0_335, %c0_336] : memref<2x4x1x8xf32, #tpu.memory_space<vmem>>, vector<1x1x1x8xf32>
    %463 = vector.shape_cast %462 : vector<1x1x1x8xf32> to vector<1x8xf32>
    %464 = vector.broadcast %463 : vector<1x8xf32> to vector<9x8xf32>
    %465 = arith.addf %461, %464 : vector<9x8xf32>
    %c1_337 = arith.constant 1 : index
    %c3_338 = arith.constant 3 : index
    %c0_339 = arith.constant 0 : index
    %c0_340 = arith.constant 0 : index
    %466 = vector.load %arg12[%c1_337, %c3_338, %c0_339, %c0_340] : memref<2x4x32x8xbf16, #tpu.memory_space<vmem>>, vector<1x1x32x8xbf16>
    %467 = vector.shape_cast %466 : vector<1x1x32x8xbf16> to vector<32x8xbf16>
    %468 = arith.truncf %328 : vector<9x32xf32> to vector<9x32xbf16>
    %cst_341 = arith.constant dense<0.000000e+00> : vector<9x8xf32>
    %469 = tpu.matmul %468, %467, %cst_341 {dimension_numbers = #tpu.dot_dimension_numbers<[1], [0], [0], [1], [0, 0, 1, 1], [], []>} : vector<9x32xbf16>, vector<32x8xbf16>, vector<9x8xf32> -> vector<9x8xf32>
    %c1_342 = arith.constant 1 : index
    %c3_343 = arith.constant 3 : index
    %c0_344 = arith.constant 0 : index
    %c0_345 = arith.constant 0 : index
    %470 = vector.load %arg13[%c1_342, %c3_343, %c0_344, %c0_345] : memref<2x4x1x8xf32, #tpu.memory_space<vmem>>, vector<1x1x1x8xf32>
    %471 = vector.shape_cast %470 : vector<1x1x1x8xf32> to vector<1x8xf32>
    %472 = vector.broadcast %471 : vector<1x8xf32> to vector<9x8xf32>
    %473 = arith.addf %469, %472 : vector<9x8xf32>
    %c1_346 = arith.constant 1 : index
    %c3_347 = arith.constant 3 : index
    %c0_348 = arith.constant 0 : index
    %c0_349 = arith.constant 0 : index
    %474 = vector.load %arg14[%c1_346, %c3_347, %c0_348, %c0_349] : memref<2x4x32x8xbf16, #tpu.memory_space<vmem>>, vector<1x1x32x8xbf16>
    %475 = vector.shape_cast %474 : vector<1x1x32x8xbf16> to vector<32x8xbf16>
    %476 = arith.truncf %328 : vector<9x32xf32> to vector<9x32xbf16>
    %cst_350 = arith.constant dense<0.000000e+00> : vector<9x8xf32>
    %477 = tpu.matmul %476, %475, %cst_350 {dimension_numbers = #tpu.dot_dimension_numbers<[1], [0], [0], [1], [0, 0, 1, 1], [], []>} : vector<9x32xbf16>, vector<32x8xbf16>, vector<9x8xf32> -> vector<9x8xf32>
    %c1_351 = arith.constant 1 : index
    %c3_352 = arith.constant 3 : index
    %c0_353 = arith.constant 0 : index
    %c0_354 = arith.constant 0 : index
    %478 = vector.load %arg15[%c1_351, %c3_352, %c0_353, %c0_354] : memref<2x4x1x8xf32, #tpu.memory_space<vmem>>, vector<1x1x1x8xf32>
    %479 = vector.shape_cast %478 : vector<1x1x1x8xf32> to vector<1x8xf32>
    %480 = vector.broadcast %479 : vector<1x8xf32> to vector<9x8xf32>
    %481 = arith.addf %477, %480 : vector<9x8xf32>
    %482 = arith.truncf %465 : vector<9x8xf32> to vector<9x8xbf16>
    %483 = arith.truncf %473 : vector<9x8xf32> to vector<9x8xbf16>
    %cst_355 = arith.constant dense<0.000000e+00> : vector<9x9xf32>
    %484 = tpu.matmul %482, %483, %cst_355 {dimension_numbers = #tpu.dot_dimension_numbers<[1], [1], [0], [0], [0, 0, 1, 0], [], []>} : vector<9x8xbf16>, vector<9x8xbf16>, vector<9x9xf32> -> vector<9x9xf32>
    %cst_356 = arith.constant 0.353553385 : f32
    %485 = vector.broadcast %cst_356 : f32 to vector<9x9xf32>
    %486 = arith.mulf %484, %485 : vector<9x9xf32>
    %487 = arith.addf %486, %77 : vector<9x9xf32>
    %cst_357 = arith.constant dense<0xFF800000> : vector<9xf32>
    %488 = vector.multi_reduction <maximumf>, %487, %cst_357 [1] : vector<9x9xf32> to vector<9xf32>
    %489 = vector.shape_cast %488 : vector<9xf32> to vector<9x1xf32>
    %490 = vector.broadcast %489 : vector<9x1xf32> to vector<9x9xf32>
    %491 = arith.subf %487, %490 : vector<9x9xf32>
    %492 = math.exp %491 : vector<9x9xf32>
    %cst_358 = arith.constant dense<0.000000e+00> : vector<9xf32>
    %493 = vector.multi_reduction <add>, %492, %cst_358 [1] : vector<9x9xf32> to vector<9xf32>
    %494 = vector.shape_cast %493 : vector<9xf32> to vector<9x1xf32>
    %495 = vector.broadcast %494 : vector<9x1xf32> to vector<9x9xf32>
    %496 = arith.divf %492, %495 : vector<9x9xf32>
    %497 = arith.truncf %496 : vector<9x9xf32> to vector<9x9xbf16>
    %498 = arith.truncf %481 : vector<9x8xf32> to vector<9x8xbf16>
    %cst_359 = arith.constant dense<0.000000e+00> : vector<9x8xf32>
    %499 = tpu.matmul %497, %498, %cst_359 {dimension_numbers = #tpu.dot_dimension_numbers<[1], [0], [0], [1], [0, 0, 1, 1], [], []>} : vector<9x9xbf16>, vector<9x8xbf16>, vector<9x8xf32> -> vector<9x8xf32>
    %c0_360 = arith.constant 0 : index
    %c24_361 = arith.constant 24 : index
    %500 = vector.load %arg37[%c0_360, %c24_361] : memref<9x32xf32, #tpu.memory_space<vmem>>, vector<9x8xf32>
    tpu.vector_store %arg37[%c0_360, %c24_361], %499 {strides = array<i32>} : memref<9x32xf32, #tpu.memory_space<vmem>>, vector<9x8xf32>,
    %c0_362 = arith.constant 0 : index
    %c0_363 = arith.constant 0 : index
    %501 = vector.load %arg37[%c0_362, %c0_363] : memref<9x32xf32, #tpu.memory_space<vmem>>, vector<9x32xf32>
    %c1_364 = arith.constant 1 : index
    %c0_365 = arith.constant 0 : index
    %c0_366 = arith.constant 0 : index
    %502 = vector.load %arg16[%c1_364, %c0_365, %c0_366] : memref<2x32x32xbf16, #tpu.memory_space<vmem>>, vector<1x32x32xbf16>
    %503 = vector.shape_cast %502 : vector<1x32x32xbf16> to vector<32x32xbf16>
    %504 = arith.truncf %501 : vector<9x32xf32> to vector<9x32xbf16>
    %cst_367 = arith.constant dense<0.000000e+00> : vector<9x32xf32>
    %505 = tpu.matmul %504, %503, %cst_367 {dimension_numbers = #tpu.dot_dimension_numbers<[1], [0], [0], [1], [0, 0, 1, 1], [], []>} : vector<9x32xbf16>, vector<32x32xbf16>, vector<9x32xf32> -> vector<9x32xf32>
    %c1_368 = arith.constant 1 : index
    %c0_369 = arith.constant 0 : index
    %c0_370 = arith.constant 0 : index
    %506 = vector.load %arg17[%c1_368, %c0_369, %c0_370] : memref<2x1x32xf32, #tpu.memory_space<vmem>>, vector<1x1x32xf32>
    %507 = vector.shape_cast %506 : vector<1x1x32xf32> to vector<1x32xf32>
    %508 = vector.broadcast %507 : vector<1x32xf32> to vector<9x32xf32>
    %509 = arith.addf %505, %508 : vector<9x32xf32>
    %510 = arith.addf %328, %509 : vector<9x32xf32>
    %c1_371 = arith.constant 1 : index
    %c0_372 = arith.constant 0 : index
    %c0_373 = arith.constant 0 : index
    %511 = vector.load %arg18[%c1_371, %c0_372, %c0_373] : memref<2x1x32xf32, #tpu.memory_space<vmem>>, vector<1x1x32xf32>
    %512 = vector.shape_cast %511 : vector<1x1x32xf32> to vector<1x32xf32>
    %c1_374 = arith.constant 1 : index
    %c0_375 = arith.constant 0 : index
    %c0_376 = arith.constant 0 : index
    %513 = vector.load %arg19[%c1_374, %c0_375, %c0_376] : memref<2x1x32xf32, #tpu.memory_space<vmem>>, vector<1x1x32xf32>
    %514 = vector.shape_cast %513 : vector<1x1x32xf32> to vector<1x32xf32>
    %cst_377 = arith.constant dense<0.000000e+00> : vector<9xf32>
    %515 = vector.multi_reduction <add>, %510, %cst_377 [1] : vector<9x32xf32> to vector<9xf32>
    %516 = vector.shape_cast %515 : vector<9xf32> to vector<9x1xf32>
    %cst_378 = arith.constant 3.200000e+01 : f32
    %517 = vector.broadcast %cst_378 : f32 to vector<9x1xf32>
    %518 = arith.divf %516, %517 : vector<9x1xf32>
    %519 = vector.broadcast %518 : vector<9x1xf32> to vector<9x32xf32>
    %520 = arith.subf %510, %519 : vector<9x32xf32>
    %521 = arith.mulf %520, %520 : vector<9x32xf32>
    %cst_379 = arith.constant dense<0.000000e+00> : vector<9xf32>
    %522 = vector.multi_reduction <add>, %521, %cst_379 [1] : vector<9x32xf32> to vector<9xf32>
    %523 = vector.shape_cast %522 : vector<9xf32> to vector<9x1xf32>
    %cst_380 = arith.constant 3.200000e+01 : f32
    %524 = vector.broadcast %cst_380 : f32 to vector<9x1xf32>
    %525 = arith.divf %523, %524 : vector<9x1xf32>
    %cst_381 = arith.constant 9.99999974E-6 : f32
    %526 = vector.broadcast %cst_381 : f32 to vector<9x1xf32>
    %527 = arith.addf %525, %526 : vector<9x1xf32>
    %528 = math.rsqrt %527 : vector<9x1xf32>
    %529 = vector.broadcast %528 : vector<9x1xf32> to vector<9x32xf32>
    %530 = arith.mulf %520, %529 : vector<9x32xf32>
    %531 = vector.broadcast %512 : vector<1x32xf32> to vector<9x32xf32>
    %532 = arith.mulf %530, %531 : vector<9x32xf32>
    %533 = vector.broadcast %514 : vector<1x32xf32> to vector<9x32xf32>
    %534 = arith.addf %532, %533 : vector<9x32xf32>
    %c1_382 = arith.constant 1 : index
    %c0_383 = arith.constant 0 : index
    %c0_384 = arith.constant 0 : index
    %535 = vector.load %arg20[%c1_382, %c0_383, %c0_384] : memref<2x32x64xbf16, #tpu.memory_space<vmem>>, vector<1x32x64xbf16>
    %536 = vector.shape_cast %535 : vector<1x32x64xbf16> to vector<32x64xbf16>
    %537 = arith.truncf %534 : vector<9x32xf32> to vector<9x32xbf16>
    %cst_385 = arith.constant dense<0.000000e+00> : vector<9x64xf32>
    %538 = tpu.matmul %537, %536, %cst_385 {dimension_numbers = #tpu.dot_dimension_numbers<[1], [0], [0], [1], [0, 0, 1, 1], [], []>} : vector<9x32xbf16>, vector<32x64xbf16>, vector<9x64xf32> -> vector<9x64xf32>
    %c1_386 = arith.constant 1 : index
    %c0_387 = arith.constant 0 : index
    %c0_388 = arith.constant 0 : index
    %539 = vector.load %arg21[%c1_386, %c0_387, %c0_388] : memref<2x1x64xf32, #tpu.memory_space<vmem>>, vector<1x1x64xf32>
    %540 = vector.shape_cast %539 : vector<1x1x64xf32> to vector<1x64xf32>
    %541 = vector.broadcast %540 : vector<1x64xf32> to vector<9x64xf32>
    %542 = arith.addf %538, %541 : vector<9x64xf32>
    %cst_389 = arith.constant 0.000000e+00 : f32
    %543 = vector.broadcast %cst_389 : f32 to vector<9x64xf32>
    %544 = arith.maximumf %542, %543 : vector<9x64xf32>
    %c1_390 = arith.constant 1 : index
    %c0_391 = arith.constant 0 : index
    %c0_392 = arith.constant 0 : index
    %545 = vector.load %arg22[%c1_390, %c0_391, %c0_392] : memref<2x64x32xbf16, #tpu.memory_space<vmem>>, vector<1x64x32xbf16>
    %546 = vector.shape_cast %545 : vector<1x64x32xbf16> to vector<64x32xbf16>
    %547 = arith.truncf %544 : vector<9x64xf32> to vector<9x64xbf16>
    %cst_393 = arith.constant dense<0.000000e+00> : vector<9x32xf32>
    %548 = tpu.matmul %547, %546, %cst_393 {dimension_numbers = #tpu.dot_dimension_numbers<[1], [0], [0], [1], [0, 0, 1, 1], [], []>} : vector<9x64xbf16>, vector<64x32xbf16>, vector<9x32xf32> -> vector<9x32xf32>
    %c1_394 = arith.constant 1 : index
    %c0_395 = arith.constant 0 : index
    %c0_396 = arith.constant 0 : index
    %549 = vector.load %arg23[%c1_394, %c0_395, %c0_396] : memref<2x1x32xf32, #tpu.memory_space<vmem>>, vector<1x1x32xf32>
    %550 = vector.shape_cast %549 : vector<1x1x32xf32> to vector<1x32xf32>
    %551 = vector.broadcast %550 : vector<1x32xf32> to vector<9x32xf32>
    %552 = arith.addf %548, %551 : vector<9x32xf32>
    %553 = arith.addf %534, %552 : vector<9x32xf32>
    %c1_397 = arith.constant 1 : index
    %c0_398 = arith.constant 0 : index
    %c0_399 = arith.constant 0 : index
    %554 = vector.load %arg24[%c1_397, %c0_398, %c0_399] : memref<2x1x32xf32, #tpu.memory_space<vmem>>, vector<1x1x32xf32>
    %555 = vector.shape_cast %554 : vector<1x1x32xf32> to vector<1x32xf32>
    %c1_400 = arith.constant 1 : index
    %c0_401 = arith.constant 0 : index
    %c0_402 = arith.constant 0 : index
    %556 = vector.load %arg25[%c1_400, %c0_401, %c0_402] : memref<2x1x32xf32, #tpu.memory_space<vmem>>, vector<1x1x32xf32>
    %557 = vector.shape_cast %556 : vector<1x1x32xf32> to vector<1x32xf32>
    %cst_403 = arith.constant dense<0.000000e+00> : vector<9xf32>
    %558 = vector.multi_reduction <add>, %553, %cst_403 [1] : vector<9x32xf32> to vector<9xf32>
    %559 = vector.shape_cast %558 : vector<9xf32> to vector<9x1xf32>
    %cst_404 = arith.constant 3.200000e+01 : f32
    %560 = vector.broadcast %cst_404 : f32 to vector<9x1xf32>
    %561 = arith.divf %559, %560 : vector<9x1xf32>
    %562 = vector.broadcast %561 : vector<9x1xf32> to vector<9x32xf32>
    %563 = arith.subf %553, %562 : vector<9x32xf32>
    %564 = arith.mulf %563, %563 : vector<9x32xf32>
    %cst_405 = arith.constant dense<0.000000e+00> : vector<9xf32>
    %565 = vector.multi_reduction <add>, %564, %cst_405 [1] : vector<9x32xf32> to vector<9xf32>
    %566 = vector.shape_cast %565 : vector<9xf32> to vector<9x1xf32>
    %cst_406 = arith.constant 3.200000e+01 : f32
    %567 = vector.broadcast %cst_406 : f32 to vector<9x1xf32>
    %568 = arith.divf %566, %567 : vector<9x1xf32>
    %cst_407 = arith.constant 9.99999974E-6 : f32
    %569 = vector.broadcast %cst_407 : f32 to vector<9x1xf32>
    %570 = arith.addf %568, %569 : vector<9x1xf32>
    %571 = math.rsqrt %570 : vector<9x1xf32>
    %572 = vector.broadcast %571 : vector<9x1xf32> to vector<9x32xf32>
    %573 = arith.mulf %563, %572 : vector<9x32xf32>
    %574 = vector.broadcast %555 : vector<1x32xf32> to vector<9x32xf32>
    %575 = arith.mulf %573, %574 : vector<9x32xf32>
    %576 = vector.broadcast %557 : vector<1x32xf32> to vector<9x32xf32>
    %577 = arith.addf %575, %576 : vector<9x32xf32>
    %578 = vector.extract_strided_slice %577 {offsets = [0, 0], sizes = [8, 32], strides = [1, 1]} : vector<9x32xf32> to vector<8x32xf32>
    %cst_408 = arith.constant dense<0.000000e+00> : vector<32xf32>
    %579 = vector.multi_reduction <add>, %578, %cst_408 [0] : vector<8x32xf32> to vector<32xf32>
    %580 = vector.shape_cast %579 : vector<32xf32> to vector<1x32xf32>
    %cst_409 = arith.constant 8.000000e+00 : f32
    %581 = vector.broadcast %cst_409 : f32 to vector<1x32xf32>
    %582 = arith.divf %580, %581 : vector<1x32xf32>
    %c0_410 = arith.constant 0 : index
    %c0_411 = arith.constant 0 : index
    %c0_412 = arith.constant 0 : index
    %583 = vector.load %arg35[%c0_410, %c0_411, %c0_412] : memref<1x1x32xf32, #tpu.memory_space<vmem>>, vector<1x1x32xf32>
    %584 = vector.shape_cast %583 : vector<1x1x32xf32> to vector<1x32xf32>
    %585 = vector.shape_cast %582 : vector<1x32xf32> to vector<1x1x32xf32>
    tpu.vector_store %arg35[%c0_410, %c0_411, %c0_412], %585 {strides = array<i32>} : memref<1x1x32xf32, #tpu.memory_space<vmem>>, vector<1x1x32xf32>,
    %586 = vector.extract_strided_slice %577 {offsets = [8, 0], sizes = [1, 32], strides = [1, 1]} : vector<9x32xf32> to vector<1x32xf32>
    %c0_413 = arith.constant 0 : index
    %c0_414 = arith.constant 0 : index
    %587 = vector.load %arg26[%c0_413, %c0_414] : memref<1x32xf32, #tpu.memory_space<vmem>>, vector<1x32xf32>
    %c0_415 = arith.constant 0 : index
    %c0_416 = arith.constant 0 : index
    %588 = vector.load %arg27[%c0_415, %c0_416] : memref<1x32xf32, #tpu.memory_space<vmem>>, vector<1x32xf32>
    %cst_417 = arith.constant dense<0.000000e+00> : vector<1xf32>
    %589 = vector.multi_reduction <add>, %586, %cst_417 [1] : vector<1x32xf32> to vector<1xf32>
    %590 = vector.shape_cast %589 : vector<1xf32> to vector<1x1xf32>
    %cst_418 = arith.constant 3.200000e+01 : f32
    %591 = vector.broadcast %cst_418 : f32 to vector<1x1xf32>
    %592 = arith.divf %590, %591 : vector<1x1xf32>
    %593 = vector.broadcast %592 : vector<1x1xf32> to vector<1x32xf32>
    %594 = arith.subf %586, %593 : vector<1x32xf32>
    %595 = arith.mulf %594, %594 : vector<1x32xf32>
    %cst_419 = arith.constant dense<0.000000e+00> : vector<1xf32>
    %596 = vector.multi_reduction <add>, %595, %cst_419 [1] : vector<1x32xf32> to vector<1xf32>
    %597 = vector.shape_cast %596 : vector<1xf32> to vector<1x1xf32>
    %cst_420 = arith.constant 3.200000e+01 : f32
    %598 = vector.broadcast %cst_420 : f32 to vector<1x1xf32>
    %599 = arith.divf %597, %598 : vector<1x1xf32>
    %cst_421 = arith.constant 9.99999974E-6 : f32
    %600 = vector.broadcast %cst_421 : f32 to vector<1x1xf32>
    %601 = arith.addf %599, %600 : vector<1x1xf32>
    %602 = math.rsqrt %601 : vector<1x1xf32>
    %603 = vector.broadcast %602 : vector<1x1xf32> to vector<1x32xf32>
    %604 = arith.mulf %594, %603 : vector<1x32xf32>
    %605 = arith.mulf %604, %587 : vector<1x32xf32>
    %606 = arith.addf %605, %588 : vector<1x32xf32>
    %c0_422 = arith.constant 0 : index
    %c0_423 = arith.constant 0 : index
    %607 = vector.load %arg28[%c0_422, %c0_423] : memref<32x32xbf16, #tpu.memory_space<vmem>>, vector<32x32xbf16>
    %608 = arith.truncf %606 : vector<1x32xf32> to vector<1x32xbf16>
    %cst_424 = arith.constant dense<0.000000e+00> : vector<1x32xf32>
    %609 = tpu.matmul %608, %607, %cst_424 {dimension_numbers = #tpu.dot_dimension_numbers<[1], [0], [0], [1], [0, 0, 1, 1], [], []>} : vector<1x32xbf16>, vector<32x32xbf16>, vector<1x32xf32> -> vector<1x32xf32>
    %c0_425 = arith.constant 0 : index
    %c0_426 = arith.constant 0 : index
    %610 = vector.load %arg29[%c0_425, %c0_426] : memref<1x32xf32, #tpu.memory_space<vmem>>, vector<1x32xf32>
    %611 = arith.addf %609, %610 : vector<1x32xf32>
    %612 = arith.mulf %611, %611 : vector<1x32xf32>
    %613 = arith.mulf %611, %612 : vector<1x32xf32>
    %cst_427 = arith.constant 4.471500e-02 : f32
    %614 = vector.broadcast %cst_427 : f32 to vector<1x32xf32>
    %615 = arith.mulf %614, %613 : vector<1x32xf32>
    %616 = arith.addf %611, %615 : vector<1x32xf32>
    %cst_428 = arith.constant 0.797884583 : f32
    %617 = vector.broadcast %cst_428 : f32 to vector<1x32xf32>
    %618 = arith.mulf %617, %616 : vector<1x32xf32>
    %619 = math.tanh %618 : vector<1x32xf32>
    %cst_429 = arith.constant 1.000000e+00 : f32
    %620 = vector.broadcast %cst_429 : f32 to vector<1x32xf32>
    %621 = arith.addf %620, %619 : vector<1x32xf32>
    %cst_430 = arith.constant 5.000000e-01 : f32
    %622 = vector.broadcast %cst_430 : f32 to vector<1x32xf32>
    %623 = arith.mulf %622, %621 : vector<1x32xf32>
    %624 = arith.mulf %611, %623 : vector<1x32xf32>
    %c0_431 = arith.constant 0 : index
    %c0_432 = arith.constant 0 : index
    %625 = vector.load %arg30[%c0_431, %c0_432] : memref<32x32xbf16, #tpu.memory_space<vmem>>, vector<32x32xbf16>
    %626 = arith.truncf %624 : vector<1x32xf32> to vector<1x32xbf16>
    %cst_433 = arith.constant dense<0.000000e+00> : vector<1x32xf32>
    %627 = tpu.matmul %626, %625, %cst_433 {dimension_numbers = #tpu.dot_dimension_numbers<[1], [0], [0], [1], [0, 0, 1, 1], [], []>} : vector<1x32xbf16>, vector<32x32xbf16>, vector<1x32xf32> -> vector<1x32xf32>
    %c0_434 = arith.constant 0 : index
    %c0_435 = arith.constant 0 : index
    %628 = vector.load %arg31[%c0_434, %c0_435] : memref<1x32xf32, #tpu.memory_space<vmem>>, vector<1x32xf32>
    %629 = arith.addf %627, %628 : vector<1x32xf32>
    %c0_436 = arith.constant 0 : index
    %c0_437 = arith.constant 0 : index
    %c0_438 = arith.constant 0 : index
    %630 = vector.load %arg34[%c0_436, %c0_437, %c0_438] : memref<1x1x32xf32, #tpu.memory_space<vmem>>, vector<1x1x32xf32>
    %631 = vector.shape_cast %630 : vector<1x1x32xf32> to vector<1x32xf32>
    %632 = vector.shape_cast %629 : vector<1x32xf32> to vector<1x1x32xf32>
    tpu.vector_store %arg34[%c0_436, %c0_437, %c0_438], %632 {strides = array<i32>} : memref<1x1x32xf32, #tpu.memory_space<vmem>>, vector<1x1x32xf32>,
    return
  }
  func.func @transform_0(%arg0: i32) -> (i32, i32, i32) {
    %c0_i32 = arith.constant 0 : i32
    %c0_i32_0 = arith.constant 0 : i32
    %c0_i32_1 = arith.constant 0 : i32
    return %arg0, %c0_i32, %c0_i32_0 : i32, i32, i32
  }
  func.func @transform_1(%arg0: i32) -> (i32, i32, i32) {
    %c0_i32 = arith.constant 0 : i32
    %c0_i32_0 = arith.constant 0 : i32
    %c0_i32_1 = arith.constant 0 : i32
    return %arg0, %c0_i32, %c0_i32_0 : i32, i32, i32
  }
  func.func @transform_2(%arg0: i32) -> (i32, i32) {
    %c0_i32 = arith.constant 0 : i32
    %c0_i32_0 = arith.constant 0 : i32
    %c0_i32_1 = arith.constant 0 : i32
    return %c0_i32, %c0_i32_0 : i32, i32
  }
  func.func @transform_3(%arg0: i32) -> (i32, i32) {
    %c0_i32 = arith.constant 0 : i32
    %c0_i32_0 = arith.constant 0 : i32
    %c0_i32_1 = arith.constant 0 : i32
    return %c0_i32, %c0_i32_0 : i32, i32
  }
  func.func @transform_4(%arg0: i32) -> (i32, i32) {
    %c0_i32 = arith.constant 0 : i32
    %c0_i32_0 = arith.constant 0 : i32
    %c0_i32_1 = arith.constant 0 : i32
    return %c0_i32, %c0_i32_0 : i32, i32
  }
  func.func @transform_5(%arg0: i32) -> (i32, i32) {
    %c0_i32 = arith.constant 0 : i32
    %c0_i32_0 = arith.constant 0 : i32
    %c0_i32_1 = arith.constant 0 : i32
    return %c0_i32, %c0_i32_0 : i32, i32
  }
  func.func @transform_6(%arg0: i32) -> (i32, i32) {
    %c0_i32 = arith.constant 0 : i32
    %c0_i32_0 = arith.constant 0 : i32
    %c0_i32_1 = arith.constant 0 : i32
    return %c0_i32, %c0_i32_0 : i32, i32
  }
  func.func @transform_7(%arg0: i32) -> (i32, i32) {
    %c0_i32 = arith.constant 0 : i32
    %c0_i32_0 = arith.constant 0 : i32
    %c0_i32_1 = arith.constant 0 : i32
    return %c0_i32, %c0_i32_0 : i32, i32
  }
  func.func @transform_8(%arg0: i32) -> (i32, i32) {
    %c0_i32 = arith.constant 0 : i32
    %c0_i32_0 = arith.constant 0 : i32
    %c0_i32_1 = arith.constant 0 : i32
    return %c0_i32, %c0_i32_0 : i32, i32
  }
  func.func @transform_9(%arg0: i32) -> (i32, i32, i32, i32) {
    %c0_i32 = arith.constant 0 : i32
    %c0_i32_0 = arith.constant 0 : i32
    %c0_i32_1 = arith.constant 0 : i32
    %c0_i32_2 = arith.constant 0 : i32
    %c0_i32_3 = arith.constant 0 : i32
    return %c0_i32, %c0_i32_0, %c0_i32_1, %c0_i32_2 : i32, i32, i32, i32
  }
  func.func @transform_10(%arg0: i32) -> (i32, i32, i32, i32) {
    %c0_i32 = arith.constant 0 : i32
    %c0_i32_0 = arith.constant 0 : i32
    %c0_i32_1 = arith.constant 0 : i32
    %c0_i32_2 = arith.constant 0 : i32
    %c0_i32_3 = arith.constant 0 : i32
    return %c0_i32, %c0_i32_0, %c0_i32_1, %c0_i32_2 : i32, i32, i32, i32
  }
  func.func @transform_11(%arg0: i32) -> (i32, i32, i32, i32) {
    %c0_i32 = arith.constant 0 : i32
    %c0_i32_0 = arith.constant 0 : i32
    %c0_i32_1 = arith.constant 0 : i32
    %c0_i32_2 = arith.constant 0 : i32
    %c0_i32_3 = arith.constant 0 : i32
    return %c0_i32, %c0_i32_0, %c0_i32_1, %c0_i32_2 : i32, i32, i32, i32
  }
  func.func @transform_12(%arg0: i32) -> (i32, i32, i32, i32) {
    %c0_i32 = arith.constant 0 : i32
    %c0_i32_0 = arith.constant 0 : i32
    %c0_i32_1 = arith.constant 0 : i32
    %c0_i32_2 = arith.constant 0 : i32
    %c0_i32_3 = arith.constant 0 : i32
    return %c0_i32, %c0_i32_0, %c0_i32_1, %c0_i32_2 : i32, i32, i32, i32
  }
  func.func @transform_13(%arg0: i32) -> (i32, i32, i32, i32) {
    %c0_i32 = arith.constant 0 : i32
    %c0_i32_0 = arith.constant 0 : i32
    %c0_i32_1 = arith.constant 0 : i32
    %c0_i32_2 = arith.constant 0 : i32
    %c0_i32_3 = arith.constant 0 : i32
    return %c0_i32, %c0_i32_0, %c0_i32_1, %c0_i32_2 : i32, i32, i32, i32
  }
  func.func @transform_14(%arg0: i32) -> (i32, i32, i32, i32) {
    %c0_i32 = arith.constant 0 : i32
    %c0_i32_0 = arith.constant 0 : i32
    %c0_i32_1 = arith.constant 0 : i32
    %c0_i32_2 = arith.constant 0 : i32
    %c0_i32_3 = arith.constant 0 : i32
    return %c0_i32, %c0_i32_0, %c0_i32_1, %c0_i32_2 : i32, i32, i32, i32
  }
  func.func @transform_15(%arg0: i32) -> (i32, i32, i32) {
    %c0_i32 = arith.constant 0 : i32
    %c0_i32_0 = arith.constant 0 : i32
    %c0_i32_1 = arith.constant 0 : i32
    %c0_i32_2 = arith.constant 0 : i32
    return %c0_i32, %c0_i32_0, %c0_i32_1 : i32, i32, i32
  }
  func.func @transform_16(%arg0: i32) -> (i32, i32, i32) {
    %c0_i32 = arith.constant 0 : i32
    %c0_i32_0 = arith.constant 0 : i32
    %c0_i32_1 = arith.constant 0 : i32
    %c0_i32_2 = arith.constant 0 : i32
    return %c0_i32, %c0_i32_0, %c0_i32_1 : i32, i32, i32
  }
  func.func @transform_17(%arg0: i32) -> (i32, i32, i32) {
    %c0_i32 = arith.constant 0 : i32
    %c0_i32_0 = arith.constant 0 : i32
    %c0_i32_1 = arith.constant 0 : i32
    %c0_i32_2 = arith.constant 0 : i32
    return %c0_i32, %c0_i32_0, %c0_i32_1 : i32, i32, i32
  }
  func.func @transform_18(%arg0: i32) -> (i32, i32, i32) {
    %c0_i32 = arith.constant 0 : i32
    %c0_i32_0 = arith.constant 0 : i32
    %c0_i32_1 = arith.constant 0 : i32
    %c0_i32_2 = arith.constant 0 : i32
    return %c0_i32, %c0_i32_0, %c0_i32_1 : i32, i32, i32
  }
  func.func @transform_19(%arg0: i32) -> (i32, i32, i32) {
    %c0_i32 = arith.constant 0 : i32
    %c0_i32_0 = arith.constant 0 : i32
    %c0_i32_1 = arith.constant 0 : i32
    %c0_i32_2 = arith.constant 0 : i32
    return %c0_i32, %c0_i32_0, %c0_i32_1 : i32, i32, i32
  }
  func.func @transform_20(%arg0: i32) -> (i32, i32, i32) {
    %c0_i32 = arith.constant 0 : i32
    %c0_i32_0 = arith.constant 0 : i32
    %c0_i32_1 = arith.constant 0 : i32
    %c0_i32_2 = arith.constant 0 : i32
    return %c0_i32, %c0_i32_0, %c0_i32_1 : i32, i32, i32
  }
  func.func @transform_21(%arg0: i32) -> (i32, i32, i32) {
    %c0_i32 = arith.constant 0 : i32
    %c0_i32_0 = arith.constant 0 : i32
    %c0_i32_1 = arith.constant 0 : i32
    %c0_i32_2 = arith.constant 0 : i32
    return %c0_i32, %c0_i32_0, %c0_i32_1 : i32, i32, i32
  }
  func.func @transform_22(%arg0: i32) -> (i32, i32, i32) {
    %c0_i32 = arith.constant 0 : i32
    %c0_i32_0 = arith.constant 0 : i32
    %c0_i32_1 = arith.constant 0 : i32
    %c0_i32_2 = arith.constant 0 : i32
    return %c0_i32, %c0_i32_0, %c0_i32_1 : i32, i32, i32
  }
  func.func @transform_23(%arg0: i32) -> (i32, i32, i32) {
    %c0_i32 = arith.constant 0 : i32
    %c0_i32_0 = arith.constant 0 : i32
    %c0_i32_1 = arith.constant 0 : i32
    %c0_i32_2 = arith.constant 0 : i32
    return %c0_i32, %c0_i32_0, %c0_i32_1 : i32, i32, i32
  }
  func.func @transform_24(%arg0: i32) -> (i32, i32, i32) {
    %c0_i32 = arith.constant 0 : i32
    %c0_i32_0 = arith.constant 0 : i32
    %c0_i32_1 = arith.constant 0 : i32
    %c0_i32_2 = arith.constant 0 : i32
    return %c0_i32, %c0_i32_0, %c0_i32_1 : i32, i32, i32
  }
  func.func @transform_25(%arg0: i32) -> (i32, i32) {
    %c0_i32 = arith.constant 0 : i32
    %c0_i32_0 = arith.constant 0 : i32
    %c0_i32_1 = arith.constant 0 : i32
    return %c0_i32, %c0_i32_0 : i32, i32
  }
  func.func @transform_26(%arg0: i32) -> (i32, i32) {
    %c0_i32 = arith.constant 0 : i32
    %c0_i32_0 = arith.constant 0 : i32
    %c0_i32_1 = arith.constant 0 : i32
    return %c0_i32, %c0_i32_0 : i32, i32
  }
  func.func @transform_27(%arg0: i32) -> (i32, i32) {
    %c0_i32 = arith.constant 0 : i32
    %c0_i32_0 = arith.constant 0 : i32
    %c0_i32_1 = arith.constant 0 : i32
    return %c0_i32, %c0_i32_0 : i32, i32
  }
  func.func @transform_28(%arg0: i32) -> (i32, i32) {
    %c0_i32 = arith.constant 0 : i32
    %c0_i32_0 = arith.constant 0 : i32
    %c0_i32_1 = arith.constant 0 : i32
    return %c0_i32, %c0_i32_0 : i32, i32
  }
  func.func @transform_29(%arg0: i32) -> (i32, i32) {
    %c0_i32 = arith.constant 0 : i32
    %c0_i32_0 = arith.constant 0 : i32
    %c0_i32_1 = arith.constant 0 : i32
    return %c0_i32, %c0_i32_0 : i32, i32
  }
  func.func @transform_30(%arg0: i32) -> (i32, i32) {
    %c0_i32 = arith.constant 0 : i32
    %c0_i32_0 = arith.constant 0 : i32
    %c0_i32_1 = arith.constant 0 : i32
    return %c0_i32, %c0_i32_0 : i32, i32
  }
  func.func @transform_31(%arg0: i32) -> (i32, i32, i32) {
    %c0_i32 = arith.constant 0 : i32
    %c0_i32_0 = arith.constant 0 : i32
    %c0_i32_1 = arith.constant 0 : i32
    return %arg0, %c0_i32, %c0_i32_0 : i32, i32, i32
  }
  func.func @transform_32(%arg0: i32) -> (i32, i32, i32) {
    %c0_i32 = arith.constant 0 : i32
    %c0_i32_0 = arith.constant 0 : i32
    %c0_i32_1 = arith.constant 0 : i32
    return %arg0, %c0_i32, %c0_i32_0 : i32, i32, i32
  }
  func.func @transform_33(%arg0: i32) -> (i32, i32, i32) {
    %c0_i32 = arith.constant 0 : i32
    %c0_i32_0 = arith.constant 0 : i32
    %c0_i32_1 = arith.constant 0 : i32
    return %arg0, %c0_i32, %c0_i32_0 : i32, i32, i32
  }
  func.func @transform_34(%arg0: i32) -> (i32, i32, i32) {
    %c0_i32 = arith.constant 0 : i32
    %c0_i32_0 = arith.constant 0 : i32
    %c0_i32_1 = arith.constant 0 : i32
    return %arg0, %c0_i32, %c0_i32_0 : i32, i32, i32
  }
}

</mosaic_0001>

<llo_original>
// kernel: model_forward.1
$region0: #{model_forward.1}
  #allocation0 [shape = 'u32[]', space=smem, size = 0x4, offset = 0x4, fixed_abs, tag = 'smem constant byte address 0x4 - core index']
  #allocation1 [shape = 'u32[72,128]{1,0:T(1,128)}', space=vmem, size = 0x9000, scoped, tag = 'internal scratch']
  #allocation2 [shape = 'f32[9,9]{1,0:T(8,128)}', space=vmem, size = 0x2000, scoped, tag = 'scratch operand']
  #allocation3 [shape = 'f32[9,32]{1,0:T(8,128)}', space=vmem, size = 0x2000, scoped, tag = 'scratch operand']
  %s0 = inlined_call_operand.smem [shape: u32[35], index: -1, kind: input, shape index: {}]
  %s1 = sld [smem:[%s0]]
  %s2 = scalar_lea.smem %s0, 1
  %s3 = sld [smem:[%s2]]
  %s4 = scalar_lea.smem %s0, 2
  %s5 = sld [smem:[%s4]]
  %s6 = scalar_lea.smem %s0, 3
  %s7 = sld [smem:[%s6]]
  %s8 = scalar_lea.smem %s0, 4
  %s9 = sld [smem:[%s8]]
  %s10 = scalar_lea.smem %s0, 5
  %s11 = sld [smem:[%s10]]
  %s12 = scalar_lea.smem %s0, 6
  %s13 = sld [smem:[%s12]]
  %s14 = scalar_lea.smem %s0, 7
  %s15 = sld [smem:[%s14]]
  %s16 = scalar_lea.smem %s0, 8
  %s17 = sld [smem:[%s16]]
  %s18 = scalar_lea.smem %s0, 9
  %s19 = sld [smem:[%s18]]
  %s20 = scalar_lea.smem %s0, 10
  %s21 = sld [smem:[%s20]]
  %s22 = scalar_lea.smem %s0, 11
  %s23 = sld [smem:[%s22]]
  %s24 = scalar_lea.smem %s0, 12
  %s25 = sld [smem:[%s24]]
  %s26 = scalar_lea.smem %s0, 13
  %s27 = sld [smem:[%s26]]
  %s28 = scalar_lea.smem %s0, 14
  %s29 = sld [smem:[%s28]]
  %s30 = scalar_lea.smem %s0, 15
  %s31 = sld [smem:[%s30]]
  %s32 = scalar_lea.smem %s0, 16
  %s33 = sld [smem:[%s32]]
  %s34 = scalar_lea.smem %s0, 17
  %s35 = sld [smem:[%s34]]
  %s36 = scalar_lea.smem %s0, 18
  %s37 = sld [smem:[%s36]]
  %s38 = scalar_lea.smem %s0, 19
  %s39 = sld [smem:[%s38]]
  %s40 = scalar_lea.smem %s0, 20
  %s41 = sld [smem:[%s40]]
  %s42 = scalar_lea.smem %s0, 21
  %s43 = sld [smem:[%s42]]
  %s44 = scalar_lea.smem %s0, 22
  %s45 = sld [smem:[%s44]]
  %s46 = scalar_lea.smem %s0, 23
  %s47 = sld [smem:[%s46]]
  %s48 = scalar_lea.smem %s0, 24
  %s49 = sld [smem:[%s48]]
  %s50 = scalar_lea.smem %s0, 25
  %s51 = sld [smem:[%s50]]
  %s52 = scalar_lea.smem %s0, 26
  %s53 = sld [smem:[%s52]]
  %s54 = scalar_lea.smem %s0, 27
  %s55 = sld [smem:[%s54]]
  %s56 = scalar_lea.smem %s0, 28
  %s57 = sld [smem:[%s56]]
  %s58 = scalar_lea.smem %s0, 29
  %s59 = sld [smem:[%s58]]
  %s60 = scalar_lea.smem %s0, 30
  %s61 = sld [smem:[%s60]]
  %s62 = scalar_lea.smem %s0, 31
  %s63 = sld [smem:[%s62]]
  %s64 = scalar_lea.smem %s0, 32
  %s65 = sld [smem:[%s64]]
  %s66 = scalar_lea.smem %s0, 33
  %s67 = sld [smem:[%s66]]
  %s68 = scalar_lea.smem %s0, 34
  %s69 = sld [smem:[%s68]]
  %70 = xla_tuple %s63, %s65, %s67, %s69
  %s71 = sld [smem:[#allocation0]]
  $region181: #{model_forward.1} parent=0
    _
  %s73 = ssub.s32 1, %s71
  %s74 = scalar_select 0, %s73, %s71
  $region1: #{model_forward.1} parent=0
    #allocation4 [shape = 'u8[16384]{0}', space=vmem, size = 0x4000, scoped, tag = 'output window, operand 0']
    #allocation5 [shape = 's32[2]{0}', space=sflag, size = 0x8, scoped, tag = 'scoped memory for model_forward.1']
    #allocation6 [shape = 'u8[8192]{0}', space=vmem, size = 0x2000, scoped, tag = 'output window, operand 1']
    #allocation7 [shape = 's32[2]{0}', space=sflag, size = 0x8, scoped, tag = 'scoped memory for model_forward.1']
    #allocation8 [shape = 'u8[1024]{0}', space=vmem, size = 0x400, scoped, tag = 'output window, operand 2']
    #allocation9 [shape = 'u8[1024]{0}', space=vmem, size = 0x400, scoped, tag = 'output window, operand 3']
    #allocation10 [shape = 's32[2]{0}', space=sflag, size = 0x8, scoped, tag = 'scoped memory for model_forward.1']
    %75 = vsyncpa [#allocation5], 0
    %s76 = scalar_lea.sflag [#allocation5], 1
    %77 = vsyncpa %s76, 0
    %78 = vsyncpa [#allocation7], 0
    %s79 = scalar_lea.sflag [#allocation7], 1
    %80 = vsyncpa %s79, 0
    %81 = vsyncpa [#allocation10], 0
    %s82 = scalar_lea.sflag [#allocation10], 1
    %83 = vsyncpa %s82, 0
    loop: start=0, step=1, limit=4
    $region2: #{model_forward.1} parent=1 // loop_pre_header
      _
    $region3: #{model_forward.1} parent=1 // loop_header
      %s85 = sphi 0, %s89
      %p86 = scmp.ge.s32.totalorder %s85, 4
      %s95 = sphi 0, %s97
      %s98 = sphi 0, %s95
      %s99 = sphi 0, %s98
      %s115 = sphi 0, %s99
      %s121 = sphi 0, %s123
      %s124 = sphi 0, %s121
      %s125 = sphi 0, %s124
      %s141 = sphi 0, %s125
      %s145 = sphi 0, %s145
      %s147 = sphi 0, %s145
      %s148 = sphi 0, %s147
      %s162 = sphi 0, %s148
      %s166 = sphi 0, %s166
      %s168 = sphi 0, %s166
      %s169 = sphi 0, %s168
      %s183 = sphi 0, %s169
      %s187 = sphi 0, %s187
      %s189 = sphi 0, %s187
      %s190 = sphi 0, %s189
      %s204 = sphi 0, %s190
      %s208 = sphi 0, %s208
      %s210 = sphi 0, %s208
      %s211 = sphi 0, %s210
      %s225 = sphi 0, %s211
      %s229 = sphi 0, %s229
      %s231 = sphi 0, %s229
      %s232 = sphi 0, %s231
      %s246 = sphi 0, %s232
      %s250 = sphi 0, %s250
      %s252 = sphi 0, %s250
      %s253 = sphi 0, %s252
      %s267 = sphi 0, %s253
      %s271 = sphi 0, %s271
      %s273 = sphi 0, %s271
      %s274 = sphi 0, %s273
      %s288 = sphi 0, %s274
      %s292 = sphi 0, %s292
      %s294 = sphi 0, %s292
      %s295 = sphi 0, %s294
      %s309 = sphi 0, %s295
      %s313 = sphi 0, %s313
      %s315 = sphi 0, %s313
      %s316 = sphi 0, %s315
      %s330 = sphi 0, %s316
      %s334 = sphi 0, %s334
      %s336 = sphi 0, %s334
      %s337 = sphi 0, %s336
      %s351 = sphi 0, %s337
      %s355 = sphi 0, %s355
      %s357 = sphi 0, %s355
      %s358 = sphi 0, %s357
      %s372 = sphi 0, %s358
      %s376 = sphi 0, %s376
      %s378 = sphi 0, %s376
      %s379 = sphi 0, %s378
      %s393 = sphi 0, %s379
      %s397 = sphi 0, %s397
      %s399 = sphi 0, %s397
      %s400 = sphi 0, %s399
      %s414 = sphi 0, %s400
      %s418 = sphi 0, %s418
      %s420 = sphi 0, %s418
      %s421 = sphi 0, %s420
      %s435 = sphi 0, %s421
      %s439 = sphi 0, %s439
      %s441 = sphi 0, %s439
      %s442 = sphi 0, %s441
      %s456 = sphi 0, %s442
      %s460 = sphi 0, %s460
      %s462 = sphi 0, %s460
      %s463 = sphi 0, %s462
      %s477 = sphi 0, %s463
      %s481 = sphi 0, %s481
      %s483 = sphi 0, %s481
      %s484 = sphi 0, %s483
      %s498 = sphi 0, %s484
      %s502 = sphi 0, %s502
      %s504 = sphi 0, %s502
      %s505 = sphi 0, %s504
      %s519 = sphi 0, %s505
      %s523 = sphi 0, %s523
      %s525 = sphi 0, %s523
      %s526 = sphi 0, %s525
      %s540 = sphi 0, %s526
      %s544 = sphi 0, %s544
      %s546 = sphi 0, %s544
      %s547 = sphi 0, %s546
      %s561 = sphi 0, %s547
      %s565 = sphi 0, %s565
      %s567 = sphi 0, %s565
      %s568 = sphi 0, %s567
      %s582 = sphi 0, %s568
      %s586 = sphi 0, %s586
      %s588 = sphi 0, %s586
      %s589 = sphi 0, %s588
      %s603 = sphi 0, %s589
      %s607 = sphi 0, %s607
      %s609 = sphi 0, %s607
      %s610 = sphi 0, %s609
      %s624 = sphi 0, %s610
      %s628 = sphi 0, %s628
      %s630 = sphi 0, %s628
      %s631 = sphi 0, %s630
      %s645 = sphi 0, %s631
      %s649 = sphi 0, %s649
      %s651 = sphi 0, %s649
      %s652 = sphi 0, %s651
      %s666 = sphi 0, %s652
      %s670 = sphi 0, %s670
      %s672 = sphi 0, %s670
      %s673 = sphi 0, %s672
      %s687 = sphi 0, %s673
      %s691 = sphi 0, %s691
      %s693 = sphi 0, %s691
      %s694 = sphi 0, %s693
      %s708 = sphi 0, %s694
      %s712 = sphi 0, %s712
      %s714 = sphi 0, %s712
      %s715 = sphi 0, %s714
      %s729 = sphi 0, %s715
      %s733 = sphi 0, %s733
      %s735 = sphi 0, %s733
      %s736 = sphi 0, %s735
      %s750 = sphi 0, %s736
      %s756 = sphi 0, %s758
      %s759 = sphi 0, %s756
      %s760 = sphi 0, %s759
      %s776 = sphi 0, %s760
      %s782 = sphi 0, %s784
      %s785 = sphi 0, %s782
      %s786 = sphi 0, %s785
      %s802 = sphi 0, %s786
      %s808 = sphi 0, %s810
      %s811 = sphi 0, %s808
      %s812 = sphi 0, %s811
      %s828 = sphi 0, %s812
      %s834 = sphi 0, %s836
      %s837 = sphi 0, %s834
      %s838 = sphi 0, %s837
      %s854 = sphi 0, %s838
    $region4: #{model_forward.1} parent=1 // loop_header_branch
      %88 = sbr.rel (%p86) target = $region8
    $region5: #{model_forward.1} parent=1 // loop_body
      %s90 = ssub.s32 %s85, 1
      %s91 = ssub.s32 %s85, 2
      %s92 = sadd.s32 %s85, 1
      %s93 = ssub.s32 %s85, %s92
      %p94 = scmp.eq.s32.totalorder %s93, 0
      %s96 = sadd.s32 %s95, 1
      %s97 = scalar_select %p94, %s95, %s96
      %p100 = pneg %p94
      %p101 = scmp.eq.s32.totalorder %s85, 1
      %p102 = por %p100, %p101
      %p103 = scmp.ne.s32.totalorder %s95, %s98
      %p104 = scmp.eq.s32.totalorder %s85, 0
      %p105 = por %p103, %p104
      %p106 = scmp.ne.s32.totalorder %s95, %s98
      %p107 = scmp.eq.s32.totalorder %s90, 1
      %p108 = por %p106, %p107
      %p109 = scmp.ne.s32.totalorder %s98, %s99
      %p110 = scmp.eq.s32.totalorder %s90, 0
      %p111 = por %p109, %p110
      %p112 = scmp.ne.s32.totalorder %s98, %s99
      %p113 = scmp.eq.s32.totalorder %s91, 1
      %p114 = por %p112, %p113
      %p116 = scmp.ne.s32.totalorder %s99, %s115
      %p117 = scmp.eq.s32.totalorder %s91, 0
      %p118 = por %p116, %p117
      %s119 = ssub.s32 %s85, %s92
      %p120 = scmp.eq.s32.totalorder %s119, 0
      %s122 = sadd.s32 %s121, 1
      %s123 = scalar_select %p120, %s121, %s122
      %p126 = pneg %p120
      %p127 = scmp.eq.s32.totalorder %s85, 1
      %p128 = por %p126, %p127
      %p129 = scmp.ne.s32.totalorder %s121, %s124
      %p130 = scmp.eq.s32.totalorder %s85, 0
      %p131 = por %p129, %p130
      %p132 = scmp.ne.s32.totalorder %s121, %s124
      %p133 = scmp.eq.s32.totalorder %s90, 1
      %p134 = por %p132, %p133
      %p135 = scmp.ne.s32.totalorder %s124, %s125
      %p136 = scmp.eq.s32.totalorder %s90, 0
      %p137 = por %p135, %p136
      %p138 = scmp.ne.s32.totalorder %s124, %s125
      %p139 = scmp.eq.s32.totalorder %s91, 1
      %p140 = por %p138, %p139
      %p142 = scmp.ne.s32.totalorder %s125, %s141
      %p143 = scmp.eq.s32.totalorder %s91, 0
      %p144 = por %p142, %p143
      %s146 = sadd.s32 %s145, 1
      %p149 = scmp.eq.s32.totalorder %s85, 1
      %p150 = scmp.ne.s32.totalorder %s145, %s147
      %p151 = scmp.eq.s32.totalorder %s85, 0
      %p152 = por %p150, %p151
      %p153 = scmp.ne.s32.totalorder %s145, %s147
      %p154 = scmp.eq.s32.totalorder %s90, 1
      %p155 = por %p153, %p154
      %p156 = scmp.ne.s32.totalorder %s147, %s148
      %p157 = scmp.eq.s32.totalorder %s90, 0
      %p158 = por %p156, %p157
      %p159 = scmp.ne.s32.totalorder %s147, %s148
      %p160 = scmp.eq.s32.totalorder %s91, 1
      %p161 = por %p159, %p160
      %p163 = scmp.ne.s32.totalorder %s148, %s162
      %p164 = scmp.eq.s32.totalorder %s91, 0
      %p165 = por %p163, %p164
      %s167 = sadd.s32 %s166, 1
      %p170 = scmp.eq.s32.totalorder %s85, 1
      %p171 = scmp.ne.s32.totalorder %s166, %s168
      %p172 = scmp.eq.s32.totalorder %s85, 0
      %p173 = por %p171, %p172
      %p174 = scmp.ne.s32.totalorder %s166, %s168
      %p175 = scmp.eq.s32.totalorder %s90, 1
      %p176 = por %p174, %p175
      %p177 = scmp.ne.s32.totalorder %s168, %s169
      %p178 = scmp.eq.s32.totalorder %s90, 0
      %p179 = por %p177, %p178
      %p180 = scmp.ne.s32.totalorder %s168, %s169
      %p181 = scmp.eq.s32.totalorder %s91, 1
      %p182 = por %p180, %p181
      %p184 = scmp.ne.s32.totalorder %s169, %s183
      %p185 = scmp.eq.s32.totalorder %s91, 0
      %p186 = por %p184, %p185
      %s188 = sadd.s32 %s187, 1
      %p191 = scmp.eq.s32.totalorder %s85, 1
      %p192 = scmp.ne.s32.totalorder %s187, %s189
      %p193 = scmp.eq.s32.totalorder %s85, 0
      %p194 = por %p192, %p193
      %p195 = scmp.ne.s32.totalorder %s187, %s189
      %p196 = scmp.eq.s32.totalorder %s90, 1
      %p197 = por %p195, %p196
      %p198 = scmp.ne.s32.totalorder %s189, %s190
      %p199 = scmp.eq.s32.totalorder %s90, 0
      %p200 = por %p198, %p199
      %p201 = scmp.ne.s32.totalorder %s189, %s190
      %p202 = scmp.eq.s32.totalorder %s91, 1
      %p203 = por %p201, %p202
      %p205 = scmp.ne.s32.totalorder %s190, %s204
      %p206 = scmp.eq.s32.totalorder %s91, 0
      %p207 = por %p205, %p206
      %s209 = sadd.s32 %s208, 1
      %p212 = scmp.eq.s32.totalorder %s85, 1
      %p213 = scmp.ne.s32.totalorder %s208, %s210
      %p214 = scmp.eq.s32.totalorder %s85, 0
      %p215 = por %p213, %p214
      %p216 = scmp.ne.s32.totalorder %s208, %s210
      %p217 = scmp.eq.s32.totalorder %s90, 1
      %p218 = por %p216, %p217
      %p219 = scmp.ne.s32.totalorder %s210, %s211
      %p220 = scmp.eq.s32.totalorder %s90, 0
      %p221 = por %p219, %p220
      %p222 = scmp.ne.s32.totalorder %s210, %s211
      %p223 = scmp.eq.s32.totalorder %s91, 1
      %p224 = por %p222, %p223
      %p226 = scmp.ne.s32.totalorder %s211, %s225
      %p227 = scmp.eq.s32.totalorder %s91, 0
      %p228 = por %p226, %p227
      %s230 = sadd.s32 %s229, 1
      %p233 = scmp.eq.s32.totalorder %s85, 1
      %p234 = scmp.ne.s32.totalorder %s229, %s231
      %p235 = scmp.eq.s32.totalorder %s85, 0
      %p236 = por %p234, %p235
      %p237 = scmp.ne.s32.totalorder %s229, %s231
      %p238 = scmp.eq.s32.totalorder %s90, 1
      %p239 = por %p237, %p238
      %p240 = scmp.ne.s32.totalorder %s231, %s232
      %p241 = scmp.eq.s32.totalorder %s90, 0
      %p242 = por %p240, %p241
      %p243 = scmp.ne.s32.totalorder %s231, %s232
      %p244 = scmp.eq.s32.totalorder %s91, 1
      %p245 = por %p243, %p244
      %p247 = scmp.ne.s32.totalorder %s232, %s246
      %p248 = scmp.eq.s32.totalorder %s91, 0
      %p249 = por %p247, %p248
      %s251 = sadd.s32 %s250, 1
      %p254 = scmp.eq.s32.totalorder %s85, 1
      %p255 = scmp.ne.s32.totalorder %s250, %s252
      %p256 = scmp.eq.s32.totalorder %s85, 0
      %p257 = por %p255, %p256
      %p258 = scmp.ne.s32.totalorder %s250, %s252
      %p259 = scmp.eq.s32.totalorder %s90, 1
      %p260 = por %p258, %p259
      %p261 = scmp.ne.s32.totalorder %s252, %s253
      %p262 = scmp.eq.s32.totalorder %s90, 0
      %p263 = por %p261, %p262
      %p264 = scmp.ne.s32.totalorder %s252, %s253
      %p265 = scmp.eq.s32.totalorder %s91, 1
      %p266 = por %p264, %p265
      %p268 = scmp.ne.s32.totalorder %s253, %s267
      %p269 = scmp.eq.s32.totalorder %s91, 0
      %p270 = por %p268, %p269
      %s272 = sadd.s32 %s271, 1
      %p275 = scmp.eq.s32.totalorder %s85, 1
      %p276 = scmp.ne.s32.totalorder %s271, %s273
      %p277 = scmp.eq.s32.totalorder %s85, 0
      %p278 = por %p276, %p277
      %p279 = scmp.ne.s32.totalorder %s271, %s273
      %p280 = scmp.eq.s32.totalorder %s90, 1
      %p281 = por %p279, %p280
      %p282 = scmp.ne.s32.totalorder %s273, %s274
      %p283 = scmp.eq.s32.totalorder %s90, 0
      %p284 = por %p282, %p283
      %p285 = scmp.ne.s32.totalorder %s273, %s274
      %p286 = scmp.eq.s32.totalorder %s91, 1
      %p287 = por %p285, %p286
      %p289 = scmp.ne.s32.totalorder %s274, %s288
      %p290 = scmp.eq.s32.totalorder %s91, 0
      %p291 = por %p289, %p290
      %s293 = sadd.s32 %s292, 1
      %p296 = scmp.eq.s32.totalorder %s85, 1
      %p297 = scmp.ne.s32.totalorder %s292, %s294
      %p298 = scmp.eq.s32.totalorder %s85, 0
      %p299 = por %p297, %p298
      %p300 = scmp.ne.s32.totalorder %s292, %s294
      %p301 = scmp.eq.s32.totalorder %s90, 1
      %p302 = por %p300, %p301
      %p303 = scmp.ne.s32.totalorder %s294, %s295
      %p304 = scmp.eq.s32.totalorder %s90, 0
      %p305 = por %p303, %p304
      %p306 = scmp.ne.s32.totalorder %s294, %s295
      %p307 = scmp.eq.s32.totalorder %s91, 1
      %p308 = por %p306, %p307
      %p310 = scmp.ne.s32.totalorder %s295, %s309
      %p311 = scmp.eq.s32.totalorder %s91, 0
      %p312 = por %p310, %p311
      %s314 = sadd.s32 %s313, 1
      %p317 = scmp.eq.s32.totalorder %s85, 1
      %p318 = scmp.ne.s32.totalorder %s313, %s315
      %p319 = scmp.eq.s32.totalorder %s85, 0
      %p320 = por %p318, %p319
      %p321 = scmp.ne.s32.totalorder %s313, %s315
      %p322 = scmp.eq.s32.totalorder %s90, 1
      %p323 = por %p321, %p322
      %p324 = scmp.ne.s32.totalorder %s315, %s316
      %p325 = scmp.eq.s32.totalorder %s90, 0
      %p326 = por %p324, %p325
      %p327 = scmp.ne.s32.totalorder %s315, %s316
      %p328 = scmp.eq.s32.totalorder %s91, 1
      %p329 = por %p327, %p328
      %p331 = scmp.ne.s32.totalorder %s316, %s330
      %p332 = scmp.eq.s32.totalorder %s91, 0
      %p333 = por %p331, %p332
      %s335 = sadd.s32 %s334, 1
      %p338 = scmp.eq.s32.totalorder %s85, 1
      %p339 = scmp.ne.s32.totalorder %s334, %s336
      %p340 = scmp.eq.s32.totalorder %s85, 0
      %p341 = por %p339, %p340
      %p342 = scmp.ne.s32.totalorder %s334, %s336
      %p343 = scmp.eq.s32.totalorder %s90, 1
      %p344 = por %p342, %p343
      %p345 = scmp.ne.s32.totalorder %s336, %s337
      %p346 = scmp.eq.s32.totalorder %s90, 0
      %p347 = por %p345, %p346
      %p348 = scmp.ne.s32.totalorder %s336, %s337
      %p349 = scmp.eq.s32.totalorder %s91, 1
      %p350 = por %p348, %p349
      %p352 = scmp.ne.s32.totalorder %s337, %s351
      %p353 = scmp.eq.s32.totalorder %s91, 0
      %p354 = por %p352, %p353
      %s356 = sadd.s32 %s355, 1
      %p359 = scmp.eq.s32.totalorder %s85, 1
      %p360 = scmp.ne.s32.totalorder %s355, %s357
      %p361 = scmp.eq.s32.totalorder %s85, 0
      %p362 = por %p360, %p361
      %p363 = scmp.ne.s32.totalorder %s355, %s357
      %p364 = scmp.eq.s32.totalorder %s90, 1
      %p365 = por %p363, %p364
      %p366 = scmp.ne.s32.totalorder %s357, %s358
      %p367 = scmp.eq.s32.totalorder %s90, 0
      %p368 = por %p366, %p367
      %p369 = scmp.ne.s32.totalorder %s357, %s358
      %p370 = scmp.eq.s32.totalorder %s91, 1
      %p371 = por %p369, %p370
      %p373 = scmp.ne.s32.totalorder %s358, %s372
      %p374 = scmp.eq.s32.totalorder %s91, 0
      %p375 = por %p373, %p374
      %s377 = sadd.s32 %s376, 1
      %p380 = scmp.eq.s32.totalorder %s85, 1
      %p381 = scmp.ne.s32.totalorder %s376, %s378
      %p382 = scmp.eq.s32.totalorder %s85, 0
      %p383 = por %p381, %p382
      %p384 = scmp.ne.s32.totalorder %s376, %s378
      %p385 = scmp.eq.s32.totalorder %s90, 1
      %p386 = por %p384, %p385
      %p387 = scmp.ne.s32.totalorder %s378, %s379
      %p388 = scmp.eq.s32.totalorder %s90, 0
      %p389 = por %p387, %p388
      %p390 = scmp.ne.s32.totalorder %s378, %s379
      %p391 = scmp.eq.s32.totalorder %s91, 1
      %p392 = por %p390, %p391
      %p394 = scmp.ne.s32.totalorder %s379, %s393
      %p395 = scmp.eq.s32.totalorder %s91, 0
      %p396 = por %p394, %p395
      %s398 = sadd.s32 %s397, 1
      %p401 = scmp.eq.s32.totalorder %s85, 1
      %p402 = scmp.ne.s32.totalorder %s397, %s399
      %p403 = scmp.eq.s32.totalorder %s85, 0
      %p404 = por %p402, %p403
      %p405 = scmp.ne.s32.totalorder %s397, %s399
      %p406 = scmp.eq.s32.totalorder %s90, 1
      %p407 = por %p405, %p406
      %p408 = scmp.ne.s32.totalorder %s399, %s400
      %p409 = scmp.eq.s32.totalorder %s90, 0
      %p410 = por %p408, %p409
      %p411 = scmp.ne.s32.totalorder %s399, %s400
      %p412 = scmp.eq.s32.totalorder %s91, 1
      %p413 = por %p411, %p412
      %p415 = scmp.ne.s32.totalorder %s400, %s414
      %p416 = scmp.eq.s32.totalorder %s91, 0
      %p417 = por %p415, %p416
      %s419 = sadd.s32 %s418, 1
      %p422 = scmp.eq.s32.totalorder %s85, 1
      %p423 = scmp.ne.s32.totalorder %s418, %s420
      %p424 = scmp.eq.s32.totalorder %s85, 0
      %p425 = por %p423, %p424
      %p426 = scmp.ne.s32.totalorder %s418, %s420
      %p427 = scmp.eq.s32.totalorder %s90, 1
      %p428 = por %p426, %p427
      %p429 = scmp.ne.s32.totalorder %s420, %s421
      %p430 = scmp.eq.s32.totalorder %s90, 0
      %p431 = por %p429, %p430
      %p432 = scmp.ne.s32.totalorder %s420, %s421
      %p433 = scmp.eq.s32.totalorder %s91, 1
      %p434 = por %p432, %p433
      %p436 = scmp.ne.s32.totalorder %s421, %s435
      %p437 = scmp.eq.s32.totalorder %s91, 0
      %p438 = por %p436, %p437
      %s440 = sadd.s32 %s439, 1
      %p443 = scmp.eq.s32.totalorder %s85, 1
      %p444 = scmp.ne.s32.totalorder %s439, %s441
      %p445 = scmp.eq.s32.totalorder %s85, 0
      %p446 = por %p444, %p445
      %p447 = scmp.ne.s32.totalorder %s439, %s441
      %p448 = scmp.eq.s32.totalorder %s90, 1
      %p449 = por %p447, %p448
      %p450 = scmp.ne.s32.totalorder %s441, %s442
      %p451 = scmp.eq.s32.totalorder %s90, 0
      %p452 = por %p450, %p451
      %p453 = scmp.ne.s32.totalorder %s441, %s442
      %p454 = scmp.eq.s32.totalorder %s91, 1
      %p455 = por %p453, %p454
      %p457 = scmp.ne.s32.totalorder %s442, %s456
      %p458 = scmp.eq.s32.totalorder %s91, 0
      %p459 = por %p457, %p458
      %s461 = sadd.s32 %s460, 1
      %p464 = scmp.eq.s32.totalorder %s85, 1
      %p465 = scmp.ne.s32.totalorder %s460, %s462
      %p466 = scmp.eq.s32.totalorder %s85, 0
      %p467 = por %p465, %p466
      %p468 = scmp.ne.s32.totalorder %s460, %s462
      %p469 = scmp.eq.s32.totalorder %s90, 1
      %p470 = por %p468, %p469
      %p471 = scmp.ne.s32.totalorder %s462, %s463
      %p472 = scmp.eq.s32.totalorder %s90, 0
      %p473 = por %p471, %p472
      %p474 = scmp.ne.s32.totalorder %s462, %s463
      %p475 = scmp.eq.s32.totalorder %s91, 1
      %p476 = por %p474, %p475
      %p478 = scmp.ne.s32.totalorder %s463, %s477
      %p479 = scmp.eq.s32.totalorder %s91, 0
      %p480 = por %p478, %p479
      %s482 = sadd.s32 %s481, 1
      %p485 = scmp.eq.s32.totalorder %s85, 1
      %p486 = scmp.ne.s32.totalorder %s481, %s483
      %p487 = scmp.eq.s32.totalorder %s85, 0
      %p488 = por %p486, %p487
      %p489 = scmp.ne.s32.totalorder %s481, %s483
      %p490 = scmp.eq.s32.totalorder %s90, 1
      %p491 = por %p489, %p490
      %p492 = scmp.ne.s32.totalorder %s483, %s484
      %p493 = scmp.eq.s32.totalorder %s90, 0
      %p494 = por %p492, %p493
      %p495 = scmp.ne.s32.totalorder %s483, %s484
      %p496 = scmp.eq.s32.totalorder %s91, 1
      %p497 = por %p495, %p496
      %p499 = scmp.ne.s32.totalorder %s484, %s498
      %p500 = scmp.eq.s32.totalorder %s91, 0
      %p501 = por %p499, %p500
      %s503 = sadd.s32 %s502, 1
      %p506 = scmp.eq.s32.totalorder %s85, 1
      %p507 = scmp.ne.s32.totalorder %s502, %s504
      %p508 = scmp.eq.s32.totalorder %s85, 0
      %p509 = por %p507, %p508
      %p510 = scmp.ne.s32.totalorder %s502, %s504
      %p511 = scmp.eq.s32.totalorder %s90, 1
      %p512 = por %p510, %p511
      %p513 = scmp.ne.s32.totalorder %s504, %s505
      %p514 = scmp.eq.s32.totalorder %s90, 0
      %p515 = por %p513, %p514
      %p516 = scmp.ne.s32.totalorder %s504, %s505
      %p517 = scmp.eq.s32.totalorder %s91, 1
      %p518 = por %p516, %p517
      %p520 = scmp.ne.s32.totalorder %s505, %s519
      %p521 = scmp.eq.s32.totalorder %s91, 0
      %p522 = por %p520, %p521
      %s524 = sadd.s32 %s523, 1
      %p527 = scmp.eq.s32.totalorder %s85, 1
      %p528 = scmp.ne.s32.totalorder %s523, %s525
      %p529 = scmp.eq.s32.totalorder %s85, 0
      %p530 = por %p528, %p529
      %p531 = scmp.ne.s32.totalorder %s523, %s525
      %p532 = scmp.eq.s32.totalorder %s90, 1
      %p533 = por %p531, %p532
      %p534 = scmp.ne.s32.totalorder %s525, %s526
      %p535 = scmp.eq.s32.totalorder %s90, 0
      %p536 = por %p534, %p535
      %p537 = scmp.ne.s32.totalorder %s525, %s526
      %p538 = scmp.eq.s32.totalorder %s91, 1
      %p539 = por %p537, %p538
      %p541 = scmp.ne.s32.totalorder %s526, %s540
      %p542 = scmp.eq.s32.totalorder %s91, 0
      %p543 = por %p541, %p542
      %s545 = sadd.s32 %s544, 1
      %p548 = scmp.eq.s32.totalorder %s85, 1
      %p549 = scmp.ne.s32.totalorder %s544, %s546
      %p550 = scmp.eq.s32.totalorder %s85, 0
      %p551 = por %p549, %p550
      %p552 = scmp.ne.s32.totalorder %s544, %s546
      %p553 = scmp.eq.s32.totalorder %s90, 1
      %p554 = por %p552, %p553
      %p555 = scmp.ne.s32.totalorder %s546, %s547
      %p556 = scmp.eq.s32.totalorder %s90, 0
      %p557 = por %p555, %p556
      %p558 = scmp.ne.s32.totalorder %s546, %s547
      %p559 = scmp.eq.s32.totalorder %s91, 1
      %p560 = por %p558, %p559
      %p562 = scmp.ne.s32.totalorder %s547, %s561
      %p563 = scmp.eq.s32.totalorder %s91, 0
      %p564 = por %p562, %p563
      %s566 = sadd.s32 %s565, 1
      %p569 = scmp.eq.s32.totalorder %s85, 1
      %p570 = scmp.ne.s32.totalorder %s565, %s567
      %p571 = scmp.eq.s32.totalorder %s85, 0
      %p572 = por %p570, %p571
      %p573 = scmp.ne.s32.totalorder %s565, %s567
      %p574 = scmp.eq.s32.totalorder %s90, 1
      %p575 = por %p573, %p574
      %p576 = scmp.ne.s32.totalorder %s567, %s568
      %p577 = scmp.eq.s32.totalorder %s90, 0
      %p578 = por %p576, %p577
      %p579 = scmp.ne.s32.totalorder %s567, %s568
      %p580 = scmp.eq.s32.totalorder %s91, 1
      %p581 = por %p579, %p580
      %p583 = scmp.ne.s32.totalorder %s568, %s582
      %p584 = scmp.eq.s32.totalorder %s91, 0
      %p585 = por %p583, %p584
      %s587 = sadd.s32 %s586, 1
      %p590 = scmp.eq.s32.totalorder %s85, 1
      %p591 = scmp.ne.s32.totalorder %s586, %s588
      %p592 = scmp.eq.s32.totalorder %s85, 0
      %p593 = por %p591, %p592
      %p594 = scmp.ne.s32.totalorder %s586, %s588
      %p595 = scmp.eq.s32.totalorder %s90, 1
      %p596 = por %p594, %p595
      %p597 = scmp.ne.s32.totalorder %s588, %s589
      %p598 = scmp.eq.s32.totalorder %s90, 0
      %p599 = por %p597, %p598
      %p600 = scmp.ne.s32.totalorder %s588, %s589
      %p601 = scmp.eq.s32.totalorder %s91, 1
      %p602 = por %p600, %p601
      %p604 = scmp.ne.s32.totalorder %s589, %s603
      %p605 = scmp.eq.s32.totalorder %s91, 0
      %p606 = por %p604, %p605
      %s608 = sadd.s32 %s607, 1
      %p611 = scmp.eq.s32.totalorder %s85, 1
      %p612 = scmp.ne.s32.totalorder %s607, %s609
      %p613 = scmp.eq.s32.totalorder %s85, 0
      %p614 = por %p612, %p613
      %p615 = scmp.ne.s32.totalorder %s607, %s609
      %p616 = scmp.eq.s32.totalorder %s90, 1
      %p617 = por %p615, %p616
      %p618 = scmp.ne.s32.totalorder %s609, %s610
      %p619 = scmp.eq.s32.totalorder %s90, 0
      %p620 = por %p618, %p619
      %p621 = scmp.ne.s32.totalorder %s609, %s610
      %p622 = scmp.eq.s32.totalorder %s91, 1
      %p623 = por %p621, %p622
      %p625 = scmp.ne.s32.totalorder %s610, %s624
      %p626 = scmp.eq.s32.totalorder %s91, 0
      %p627 = por %p625, %p626
      %s629 = sadd.s32 %s628, 1
      %p632 = scmp.eq.s32.totalorder %s85, 1
      %p633 = scmp.ne.s32.totalorder %s628, %s630
      %p634 = scmp.eq.s32.totalorder %s85, 0
      %p635 = por %p633, %p634
      %p636 = scmp.ne.s32.totalorder %s628, %s630
      %p637 = scmp.eq.s32.totalorder %s90, 1
      %p638 = por %p636, %p637
      %p639 = scmp.ne.s32.totalorder %s630, %s631
      %p640 = scmp.eq.s32.totalorder %s90, 0
      %p641 = por %p639, %p640
      %p642 = scmp.ne.s32.totalorder %s630, %s631
      %p643 = scmp.eq.s32.totalorder %s91, 1
      %p644 = por %p642, %p643
      %p646 = scmp.ne.s32.totalorder %s631, %s645
      %p647 = scmp.eq.s32.totalorder %s91, 0
      %p648 = por %p646, %p647
      %s650 = sadd.s32 %s649, 1
      %p653 = scmp.eq.s32.totalorder %s85, 1
      %p654 = scmp.ne.s32.totalorder %s649, %s651
      %p655 = scmp.eq.s32.totalorder %s85, 0
      %p656 = por %p654, %p655
      %p657 = scmp.ne.s32.totalorder %s649, %s651
      %p658 = scmp.eq.s32.totalorder %s90, 1
      %p659 = por %p657, %p658
      %p660 = scmp.ne.s32.totalorder %s651, %s652
      %p661 = scmp.eq.s32.totalorder %s90, 0
      %p662 = por %p660, %p661
      %p663 = scmp.ne.s32.totalorder %s651, %s652
      %p664 = scmp.eq.s32.totalorder %s91, 1
      %p665 = por %p663, %p664
      %p667 = scmp.ne.s32.totalorder %s652, %s666
      %p668 = scmp.eq.s32.totalorder %s91, 0
      %p669 = por %p667, %p668
      %s671 = sadd.s32 %s670, 1
      %p674 = scmp.eq.s32.totalorder %s85, 1
      %p675 = scmp.ne.s32.totalorder %s670, %s672
      %p676 = scmp.eq.s32.totalorder %s85, 0
      %p677 = por %p675, %p676
      %p678 = scmp.ne.s32.totalorder %s670, %s672
      %p679 = scmp.eq.s32.totalorder %s90, 1
      %p680 = por %p678, %p679
      %p681 = scmp.ne.s32.totalorder %s672, %s673
      %p682 = scmp.eq.s32.totalorder %s90, 0
      %p683 = por %p681, %p682
      %p684 = scmp.ne.s32.totalorder %s672, %s673
      %p685 = scmp.eq.s32.totalorder %s91, 1
      %p686 = por %p684, %p685
      %p688 = scmp.ne.s32.totalorder %s673, %s687
      %p689 = scmp.eq.s32.totalorder %s91, 0
      %p690 = por %p688, %p689
      %s692 = sadd.s32 %s691, 1
      %p695 = scmp.eq.s32.totalorder %s85, 1
      %p696 = scmp.ne.s32.totalorder %s691, %s693
      %p697 = scmp.eq.s32.totalorder %s85, 0
      %p698 = por %p696, %p697
      %p699 = scmp.ne.s32.totalorder %s691, %s693
      %p700 = scmp.eq.s32.totalorder %s90, 1
      %p701 = por %p699, %p700
      %p702 = scmp.ne.s32.totalorder %s693, %s694
      %p703 = scmp.eq.s32.totalorder %s90, 0
      %p704 = por %p702, %p703
      %p705 = scmp.ne.s32.totalorder %s693, %s694
      %p706 = scmp.eq.s32.totalorder %s91, 1
      %p707 = por %p705, %p706
      %p709 = scmp.ne.s32.totalorder %s694, %s708
      %p710 = scmp.eq.s32.totalorder %s91, 0
      %p711 = por %p709, %p710
      %s713 = sadd.s32 %s712, 1
      %p716 = scmp.eq.s32.totalorder %s85, 1
      %p717 = scmp.ne.s32.totalorder %s712, %s714
      %p718 = scmp.eq.s32.totalorder %s85, 0
      %p719 = por %p717, %p718
      %p720 = scmp.ne.s32.totalorder %s712, %s714
      %p721 = scmp.eq.s32.totalorder %s90, 1
      %p722 = por %p720, %p721
      %p723 = scmp.ne.s32.totalorder %s714, %s715
      %p724 = scmp.eq.s32.totalorder %s90, 0
      %p725 = por %p723, %p724
      %p726 = scmp.ne.s32.totalorder %s714, %s715
      %p727 = scmp.eq.s32.totalorder %s91, 1
      %p728 = por %p726, %p727
      %p730 = scmp.ne.s32.totalorder %s715, %s729
      %p731 = scmp.eq.s32.totalorder %s91, 0
      %p732 = por %p730, %p731
      %s734 = sadd.s32 %s733, 1
      %p737 = scmp.eq.s32.totalorder %s85, 1
      %p738 = scmp.ne.s32.totalorder %s733, %s735
      %p739 = scmp.eq.s32.totalorder %s85, 0
      %p740 = por %p738, %p739
      %p741 = scmp.ne.s32.totalorder %s733, %s735
      %p742 = scmp.eq.s32.totalorder %s90, 1
      %p743 = por %p741, %p742
      %p744 = scmp.ne.s32.totalorder %s735, %s736
      %p745 = scmp.eq.s32.totalorder %s90, 0
      %p746 = por %p744, %p745
      %p747 = scmp.ne.s32.totalorder %s735, %s736
      %p748 = scmp.eq.s32.totalorder %s91, 1
      %p749 = por %p747, %p748
      %p751 = scmp.ne.s32.totalorder %s736, %s750
      %p752 = scmp.eq.s32.totalorder %s91, 0
      %p753 = por %p751, %p752
      %s754 = ssub.s32 %s85, %s92
      %p755 = scmp.eq.s32.totalorder %s754, 0
      %s757 = sadd.s32 %s756, 1
      %s758 = scalar_select %p755, %s756, %s757
      %p761 = pneg %p755
      %p762 = scmp.eq.s32.totalorder %s85, 1
      %p763 = por %p761, %p762
      %p764 = scmp.ne.s32.totalorder %s756, %s759
      %p765 = scmp.eq.s32.totalorder %s85, 0
      %p766 = por %p764, %p765
      %p767 = scmp.ne.s32.totalorder %s756, %s759
      %p768 = scmp.eq.s32.totalorder %s90, 1
      %p769 = por %p767, %p768
      %p770 = scmp.ne.s32.totalorder %s759, %s760
      %p771 = scmp.eq.s32.totalorder %s90, 0
      %p772 = por %p770, %p771
      %p773 = scmp.ne.s32.totalorder %s759, %s760
      %p774 = scmp.eq.s32.totalorder %s91, 1
      %p775 = por %p773, %p774
      %p777 = scmp.ne.s32.totalorder %s760, %s776
      %p778 = scmp.eq.s32.totalorder %s91, 0
      %p779 = por %p777, %p778
      %s780 = ssub.s32 %s85, %s92
      %p781 = scmp.eq.s32.totalorder %s780, 0
      %s783 = sadd.s32 %s782, 1
      %s784 = scalar_select %p781, %s782, %s783
      %p787 = pneg %p781
      %p788 = scmp.eq.s32.totalorder %s85, 1
      %p789 = por %p787, %p788
      %p790 = scmp.ne.s32.totalorder %s782, %s785
      %p791 = scmp.eq.s32.totalorder %s85, 0
      %p792 = por %p790, %p791
      %p793 = scmp.ne.s32.totalorder %s782, %s785
      %p794 = scmp.eq.s32.totalorder %s90, 1
      %p795 = por %p793, %p794
      %p796 = scmp.ne.s32.totalorder %s785, %s786
      %p797 = scmp.eq.s32.totalorder %s90, 0
      %p798 = por %p796, %p797
      %p799 = scmp.ne.s32.totalorder %s785, %s786
      %p800 = scmp.eq.s32.totalorder %s91, 1
      %p801 = por %p799, %p800
      %p803 = scmp.ne.s32.totalorder %s786, %s802
      %p804 = scmp.eq.s32.totalorder %s91, 0
      %p805 = por %p803, %p804
      %s806 = ssub.s32 %s85, %s92
      %p807 = scmp.eq.s32.totalorder %s806, 0
      %s809 = sadd.s32 %s808, 1
      %s810 = scalar_select %p807, %s808, %s809
      %p813 = pneg %p807
      %p814 = scmp.eq.s32.totalorder %s85, 1
      %p815 = por %p813, %p814
      %p816 = scmp.ne.s32.totalorder %s808, %s811
      %p817 = scmp.eq.s32.totalorder %s85, 0
      %p818 = por %p816, %p817
      %p819 = scmp.ne.s32.totalorder %s808, %s811
      %p820 = scmp.eq.s32.totalorder %s90, 1
      %p821 = por %p819, %p820
      %p822 = scmp.ne.s32.totalorder %s811, %s812
      %p823 = scmp.eq.s32.totalorder %s90, 0
      %p824 = por %p822, %p823
      %p825 = scmp.ne.s32.totalorder %s811, %s812
      %p826 = scmp.eq.s32.totalorder %s91, 1
      %p827 = por %p825, %p826
      %p829 = scmp.ne.s32.totalorder %s812, %s828
      %p830 = scmp.eq.s32.totalorder %s91, 0
      %p831 = por %p829, %p830
      %s832 = ssub.s32 %s85, %s92
      %p833 = scmp.eq.s32.totalorder %s832, 0
      %s835 = sadd.s32 %s834, 1
      %s836 = scalar_select %p833, %s834, %s835
      %p839 = pneg %p833
      %p840 = scmp.eq.s32.totalorder %s85, 1
      %p841 = por %p839, %p840
      %p842 = scmp.ne.s32.totalorder %s834, %s837
      %p843 = scmp.eq.s32.totalorder %s85, 0
      %p844 = por %p842, %p843
      %p845 = scmp.ne.s32.totalorder %s834, %s837
      %p846 = scmp.eq.s32.totalorder %s90, 1
      %p847 = por %p845, %p846
      %p848 = scmp.ne.s32.totalorder %s837, %s838
      %p849 = scmp.eq.s32.totalorder %s90, 0
      %p850 = por %p848, %p849
      %p851 = scmp.ne.s32.totalorder %s837, %s838
      %p852 = scmp.eq.s32.totalorder %s91, 1
      %p853 = por %p851, %p852
      %p855 = scmp.ne.s32.totalorder %s838, %s854
      %p856 = scmp.eq.s32.totalorder %s91, 0
      %p857 = por %p855, %p856
      %p858 = scmp.le.s32.totalorder 1, %s85
      %p859 = scmp.lt.s32.totalorder %s85, 3
      %p860 = pnand %p858, %p859
      %p861 = pneg %p860
      // Predicated region
      $region9: #{model_forward.1} parent=5 // pred_check
        _
      $region10: #{model_forward.1} parent=5 // pred_check_branch
        %863 = sbr.rel (%p860) target = $region12
      $region11: #{model_forward.1} parent=5 // pred_region
        %s864 = ssub.s32 %s85, 1
        // Predicated region
        $region13: #{model_forward.1} parent=11 // pred_check
          %p865 = pneg %p158
        $region14: #{model_forward.1} parent=11 // pred_check_branch
          %867 = sbr.rel (%p865) target = $region16
        $region15: #{model_forward.1} parent=11 // pred_region
          _
        $region16: #{model_forward.1} parent=11 // pred_fallthru
          _
        // Predicated region
        $region17: #{model_forward.1} parent=11 // pred_check
          %p868 = pneg %p179
        $region18: #{model_forward.1} parent=11 // pred_check_branch
          %870 = sbr.rel (%p868) target = $region20
        $region19: #{model_forward.1} parent=11 // pred_region
          _
        $region20: #{model_forward.1} parent=11 // pred_fallthru
          _
        // Predicated region
        $region21: #{model_forward.1} parent=11 // pred_check
          %p871 = pneg %p200
        $region22: #{model_forward.1} parent=11 // pred_check_branch
          %873 = sbr.rel (%p871) target = $region24
        $region23: #{model_forward.1} parent=11 // pred_region
          _
        $region24: #{model_forward.1} parent=11 // pred_fallthru
          _
        // Predicated region
        $region25: #{model_forward.1} parent=11 // pred_check
          %p874 = pneg %p221
        $region26: #{model_forward.1} parent=11 // pred_check_branch
          %876 = sbr.rel (%p874) target = $region28
        $region27: #{model_forward.1} parent=11 // pred_region
          _
        $region28: #{model_forward.1} parent=11 // pred_fallthru
          _
        // Predicated region
        $region29: #{model_forward.1} parent=11 // pred_check
          %p877 = pneg %p242
        $region30: #{model_forward.1} parent=11 // pred_check_branch
          %879 = sbr.rel (%p877) target = $region32
        $region31: #{model_forward.1} parent=11 // pred_region
          _
        $region32: #{model_forward.1} parent=11 // pred_fallthru
          _
        // Predicated region
        $region33: #{model_forward.1} parent=11 // pred_check
          %p880 = pneg %p263
        $region34: #{model_forward.1} parent=11 // pred_check_branch
          %882 = sbr.rel (%p880) target = $region36
        $region35: #{model_forward.1} parent=11 // pred_region
          _
        $region36: #{model_forward.1} parent=11 // pred_fallthru
          _
        // Predicated region
        $region37: #{model_forward.1} parent=11 // pred_check
          %p883 = pneg %p284
        $region38: #{model_forward.1} parent=11 // pred_check_branch
          %885 = sbr.rel (%p883) target = $region40
        $region39: #{model_forward.1} parent=11 // pred_region
          _
        $region40: #{model_forward.1} parent=11 // pred_fallthru
          _
        // Predicated region
        $region41: #{model_forward.1} parent=11 // pred_check
          %p886 = pneg %p305
        $region42: #{model_forward.1} parent=11 // pred_check_branch
          %888 = sbr.rel (%p886) target = $region44
        $region43: #{model_forward.1} parent=11 // pred_region
          _
        $region44: #{model_forward.1} parent=11 // pred_fallthru
          _
        // Predicated region
        $region45: #{model_forward.1} parent=11 // pred_check
          %p889 = pneg %p326
        $region46: #{model_forward.1} parent=11 // pred_check_branch
          %891 = sbr.rel (%p889) target = $region48
        $region47: #{model_forward.1} parent=11 // pred_region
          _
        $region48: #{model_forward.1} parent=11 // pred_fallthru
          _
        // Predicated region
        $region49: #{model_forward.1} parent=11 // pred_check
          %p892 = pneg %p347
        $region50: #{model_forward.1} parent=11 // pred_check_branch
          %894 = sbr.rel (%p892) target = $region52
        $region51: #{model_forward.1} parent=11 // pred_region
          _
        $region52: #{model_forward.1} parent=11 // pred_fallthru
          _
        // Predicated region
        $region53: #{model_forward.1} parent=11 // pred_check
          %p895 = pneg %p368
        $region54: #{model_forward.1} parent=11 // pred_check_branch
          %897 = sbr.rel (%p895) target = $region56
        $region55: #{model_forward.1} parent=11 // pred_region
          _
        $region56: #{model_forward.1} parent=11 // pred_fallthru
          _
        // Predicated region
        $region57: #{model_forward.1} parent=11 // pred_check
          %p898 = pneg %p389
        $region58: #{model_forward.1} parent=11 // pred_check_branch
          %900 = sbr.rel (%p898) target = $region60
        $region59: #{model_forward.1} parent=11 // pred_region
          _
        $region60: #{model_forward.1} parent=11 // pred_fallthru
          _
        // Predicated region
        $region61: #{model_forward.1} parent=11 // pred_check
          %p901 = pneg %p410
        $region62: #{model_forward.1} parent=11 // pred_check_branch
          %903 = sbr.rel (%p901) target = $region64
        $region63: #{model_forward.1} parent=11 // pred_region
          _
        $region64: #{model_forward.1} parent=11 // pred_fallthru
          _
        // Predicated region
        $region65: #{model_forward.1} parent=11 // pred_check
          %p904 = pneg %p431
        $region66: #{model_forward.1} parent=11 // pred_check_branch
          %906 = sbr.rel (%p904) target = $region68
        $region67: #{model_forward.1} parent=11 // pred_region
          _
        $region68: #{model_forward.1} parent=11 // pred_fallthru
          _
        // Predicated region
        $region69: #{model_forward.1} parent=11 // pred_check
          %p907 = pneg %p452
        $region70: #{model_forward.1} parent=11 // pred_check_branch
          %909 = sbr.rel (%p907) target = $region72
        $region71: #{model_forward.1} parent=11 // pred_region
          _
        $region72: #{model_forward.1} parent=11 // pred_fallthru
          _
        // Predicated region
        $region73: #{model_forward.1} parent=11 // pred_check
          %p910 = pneg %p473
        $region74: #{model_forward.1} parent=11 // pred_check_branch
          %912 = sbr.rel (%p910) target = $region76
        $region75: #{model_forward.1} parent=11 // pred_region
          _
        $region76: #{model_forward.1} parent=11 // pred_fallthru
          _
        // Predicated region
        $region77: #{model_forward.1} parent=11 // pred_check
          %p913 = pneg %p494
        $region78: #{model_forward.1} parent=11 // pred_check_branch
          %915 = sbr.rel (%p913) target = $region80
        $region79: #{model_forward.1} parent=11 // pred_region
          _
        $region80: #{model_forward.1} parent=11 // pred_fallthru
          _
        // Predicated region
        $region81: #{model_forward.1} parent=11 // pred_check
          %p916 = pneg %p515
        $region82: #{model_forward.1} parent=11 // pred_check_branch
          %918 = sbr.rel (%p916) target = $region84
        $region83: #{model_forward.1} parent=11 // pred_region
          _
        $region84: #{model_forward.1} parent=11 // pred_fallthru
          _
        // Predicated region
        $region85: #{model_forward.1} parent=11 // pred_check
          %p919 = pneg %p536
        $region86: #{model_forward.1} parent=11 // pred_check_branch
          %921 = sbr.rel (%p919) target = $region88
        $region87: #{model_forward.1} parent=11 // pred_region
          _
        $region88: #{model_forward.1} parent=11 // pred_fallthru
          _
        // Predicated region
        $region89: #{model_forward.1} parent=11 // pred_check
          %p922 = pneg %p557
        $region90: #{model_forward.1} parent=11 // pred_check_branch
          %924 = sbr.rel (%p922) target = $region92
        $region91: #{model_forward.1} parent=11 // pred_region
          _
        $region92: #{model_forward.1} parent=11 // pred_fallthru
          _
        // Predicated region
        $region93: #{model_forward.1} parent=11 // pred_check
          %p925 = pneg %p578
        $region94: #{model_forward.1} parent=11 // pred_check_branch
          %927 = sbr.rel (%p925) target = $region96
        $region95: #{model_forward.1} parent=11 // pred_region
          _
        $region96: #{model_forward.1} parent=11 // pred_fallthru
          _
        // Predicated region
        $region97: #{model_forward.1} parent=11 // pred_check
          %p928 = pneg %p599
        $region98: #{model_forward.1} parent=11 // pred_check_branch
          %930 = sbr.rel (%p928) target = $region100
        $region99: #{model_forward.1} parent=11 // pred_region
          _
        $region100: #{model_forward.1} parent=11 // pred_fallthru
          _
        // Predicated region
        $region101: #{model_forward.1} parent=11 // pred_check
          %p931 = pneg %p620
        $region102: #{model_forward.1} parent=11 // pred_check_branch
          %933 = sbr.rel (%p931) target = $region104
        $region103: #{model_forward.1} parent=11 // pred_region
          _
        $region104: #{model_forward.1} parent=11 // pred_fallthru
          _
        // Predicated region
        $region105: #{model_forward.1} parent=11 // pred_check
          %p934 = pneg %p641
        $region106: #{model_forward.1} parent=11 // pred_check_branch
          %936 = sbr.rel (%p934) target = $region108
        $region107: #{model_forward.1} parent=11 // pred_region
          _
        $region108: #{model_forward.1} parent=11 // pred_fallthru
          _
        // Predicated region
        $region109: #{model_forward.1} parent=11 // pred_check
          %p937 = pneg %p662
        $region110: #{model_forward.1} parent=11 // pred_check_branch
          %939 = sbr.rel (%p937) target = $region112
        $region111: #{model_forward.1} parent=11 // pred_region
          _
        $region112: #{model_forward.1} parent=11 // pred_fallthru
          _
        // Predicated region
        $region113: #{model_forward.1} parent=11 // pred_check
          %p940 = pneg %p683
        $region114: #{model_forward.1} parent=11 // pred_check_branch
          %942 = sbr.rel (%p940) target = $region116
        $region115: #{model_forward.1} parent=11 // pred_region
          _
        $region116: #{model_forward.1} parent=11 // pred_fallthru
          _
        // Predicated region
        $region117: #{model_forward.1} parent=11 // pred_check
          %p943 = pneg %p704
        $region118: #{model_forward.1} parent=11 // pred_check_branch
          %945 = sbr.rel (%p943) target = $region120
        $region119: #{model_forward.1} parent=11 // pred_region
          _
        $region120: #{model_forward.1} parent=11 // pred_fallthru
          _
        // Predicated region
        $region121: #{model_forward.1} parent=11 // pred_check
          %p946 = pneg %p725
        $region122: #{model_forward.1} parent=11 // pred_check_branch
          %948 = sbr.rel (%p946) target = $region124
        $region123: #{model_forward.1} parent=11 // pred_region
          _
        $region124: #{model_forward.1} parent=11 // pred_fallthru
          _
        // Predicated region
        $region125: #{model_forward.1} parent=11 // pred_check
          %p949 = pneg %p746
        $region126: #{model_forward.1} parent=11 // pred_check_branch
          %951 = sbr.rel (%p949) target = $region128
        $region127: #{model_forward.1} parent=11 // pred_region
          _
        $region128: #{model_forward.1} parent=11 // pred_fallthru
          _
      $region12: #{model_forward.1} parent=5 // pred_fallthru
        _
      %p952 = scmp.lt.s32.totalorder %s85, 2
      // Predicated region
      $region129: #{model_forward.1} parent=5 // pred_check
        %p953 = pneg %p952
      $region130: #{model_forward.1} parent=5 // pred_check_branch
        %955 = sbr.rel (%p953) target = $region132
      $region131: #{model_forward.1} parent=5 // pred_region
        // Predicated region
        $region133: #{model_forward.1} parent=131 // pred_check
          %p956 = pneg %p105
        $region134: #{model_forward.1} parent=131 // pred_check_branch
          %958 = sbr.rel (%p956) target = $region136
        $region135: #{model_forward.1} parent=131 // pred_region
          %p959 = scmp.lt.s32.totalorder %s85, 1
          %s960 = scalar_select %p959, %s85, 1
          %s961 = smul.addr %s960, 2
          %s962 = smul.addr %s961, 8
          %s963 = scalar_lea.vmem %s1, %s962
        $region136: #{model_forward.1} parent=131 // pred_fallthru
          _
        // Predicated region
        $region137: #{model_forward.1} parent=131 // pred_check
          %p964 = pneg %p131
        $region138: #{model_forward.1} parent=131 // pred_check_branch
          %966 = sbr.rel (%p964) target = $region140
        $region139: #{model_forward.1} parent=131 // pred_region
          %p967 = scmp.lt.s32.totalorder %s85, 1
          %s968 = scalar_select %p967, %s85, 1
          %s969 = smul.addr %s968, 2
          %s970 = smul.addr %s969, 8
          %s971 = scalar_lea.vmem %s3, %s970
        $region140: #{model_forward.1} parent=131 // pred_fallthru
          _
      $region132: #{model_forward.1} parent=5 // pred_fallthru
        _
      %p972 = scmp.le.s32.totalorder 1, %s85
      %p973 = scmp.lt.s32.totalorder %s85, 3
      %p974 = pnand %p972, %p973
      %p975 = pneg %p974
      // Predicated region
      $region141: #{model_forward.1} parent=5 // pred_check
        _
      $region142: #{model_forward.1} parent=5 // pred_check_branch
        %977 = sbr.rel (%p974) target = $region144
      $region143: #{model_forward.1} parent=5 // pred_region
        %s978 = ssub.s32 %s85, 1
        %p979 = scmp.lt.s32.totalorder %s90, 1
        %s980 = scalar_select %p979, %s90, 1
        %s981 = smul.addr %s980, 2
        %s982 = smul.addr %s981, 8
        %s983 = scalar_lea.vmem %s1, %s982
        %p984 = pneg %p111
        %p985 = pneg %p108
        %p986 = scmp.lt.s32.totalorder %s90, 1
        %s987 = scalar_select %p986, %s90, 1
        %s988 = smul.addr %s987, 2
        %s989 = smul.addr %s988, 8
        %s990 = scalar_lea.vmem %s3, %s989
        %p991 = pneg %p137
        %p992 = pneg %p134
        %p993 = pneg %p158
        %p994 = pneg %p155
        %p995 = pneg %p179
        %p996 = pneg %p176
        %p997 = pneg %p200
        %p998 = pneg %p197
        %p999 = pneg %p221
        %p1000 = pneg %p218
        %p1001 = pneg %p242
        %p1002 = pneg %p239
        %p1003 = pneg %p263
        %p1004 = pneg %p260
        %p1005 = pneg %p284
        %p1006 = pneg %p281
        %p1007 = pneg %p305
        %p1008 = pneg %p302
        %p1009 = pneg %p326
        %p1010 = pneg %p323
        %p1011 = pneg %p347
        %p1012 = pneg %p344
        %p1013 = pneg %p368
        %p1014 = pneg %p365
        %p1015 = pneg %p389
        %p1016 = pneg %p386
        %p1017 = pneg %p410
        %p1018 = pneg %p407
        %p1019 = pneg %p431
        %p1020 = pneg %p428
        %p1021 = pneg %p452
        %p1022 = pneg %p449
        %p1023 = pneg %p473
        %p1024 = pneg %p470
        %p1025 = pneg %p494
        %p1026 = pneg %p491
        %p1027 = pneg %p515
        %p1028 = pneg %p512
        %p1029 = pneg %p536
        %p1030 = pneg %p533
        %p1031 = pneg %p557
        %p1032 = pneg %p554
        %p1033 = pneg %p578
        %p1034 = pneg %p575
        %p1035 = pneg %p599
        %p1036 = pneg %p596
        %p1037 = pneg %p620
        %p1038 = pneg %p617
        %p1039 = pneg %p641
        %p1040 = pneg %p638
        %p1041 = pneg %p662
        %p1042 = pneg %p659
        %p1043 = pneg %p683
        %p1044 = pneg %p680
        %p1045 = pneg %p704
        %p1046 = pneg %p701
        %p1047 = pneg %p725
        %p1048 = pneg %p722
        %p1049 = pneg %p746
        %p1050 = pneg %p743
        %p1051 = pneg %p772
        %p1052 = pneg %p769
        %s1053 = sand.u32 %s759, 1
        %s1054 = scalar_lea.sflag [#allocation5], %s1053
        %s1055 = sand.u32 %s759, 1
        %s1056 = smul.addr %s1055, 16
        %s1057 = scalar_lea.vmem [#allocation4], %s1056
        %p1058 = pneg %p798
        %p1059 = pneg %p795
        %s1060 = sand.u32 %s90, 1
        %s1061 = scalar_lea.sflag [#allocation7], %s1060
        %s1062 = sand.u32 %s785, 1
        %s1063 = smul.addr %s1062, 8
        %s1064 = scalar_lea.vmem [#allocation6], %s1063
        %p1065 = pneg %p824
        %p1066 = pneg %p821
        %s1067 = sand.u32 %s90, 1
        %s1068 = scalar_lea.sflag [#allocation7], %s1067
        %s1069 = sand.u32 %s811, 1
        %s1070 = scalar_lea.vmem [#allocation8], %s1069
        %p1071 = pneg %p850
        %p1072 = pneg %p847
        %s1073 = sand.u32 %s837, 1
        %s1074 = scalar_lea.sflag [#allocation10], %s1073
        %s1075 = sand.u32 %s837, 1
        %s1076 = scalar_lea.vmem [#allocation9], %s1075
        %p1077 = scmp.lt.s32.totalorder %s90, 1
        %s1078 = scalar_select %p1077, %s90, 1
        %s1079 = smul.addr %s1078, 2
        %s1080 = smul.addr %s1079, 8
        %s1081 = scalar_lea.vmem %s1, %s1080
        %p1082 = scmp.lt.s32.totalorder %s90, 1
        %s1083 = scalar_select %p1082, %s90, 1
        %s1084 = smul.addr %s1083, 2
        %s1085 = smul.addr %s1084, 8
        %s1086 = scalar_lea.vmem %s3, %s1085
        %v1088 = vld [vmem:[%s1081] sm:$0xff]
        %v1089 = vld [vmem:[%s1081 + $0x8] sm:$0xff]
        %v1090 = vld [vmem:[%s1086] sm:$0xff]
        %v1091 = vld [vmem:[%s1086 + $0x8] sm:$0xff]
        %v1092 = vlaneseq
        %v1093 = vshrl.u32 %v1092, 7
        %v1094 = vadd.s32 %v1093, 8
        %v1095 = vlaneseq
        %v1096 = vand.u32 %v1095, 127
        %vm1097 = vcmp.eq.s32.totalorder %v1093, %v1096
        %vm1098 = vcmp.eq.s32.totalorder %v1094, %v1096
        %v1099 = vsel %vm1097, 1, 0
        %v1100 = vsel %vm1098, 1, 0
        %v1101 = vcvt.s32.f32 %v1099
        %v1102 = vcvt.s32.f32 %v1100
        %v1103 = vadd.f32 %v1090, %v1101
        %v1104 = vadd.f32 %v1091, %v1102
        %vm1105 = vcmask 130048
        %v1106 = vsel %vm1105, %v1103, 0.0
        %1107 = vadd.xlane.f32.xlu0 %v1106
        %v1108 = vpop.xlane.xlu0 %1107
        %v1109 = vsel %vm1105, %v1104, 0.0
        %1110 = vadd.xlane.f32.xlu0 %v1109
        %v1111 = vpop.xlane.xlu0 %1110
        %v1112 = vmax.f32 %v1108, 1e-06
        %v1113 = vmax.f32 %v1111, 1e-06
        %v1114 = vrcp.pop %v1112
        %v1115 = vmul.f32 %v1112, %v1114
        %v1116 = vsub.f32 1.0, %v1115
        %v1117 = vmul.f32 %v1114, %v1116
        %v1118 = vadd.f32 %v1114, %v1117
        %vm1119 = vweird.f32 %v1112
        %vm1120 = vweird.f32 %v1114
        %vm1121 = vmor %vm1119, %vm1120
        %v1122 = vsel %vm1121, %v1114, %v1118
        %v1123 = vand.u32 2147483647, %v1112
        %vm1124 = vcmp.eq.f32.partialorder %v1123, 8.507059e+37
        %v1125 = vand.u32 %v1112, 2147483648
        %v1126 = vor.u32 1.1754944e-38, %v1125
        %v1127 = vsel %vm1124, %v1126, %v1122
        %v1128 = vmul.f32 %v1103, %v1127
        %v1129 = vrcp.pop %v1113
        %v1130 = vmul.f32 %v1113, %v1129
        %v1131 = vsub.f32 1.0, %v1130
        %v1132 = vmul.f32 %v1129, %v1131
        %v1133 = vadd.f32 %v1129, %v1132
        %vm1134 = vweird.f32 %v1113
        %vm1135 = vweird.f32 %v1129
        %vm1136 = vmor %vm1134, %vm1135
        %v1137 = vsel %vm1136, %v1129, %v1133
        %v1138 = vand.u32 2147483647, %v1113
        %vm1139 = vcmp.eq.f32.partialorder %v1138, 8.507059e+37
        %v1140 = vand.u32 %v1113, 2147483648
        %v1141 = vor.u32 1.1754944e-38, %v1140
        %v1142 = vsel %vm1139, %v1141, %v1137
        %v1143 = vmul.f32 %v1104, %v1142
        %v1144 = vld [vmem:[%s5] sm:$0x7]
        %v1145 = vpack.c.bf16 %v1089, %v1088
        %v1146 = vld [vmem:[%s7] sm:$0x1]
        %v1148 = vperm.slane %v1146, 0
        %vm1150 = vcmask 48128
        %v1152 = vsel %vm1150, %v1145, 0
        %vm1154 = vcmask 1042432
        %v1156 = vsel %vm1154, %v1144, 0
        %1158 = vmatpush.bf16.msra.mxu0 0
        %1159 = vmatpush.bf16.msra.mxu0 0
        %1160 = vmatpush.bf16.msra.mxu0 0
        %1161 = vmatpush.bf16.msra.mxu0 0
        %1162 = vmatpush.bf16.msra.mxu0 0
        %1163 = vmatpush.bf16.msra.mxu0 0
        %1164 = vmatpush.bf16.msra.mxu0 0
        %1165 = vmatpush.bf16.msra.mxu0 %v1156
        %1166 = vmatmul.bf16.gmra.mxu0 %v1152
        %v1167 = vpop.f32.mrf.mxu0
        %v1168 = vadd.f32 %v1148, %v1167
        %v1169 = vpop.f32.mrf.mxu0
        %v1170 = vadd.f32 %v1148, %v1169
        %1171 = vdwg.mxu0
        %v1172 = vpack.c.bf16 %v1143, %v1128
        %v1173 = vpack.c.bf16 %v1170, %v1168
        %v1175 = vsel %vm1105, %v1172, 0
        %1177 = vmatpush.bf16.msra.mxu0 0
        %1178 = vmatpush.bf16.msra.mxu0 0
        %1179 = vmatpush.bf16.msra.mxu0 0
        %1180 = vmatpush.bf16.msra.mxu0 0
        %1181 = vmatpush.bf16.msra.mxu0 0
        %1182 = vmatpush.bf16.msra.mxu0 0
        %1183 = vmatpush.bf16.msra.mxu0 0
        %1184 = vmatpush.bf16.msra.mxu0 %v1173
        %1185 = vmatmul.bf16.gmra.mxu0 %v1175
        %v1186 = vpop.f32.mrf.mxu0
        %v1187 = vadd.f32 0.0, %v1186
        %v1188 = vpop.f32.mrf.mxu0
        %v1189 = vadd.f32 0.0, %v1188
        %1190 = vdwg.mxu0
        %v1191 = vmax.f32 %v1187, 0.0
        %v1192 = vmax.f32 %v1189, 0.0
        %v1193 = vld [vmem:[%s9] sm:$0xf]
        %v1194 = vld [vmem:[%s9 + $0x4] sm:$0xf]
        %v1195 = vld [vmem:[%s9 + $0x8] sm:$0xf]
        %v1196 = vld [vmem:[%s9 + $0xc] sm:$0xf]
        %v1197 = vpack.c.bf16 %v1192, %v1191
        %v1198 = vld [vmem:[%s11] sm:$0x1]
        %v1200 = vperm.slane %v1198, 0
        %v1206 = vunpack.c.l.b16 %v1193
        %v1207 = vunpack.c.l.b16 %v1194
        %v1208 = vunpack.c.l.b16 %v1195
        %v1209 = vunpack.c.l.b16 %v1196
        %v1210 = vpack.c.b16 %v1207, %v1206
        %v1211 = vpack.c.b16 %v1209, %v1208
        %vm1214 = vcmask 261120
        %v1216 = vsel %vm1214, %v1197, 0
        %1218 = vmatpush.bf16.msra.mxu0 0
        %1219 = vmatpush.bf16.msra.mxu0 0
        %1220 = vmatpush.bf16.msra.mxu0 0
        %1221 = vmatpush.bf16.msra.mxu0 0
        %1222 = vmatpush.bf16.msra.mxu0 0
        %1223 = vmatpush.bf16.msra.mxu0 0
        %1224 = vmatpush.bf16.msra.mxu0 %v1211
        %1225 = vmatpush.bf16.msra.mxu0 %v1210
        %1226 = vmatmul.bf16.gmra.mxu0 %v1216
        %v1227 = vpop.f32.mrf.mxu0
        %v1228 = vadd.f32 %v1200, %v1227
        %v1229 = vpop.f32.mrf.mxu0
        %v1230 = vadd.f32 %v1200, %v1229
        %1231 = vdwg.mxu0
        %v1232 = vpack.c.bf16 %v1230, %v1228
        %1233 = vmatpush.bf16.msra.mxu0 0
        %1234 = vmatpush.bf16.msra.mxu0 0
        %1235 = vmatpush.bf16.msra.mxu0 0
        %1236 = vmatpush.bf16.msra.mxu0 0
        %1237 = vmatpush.bf16.msra.mxu0 0
        %1238 = vmatpush.bf16.msra.mxu0 0
        %1239 = vmatpush.bf16.msra.mxu0 0
        %1240 = vmatpush.bf16.msra.mxu0 %v1232
        %1241 = vmatmul.bf16.gmra.mxu0 %v1175
        %v1242 = vpop.f32.mrf.mxu0
        %v1243 = vadd.f32 0.0, %v1242
        %v1244 = vpop.f32.mrf.mxu0
        %v1245 = vadd.f32 0.0, %v1244
        %1246 = vdwg.mxu0
        %v1247 = vmax.f32 %v1243, 0.0
        %v1248 = vmax.f32 %v1245, 0.0
        %v1249 = vld [vmem:[%s13] sm:$0xf]
        %v1250 = vld [vmem:[%s13 + $0x4] sm:$0xf]
        %v1251 = vld [vmem:[%s13 + $0x8] sm:$0xf]
        %v1252 = vld [vmem:[%s13 + $0xc] sm:$0xf]
        %v1253 = vld [vmem:[%s15] sm:$0x1]
        %v1255 = vperm.slane %v1253, 0
        %1258 = vrot.lane.b32.xlu0 %v1197, 96
        %v1259 = vpop.permute.xlu0 %1258
        %v1264 = vunpack.c.l.b16 %v1249
        %v1265 = vunpack.c.l.b16 %v1250
        %v1266 = vunpack.c.l.b16 %v1251
        %v1267 = vunpack.c.l.b16 %v1252
        %v1268 = vpack.c.b16 %v1265, %v1264
        %v1269 = vpack.c.b16 %v1267, %v1266
        %v1273 = vsel %vm1214, %v1259, 0
        %1275 = vmatpush.bf16.msra.mxu0 0
        %1276 = vmatpush.bf16.msra.mxu0 0
        %1277 = vmatpush.bf16.msra.mxu0 0
        %1278 = vmatpush.bf16.msra.mxu0 0
        %1279 = vmatpush.bf16.msra.mxu0 0
        %1280 = vmatpush.bf16.msra.mxu0 0
        %1281 = vmatpush.bf16.msra.mxu0 %v1269
        %1282 = vmatpush.bf16.msra.mxu0 %v1268
        %1283 = vmatmul.bf16.gmra.mxu0 %v1273
        %v1284 = vpop.f32.mrf.mxu0
        %v1285 = vadd.f32 %v1255, %v1284
        %v1286 = vpop.f32.mrf.mxu0
        %v1287 = vadd.f32 %v1255, %v1286
        %1288 = vdwg.mxu0
        %v1289 = vpack.c.bf16 %v1287, %v1285
        %1290 = vmatpush.bf16.msra.mxu0 0
        %1291 = vmatpush.bf16.msra.mxu0 0
        %1292 = vmatpush.bf16.msra.mxu0 0
        %1293 = vmatpush.bf16.msra.mxu0 0
        %1294 = vmatpush.bf16.msra.mxu0 0
        %1295 = vmatpush.bf16.msra.mxu0 0
        %1296 = vmatpush.bf16.msra.mxu0 0
        %1297 = vmatpush.bf16.msra.mxu0 %v1289
        %1298 = vmatmul.bf16.gmra.mxu0 %v1175
        %v1299 = vpop.f32.mrf.mxu0
        %v1300 = vadd.f32 0.0, %v1299
        %v1301 = vpop.f32.mrf.mxu0
        %v1302 = vadd.f32 0.0, %v1301
        %1303 = vdwg.mxu0
        %vm1304 = vcmask 64512
        %v1305 = vsel %vm1304, %v1300, -inf
        %1306 = vmax.xlane.f32.xlu0 %v1305
        %v1307 = vpop.xlane.xlu0 %1306
        %v1308 = vsel %vm1304, %v1302, -inf
        %1309 = vmax.xlane.f32.xlu0 %v1308
        %v1310 = vpop.xlane.xlu0 %1309
        %v1311 = vsub.f32 %v1300, %v1307
        %v1312 = vsub.f32 %v1302, %v1310
        %v1313 = vmul.f32 %v1311, 1.442695
        %v1314 = vpow.pop %v1313
        %v1315 = vmul.f32 %v1312, 1.442695
        %v1316 = vpow.pop %v1315
        %v1317 = vsel %vm1304, %v1314, 0.0
        %1318 = vadd.xlane.f32.xlu0 %v1317
        %v1319 = vpop.xlane.xlu0 %1318
        %v1320 = vsel %vm1304, %v1316, 0.0
        %1321 = vadd.xlane.f32.xlu0 %v1320
        %v1322 = vpop.xlane.xlu0 %1321
        %v1323 = vrcp.pop %v1319
        %v1324 = vmul.f32 %v1319, %v1323
        %v1325 = vsub.f32 1.0, %v1324
        %v1326 = vmul.f32 %v1323, %v1325
        %v1327 = vadd.f32 %v1323, %v1326
        %vm1328 = vweird.f32 %v1319
        %vm1329 = vweird.f32 %v1323
        %vm1330 = vmor %vm1328, %vm1329
        %v1331 = vsel %vm1330, %v1323, %v1327
        %v1332 = vand.u32 2147483647, %v1319
        %vm1333 = vcmp.eq.f32.partialorder %v1332, 8.507059e+37
        %v1334 = vand.u32 %v1319, 2147483648
        %v1335 = vor.u32 1.1754944e-38, %v1334
        %v1336 = vsel %vm1333, %v1335, %v1331
        %v1337 = vmul.f32 %v1314, %v1336
        %v1338 = vrcp.pop %v1322
        %v1339 = vmul.f32 %v1322, %v1338
        %v1340 = vsub.f32 1.0, %v1339
        %v1341 = vmul.f32 %v1338, %v1340
        %v1342 = vadd.f32 %v1338, %v1341
        %vm1343 = vweird.f32 %v1322
        %vm1344 = vweird.f32 %v1338
        %vm1345 = vmor %vm1343, %vm1344
        %v1346 = vsel %vm1345, %v1338, %v1342
        %v1347 = vand.u32 2147483647, %v1322
        %vm1348 = vcmp.eq.f32.partialorder %v1347, 8.507059e+37
        %v1349 = vand.u32 %v1322, 2147483648
        %v1350 = vor.u32 1.1754944e-38, %v1349
        %v1351 = vsel %vm1348, %v1350, %v1346
        %v1352 = vmul.f32 %v1316, %v1351
        %1353 = vst.msk [vmem:[%s1057] sm:$0xff] %vm1214, %v1247
        %1354 = vst.msk [vmem:[%s1057 + $0x8] sm:$0xff] %vm1214, %v1248
        %1355 = vxpose.xlu0.b32.start [1/16] %v1337, 128
        %1356 = vxpose.xlu0.b32.cont [2/16] %v1352, 128
        %1357 = vxpose.xlu0.b32.cont [3/16] 0.0, 128
        %1358 = vxpose.xlu0.b32.cont [4/16] 0.0, 128
        %1359 = vxpose.xlu0.b32.cont [5/16] 0.0, 128
        %1360 = vxpose.xlu0.b32.cont [6/16] 0.0, 128
        %1361 = vxpose.xlu0.b32.cont [7/16] 0.0, 128
        %1362 = vxpose.xlu0.b32.cont [8/16] 0.0, 128
        %1363 = vxpose.xlu0.b32.cont [9/16] 0.0, 128
        %1364 = vxpose.xlu0.b32.cont [10/16] 0.0, 128
        %1365 = vxpose.xlu0.b32.cont [11/16] 0.0, 128
        %1366 = vxpose.xlu0.b32.cont [12/16] 0.0, 128
        %1367 = vxpose.xlu0.b32.cont [13/16] 0.0, 128
        %1368 = vxpose.xlu0.b32.cont [14/16] 0.0, 128
        %1369 = vxpose.xlu0.b32.cont [15/16] 0.0, 128
        %1370 = vxpose.xlu0.b32.end [16/16] 0.0, 128
        %v1371 = vpop.trf.xlu0
        %v1372 = vpop.trf.xlu0
        %v1373 = vpop.trf.xlu0
        %v1374 = vpop.trf.xlu0
        %v1375 = vpop.trf.xlu0
        %v1376 = vpop.trf.xlu0
        %v1377 = vpop.trf.xlu0
        %v1378 = vpop.trf.xlu0
        %v1379 = vpop.trf.xlu0
        %v1380 = vpop.trf.xlu0
        %v1381 = vpop.trf.xlu0
        %v1382 = vpop.trf.xlu0
        %v1383 = vpop.trf.xlu0
        %v1384 = vpop.trf.xlu0
        %v1385 = vpop.trf.xlu0
        %v1386 = vpop.trf.xlu0
        %v1388 = vsel %vm1105, %v1371, 0
        %1390 = vmatpush.msra.mxu0 0.0
        %1391 = vmatpush.msra.mxu0 0.0
        %1392 = vmatpush.msra.mxu0 0.0
        %1393 = vmatpush.msra.mxu0 0.0
        %1394 = vmatpush.msra.mxu0 0.0
        %1395 = vmatpush.msra.mxu0 0.0
        %1396 = vmatpush.msra.mxu0 0.0
        %1397 = vmatpush.msra.mxu0 0.0
        %1398 = vmatpush.msra.mxu0 0.0
        %1399 = vmatpush.msra.mxu0 0.0
        %1400 = vmatpush.msra.mxu0 0.0
        %1401 = vmatpush.msra.mxu0 0.0
        %1402 = vmatpush.msra.mxu0 0.0
        %1403 = vmatpush.msra.mxu0 0.0
        %1404 = vmatpush.msra.mxu0 %v1248
        %1405 = vmatpush.msra.mxu0 %v1247
        %1406 = vmatmul.f32.gmra.mxu0 %v1388
        %v1407 = vpop.f32.mrf.mxu0
        %v1408 = vadd.f32 0.0, %v1407
        %1409 = vdwg.mxu0
        %1410 = vmatpush.msra.mxu0 0.0
        %1411 = vmatpush.msra.mxu0 0.0
        %1412 = vmatpush.msra.mxu0 0.0
        %1413 = vmatpush.msra.mxu0 0.0
        %1414 = vmatpush.msra.mxu0 0.0
        %1415 = vmatpush.msra.mxu0 0.0
        %1416 = vmatpush.msra.mxu0 0.0
        %1417 = vmatpush.msra.mxu0 0.0
        %1418 = vmatpush.msra.mxu0 0.0
        %1419 = vmatpush.msra.mxu0 0.0
        %1420 = vmatpush.msra.mxu0 0.0
        %1421 = vmatpush.msra.mxu0 0.0
        %1422 = vmatpush.msra.mxu0 0.0
        %1423 = vmatpush.msra.mxu0 0.0
        %1424 = vmatpush.msra.mxu0 %v1091
        %1425 = vmatpush.msra.mxu0 %v1090
        %1426 = vmatmul.f32.gmra.mxu0 %v1388
        %v1427 = vpop.f32.mrf.mxu0
        %v1428 = vadd.f32 0.0, %v1427
        %1429 = vdwg.mxu0
        %v1431 = vsel %vm1105, %v1428, 0
        %1433 = vmatpush.msra.mxu0 0.0
        %1434 = vmatpush.msra.mxu0 0.0
        %1435 = vmatpush.msra.mxu0 0.0
        %1436 = vmatpush.msra.mxu0 0.0
        %1437 = vmatpush.msra.mxu0 0.0
        %1438 = vmatpush.msra.mxu0 0.0
        %1439 = vmatpush.msra.mxu0 0.0
        %1440 = vmatpush.msra.mxu0 0.0
        %1441 = vmatpush.msra.mxu0 0.0
        %1442 = vmatpush.msra.mxu0 0.0
        %1443 = vmatpush.msra.mxu0 0.0
        %1444 = vmatpush.msra.mxu0 0.0
        %1445 = vmatpush.msra.mxu0 0.0
        %1446 = vmatpush.msra.mxu0 0.0
        %1447 = vmatpush.msra.mxu0 %v1352
        %1448 = vmatpush.msra.mxu0 %v1337
        %1449 = vmatmul.f32.gmra.mxu0 %v1431
        %v1450 = vpop.f32.mrf.mxu0
        %v1451 = vadd.f32 0.0, %v1450
        %1452 = vdwg.mxu0
        %1453 = vst.msk [vmem:[%s1064] sm:$0xff] %vm1214, %v1408
        %vm1454 = vcmask 72704
        %1455 = vst.msk [vmem:[#allocation2] sm:$0xff] %vm1454, 0.0
        %vm1456 = vcmask 65536
        %1457 = vst.msk [vmem:[#allocation2 + $0x8] sm:$0x1] %vm1456, 0.0
        %vm1458 = vcmp.gt.f32.partialorder %v1451, 0.0
        %v1459 = vsel %vm1458, 0.0, -1e+09
        %1460 = vst.msk [vmem:[#allocation2] sm:$0xff] %vm1304, %v1459
        %v1461 = vld [vmem:[#allocation2] sm:$0xff]
        %v1462 = vld [vmem:[#allocation2 + $0x8] sm:$0x1]
        %v1463 = vld [vmem:[%s17] sm:$0x1]
        %v1464 = vld [vmem:[%s19] sm:$0xf]
        %v1465 = vld [vmem:[%s19 + $0x4] sm:$0xf]
        %v1466 = vld [vmem:[%s19 + $0x8] sm:$0xf]
        %v1467 = vld [vmem:[%s19 + $0xc] sm:$0xf]
        %v1468 = vpack.c.bf16 %v1463, %v1408
        %v1469 = vld [vmem:[%s21] sm:$0x1]
        %v1471 = vperm.slane %v1469, 0
        %v1477 = vunpack.c.l.b16 %v1464
        %v1478 = vunpack.c.l.b16 %v1465
        %v1479 = vunpack.c.l.b16 %v1466
        %v1480 = vunpack.c.l.b16 %v1467
        %v1481 = vpack.c.b16 %v1478, %v1477
        %v1482 = vpack.c.b16 %v1480, %v1479
        %v1486 = vsel %vm1214, %v1468, 0
        %1488 = vmatpush.bf16.msra.mxu0 0
        %1489 = vmatpush.bf16.msra.mxu0 0
        %1490 = vmatpush.bf16.msra.mxu0 0
        %1491 = vmatpush.bf16.msra.mxu0 0
        %1492 = vmatpush.bf16.msra.mxu0 0
        %1493 = vmatpush.bf16.msra.mxu0 0
        %1494 = vmatpush.bf16.msra.mxu0 %v1482
        %1495 = vmatpush.bf16.msra.mxu0 %v1481
        %1496 = vmatmul.bf16.gmra.mxu0 %v1486
        %v1497 = vpop.f32.mrf.mxu0
        %v1498 = vadd.f32 %v1471, %v1497
        %v1499 = vpop.f32.mrf.mxu0
        %v1500 = vadd.f32 %v1471, %v1499
        %1501 = vdwg.mxu0
        %v1502 = vld [vmem:[%s23] sm:$0xf]
        %v1503 = vld [vmem:[%s23 + $0x4] sm:$0xf]
        %v1504 = vld [vmem:[%s23 + $0x8] sm:$0xf]
        %v1505 = vld [vmem:[%s23 + $0xc] sm:$0xf]
        %v1506 = vld [vmem:[%s25] sm:$0x1]
        %v1508 = vperm.slane %v1506, 0
        %v1514 = vunpack.c.l.b16 %v1502
        %v1515 = vunpack.c.l.b16 %v1503
        %v1516 = vunpack.c.l.b16 %v1504
        %v1517 = vunpack.c.l.b16 %v1505
        %v1518 = vpack.c.b16 %v1515, %v1514
        %v1519 = vpack.c.b16 %v1517, %v1516
        %1522 = vmatpush.bf16.msra.mxu0 0
        %1523 = vmatpush.bf16.msra.mxu0 0
        %1524 = vmatpush.bf16.msra.mxu0 0
        %1525 = vmatpush.bf16.msra.mxu0 0
        %1526 = vmatpush.bf16.msra.mxu0 0
        %1527 = vmatpush.bf16.msra.mxu0 0
        %1528 = vmatpush.bf16.msra.mxu0 %v1519
        %1529 = vmatpush.bf16.msra.mxu0 %v1518
        %1530 = vmatmul.bf16.gmra.mxu0 %v1486
        %v1531 = vpop.f32.mrf.mxu0
        %v1532 = vadd.f32 %v1508, %v1531
        %v1533 = vpop.f32.mrf.mxu0
        %v1534 = vadd.f32 %v1508, %v1533
        %1535 = vdwg.mxu0
        %v1536 = vld [vmem:[%s27] sm:$0xf]
        %v1537 = vld [vmem:[%s27 + $0x4] sm:$0xf]
        %v1538 = vld [vmem:[%s27 + $0x8] sm:$0xf]
        %v1539 = vld [vmem:[%s27 + $0xc] sm:$0xf]
        %v1540 = vld [vmem:[%s29] sm:$0x1]
        %v1542 = vperm.slane %v1540, 0
        %v1548 = vunpack.c.l.b16 %v1536
        %v1549 = vunpack.c.l.b16 %v1537
        %v1550 = vunpack.c.l.b16 %v1538
        %v1551 = vunpack.c.l.b16 %v1539
        %v1552 = vpack.c.b16 %v1549, %v1548
        %v1553 = vpack.c.b16 %v1551, %v1550
        %1556 = vmatpush.bf16.msra.mxu0 0
        %1557 = vmatpush.bf16.msra.mxu0 0
        %1558 = vmatpush.bf16.msra.mxu0 0
        %1559 = vmatpush.bf16.msra.mxu0 0
        %1560 = vmatpush.bf16.msra.mxu0 0
        %1561 = vmatpush.bf16.msra.mxu0 0
        %1562 = vmatpush.bf16.msra.mxu0 %v1553
        %1563 = vmatpush.bf16.msra.mxu0 %v1552
        %1564 = vmatmul.bf16.gmra.mxu0 %v1486
        %v1565 = vpop.f32.mrf.mxu0
        %v1566 = vadd.f32 %v1542, %v1565
        %v1567 = vpop.f32.mrf.mxu0
        %v1568 = vadd.f32 %v1542, %v1567
        %1569 = vdwg.mxu0
        %v1570 = vpack.c.bf16 %v1500, %v1498
        %v1571 = vpack.c.bf16 %v1534, %v1532
        %v1573 = vsel %vm1304, %v1570, 0
        %v1576 = vsel %vm1304, %v1571, 0
        %1578 = vmatpush.bf16.xpose.msra.mxu0 0
        %1579 = vmatpush.bf16.xpose.msra.mxu0 0
        %1580 = vmatpush.bf16.xpose.msra.mxu0 0
        %1581 = vmatpush.bf16.xpose.msra.mxu0 0
        %1582 = vmatpush.bf16.xpose.msra.mxu0 0
        %1583 = vmatpush.bf16.xpose.msra.mxu0 0
        %1584 = vmatpush.bf16.xpose.msra.mxu0 0
        %1585 = vmatpush.bf16.xpose.msra.mxu0 %v1576
        %1586 = vmatmul.bf16.gmra.mxu0 %v1573
        %v1587 = vpop.f32.mrf.mxu0
        %v1588 = vadd.f32 0.0, %v1587
        %v1589 = vpop.f32.mrf.mxu0
        %v1590 = vadd.f32 0.0, %v1589
        %1591 = vdwg.mxu0
        %v1592 = vmul.f32 %v1588, 0.35355338
        %v1593 = vmul.f32 %v1590, 0.35355338
        %v1594 = vadd.f32 %v1592, %v1461
        %v1595 = vadd.f32 %v1593, %v1462
        %v1596 = vsel %vm1454, %v1594, -inf
        %1597 = vmax.xlane.f32.xlu0 %v1596
        %v1598 = vpop.xlane.xlu0 %1597
        %v1599 = vsel %vm1456, %v1595, -inf
        %1600 = vmax.xlane.f32.xlu0 %v1599
        %v1601 = vpop.xlane.xlu0 %1600
        %v1602 = vsub.f32 %v1594, %v1598
        %v1603 = vsub.f32 %v1595, %v1601
        %v1604 = vmul.f32 %v1602, 1.442695
        %v1605 = vpow.pop %v1604
        %v1606 = vmul.f32 %v1603, 1.442695
        %v1607 = vpow.pop %v1606
        %v1608 = vsel %vm1454, %v1605, 0.0
        %1609 = vadd.xlane.f32.xlu0 %v1608
        %v1610 = vpop.xlane.xlu0 %1609
        %v1611 = vsel %vm1456, %v1607, 0.0
        %1612 = vadd.xlane.f32.xlu0 %v1611
        %v1613 = vpop.xlane.xlu0 %1612
        %v1614 = vrcp.pop %v1610
        %v1615 = vmul.f32 %v1610, %v1614
        %v1616 = vsub.f32 1.0, %v1615
        %v1617 = vmul.f32 %v1614, %v1616
        %v1618 = vadd.f32 %v1614, %v1617
        %vm1619 = vweird.f32 %v1610
        %vm1620 = vweird.f32 %v1614
        %vm1621 = vmor %vm1619, %vm1620
        %v1622 = vsel %vm1621, %v1614, %v1618
        %v1623 = vand.u32 2147483647, %v1610
        %vm1624 = vcmp.eq.f32.partialorder %v1623, 8.507059e+37
        %v1625 = vand.u32 %v1610, 2147483648
        %v1626 = vor.u32 1.1754944e-38, %v1625
        %v1627 = vsel %vm1624, %v1626, %v1622
        %v1628 = vmul.f32 %v1605, %v1627
        %v1629 = vrcp.pop %v1613
        %v1630 = vmul.f32 %v1613, %v1629
        %v1631 = vsub.f32 1.0, %v1630
        %v1632 = vmul.f32 %v1629, %v1631
        %v1633 = vadd.f32 %v1629, %v1632
        %vm1634 = vweird.f32 %v1613
        %vm1635 = vweird.f32 %v1629
        %vm1636 = vmor %vm1634, %vm1635
        %v1637 = vsel %vm1636, %v1629, %v1633
        %v1638 = vand.u32 2147483647, %v1613
        %vm1639 = vcmp.eq.f32.partialorder %v1638, 8.507059e+37
        %v1640 = vand.u32 %v1613, 2147483648
        %v1641 = vor.u32 1.1754944e-38, %v1640
        %v1642 = vsel %vm1639, %v1641, %v1637
        %v1643 = vmul.f32 %v1607, %v1642
        %v1644 = vpack.c.bf16 %v1643, %v1628
        %v1645 = vpack.c.bf16 %v1568, %v1566
        %v1647 = vsel %vm1454, %v1644, 0
        %vm1649 = vcmask 1043456
        %vm1650 = vcmask 1044480
        %v1651 = vsel %vm1649, 4294967295, 65535
        %v1652 = vsel %vm1650, %v1651, 0
        %v1654 = vand.u32 %v1645, %v1652
        %1656 = vmatpush.bf16.msra.mxu0 0
        %1657 = vmatpush.bf16.msra.mxu0 0
        %1658 = vmatpush.bf16.msra.mxu0 0
        %1659 = vmatpush.bf16.msra.mxu0 0
        %1660 = vmatpush.bf16.msra.mxu0 0
        %1661 = vmatpush.bf16.msra.mxu0 0
        %1662 = vmatpush.bf16.msra.mxu0 0
        %1663 = vmatpush.bf16.msra.mxu0 %v1654
        %1664 = vmatmul.bf16.gmra.mxu0 %v1647
        %v1665 = vpop.f32.mrf.mxu0
        %v1666 = vadd.f32 0.0, %v1665
        %v1667 = vpop.f32.mrf.mxu0
        %v1668 = vadd.f32 0.0, %v1667
        %1669 = vdwg.mxu0
        %1670 = vst.msk [vmem:[#allocation3] sm:$0xff] %vm1304, %v1666
        %vm1671 = vcmask 57344
        %1672 = vst.msk [vmem:[#allocation3 + $0x8] sm:$0x1] %vm1671, %v1668
        %s1673 = scalar_lea.vmem %s19, 16
        %v1674 = vld [vmem:[%s1673] sm:$0xf]
        %v1675 = vld [vmem:[%s1673 + $0x4] sm:$0xf]
        %v1676 = vld [vmem:[%s1673 + $0x8] sm:$0xf]
        %v1677 = vld [vmem:[%s1673 + $0xc] sm:$0xf]
        %s1678 = scalar_lea.vmem %s21, 1
        %v1679 = vld [vmem:[%s1678] sm:$0x1]
        %v1681 = vperm.slane %v1679, 0
        %v1687 = vunpack.c.l.b16 %v1674
        %v1688 = vunpack.c.l.b16 %v1675
        %v1689 = vunpack.c.l.b16 %v1676
        %v1690 = vunpack.c.l.b16 %v1677
        %v1691 = vpack.c.b16 %v1688, %v1687
        %v1692 = vpack.c.b16 %v1690, %v1689
        %1695 = vmatpush.bf16.msra.mxu0 0
        %1696 = vmatpush.bf16.msra.mxu0 0
        %1697 = vmatpush.bf16.msra.mxu0 0
        %1698 = vmatpush.bf16.msra.mxu0 0
        %1699 = vmatpush.bf16.msra.mxu0 0
        %1700 = vmatpush.bf16.msra.mxu0 0
        %1701 = vmatpush.bf16.msra.mxu0 %v1692
        %1702 = vmatpush.bf16.msra.mxu0 %v1691
        %1703 = vmatmul.bf16.gmra.mxu0 %v1486
        %v1704 = vpop.f32.mrf.mxu0
        %v1705 = vadd.f32 %v1681, %v1704
        %v1706 = vpop.f32.mrf.mxu0
        %v1707 = vadd.f32 %v1681, %v1706
        %1708 = vdwg.mxu0
        %s1709 = scalar_lea.vmem %s23, 16
        %v1710 = vld [vmem:[%s1709] sm:$0xf]
        %v1711 = vld [vmem:[%s1709 + $0x4] sm:$0xf]
        %v1712 = vld [vmem:[%s1709 + $0x8] sm:$0xf]
        %v1713 = vld [vmem:[%s1709 + $0xc] sm:$0xf]
        %s1714 = scalar_lea.vmem %s25, 1
        %v1715 = vld [vmem:[%s1714] sm:$0x1]
        %v1717 = vperm.slane %v1715, 0
        %v1723 = vunpack.c.l.b16 %v1710
        %v1724 = vunpack.c.l.b16 %v1711
        %v1725 = vunpack.c.l.b16 %v1712
        %v1726 = vunpack.c.l.b16 %v1713
        %v1727 = vpack.c.b16 %v1724, %v1723
        %v1728 = vpack.c.b16 %v1726, %v1725
        %1731 = vmatpush.bf16.msra.mxu0 0
        %1732 = vmatpush.bf16.msra.mxu0 0
        %1733 = vmatpush.bf16.msra.mxu0 0
        %1734 = vmatpush.bf16.msra.mxu0 0
        %1735 = vmatpush.bf16.msra.mxu0 0
        %1736 = vmatpush.bf16.msra.mxu0 0
        %1737 = vmatpush.bf16.msra.mxu0 %v1728
        %1738 = vmatpush.bf16.msra.mxu0 %v1727
        %1739 = vmatmul.bf16.gmra.mxu0 %v1486
        %v1740 = vpop.f32.mrf.mxu0
        %v1741 = vadd.f32 %v1717, %v1740
        %v1742 = vpop.f32.mrf.mxu0
        %v1743 = vadd.f32 %v1717, %v1742
        %1744 = vdwg.mxu0
        %s1745 = scalar_lea.vmem %s27, 16
        %v1746 = vld [vmem:[%s1745] sm:$0xf]
        %v1747 = vld [vmem:[%s1745 + $0x4] sm:$0xf]
        %v1748 = vld [vmem:[%s1745 + $0x8] sm:$0xf]
        %v1749 = vld [vmem:[%s1745 + $0xc] sm:$0xf]
        %s1750 = scalar_lea.vmem %s29, 1
        %v1751 = vld [vmem:[%s1750] sm:$0x1]
        %v1753 = vperm.slane %v1751, 0
        %v1759 = vunpack.c.l.b16 %v1746
        %v1760 = vunpack.c.l.b16 %v1747
        %v1761 = vunpack.c.l.b16 %v1748
        %v1762 = vunpack.c.l.b16 %v1749
        %v1763 = vpack.c.b16 %v1760, %v1759
        %v1764 = vpack.c.b16 %v1762, %v1761
        %1767 = vmatpush.bf16.msra.mxu0 0
        %1768 = vmatpush.bf16.msra.mxu0 0
        %1769 = vmatpush.bf16.msra.mxu0 0
        %1770 = vmatpush.bf16.msra.mxu0 0
        %1771 = vmatpush.bf16.msra.mxu0 0
        %1772 = vmatpush.bf16.msra.mxu0 0
        %1773 = vmatpush.bf16.msra.mxu0 %v1764
        %1774 = vmatpush.bf16.msra.mxu0 %v1763
        %1775 = vmatmul.bf16.gmra.mxu0 %v1486
        %v1776 = vpop.f32.mrf.mxu0
        %v1777 = vadd.f32 %v1753, %v1776
        %v1778 = vpop.f32.mrf.mxu0
        %v1779 = vadd.f32 %v1753, %v1778
        %1780 = vdwg.mxu0
        %v1781 = vpack.c.bf16 %v1707, %v1705
        %v1782 = vpack.c.bf16 %v1743, %v1741
        %v1784 = vsel %vm1304, %v1781, 0
        %v1787 = vsel %vm1304, %v1782, 0
        %1789 = vmatpush.bf16.xpose.msra.mxu0 0
        %1790 = vmatpush.bf16.xpose.msra.mxu0 0
        %1791 = vmatpush.bf16.xpose.msra.mxu0 0
        %1792 = vmatpush.bf16.xpose.msra.mxu0 0
        %1793 = vmatpush.bf16.xpose.msra.mxu0 0
        %1794 = vmatpush.bf16.xpose.msra.mxu0 0
        %1795 = vmatpush.bf16.xpose.msra.mxu0 0
        %1796 = vmatpush.bf16.xpose.msra.mxu0 %v1787
        %1797 = vmatmul.bf16.gmra.mxu0 %v1784
        %v1798 = vpop.f32.mrf.mxu0
        %v1799 = vadd.f32 0.0, %v1798
        %v1800 = vpop.f32.mrf.mxu0
        %v1801 = vadd.f32 0.0, %v1800
        %1802 = vdwg.mxu0
        %v1803 = vmul.f32 %v1799, 0.35355338
        %v1804 = vmul.f32 %v1801, 0.35355338
        %v1805 = vadd.f32 %v1803, %v1461
        %v1806 = vadd.f32 %v1804, %v1462
        %v1807 = vsel %vm1454, %v1805, -inf
        %1808 = vmax.xlane.f32.xlu0 %v1807
        %v1809 = vpop.xlane.xlu0 %1808
        %v1810 = vsel %vm1456, %v1806, -inf
        %1811 = vmax.xlane.f32.xlu0 %v1810
        %v1812 = vpop.xlane.xlu0 %1811
        %v1813 = vsub.f32 %v1805, %v1809
        %v1814 = vsub.f32 %v1806, %v1812
        %v1815 = vmul.f32 %v1813, 1.442695
        %v1816 = vpow.pop %v1815
        %v1817 = vmul.f32 %v1814, 1.442695
        %v1818 = vpow.pop %v1817
        %v1819 = vsel %vm1454, %v1816, 0.0
        %1820 = vadd.xlane.f32.xlu0 %v1819
        %v1821 = vpop.xlane.xlu0 %1820
        %v1822 = vsel %vm1456, %v1818, 0.0
        %1823 = vadd.xlane.f32.xlu0 %v1822
        %v1824 = vpop.xlane.xlu0 %1823
        %v1825 = vrcp.pop %v1821
        %v1826 = vmul.f32 %v1821, %v1825
        %v1827 = vsub.f32 1.0, %v1826
        %v1828 = vmul.f32 %v1825, %v1827
        %v1829 = vadd.f32 %v1825, %v1828
        %vm1830 = vweird.f32 %v1821
        %vm1831 = vweird.f32 %v1825
        %vm1832 = vmor %vm1830, %vm1831
        %v1833 = vsel %vm1832, %v1825, %v1829
        %v1834 = vand.u32 2147483647, %v1821
        %vm1835 = vcmp.eq.f32.partialorder %v1834, 8.507059e+37
        %v1836 = vand.u32 %v1821, 2147483648
        %v1837 = vor.u32 1.1754944e-38, %v1836
        %v1838 = vsel %vm1835, %v1837, %v1833
        %v1839 = vmul.f32 %v1816, %v1838
        %v1840 = vrcp.pop %v1824
        %v1841 = vmul.f32 %v1824, %v1840
        %v1842 = vsub.f32 1.0, %v1841
        %v1843 = vmul.f32 %v1840, %v1842
        %v1844 = vadd.f32 %v1840, %v1843
        %vm1845 = vweird.f32 %v1824
        %vm1846 = vweird.f32 %v1840
        %vm1847 = vmor %vm1845, %vm1846
        %v1848 = vsel %vm1847, %v1840, %v1844
        %v1849 = vand.u32 2147483647, %v1824
        %vm1850 = vcmp.eq.f32.partialorder %v1849, 8.507059e+37
        %v1851 = vand.u32 %v1824, 2147483648
        %v1852 = vor.u32 1.1754944e-38, %v1851
        %v1853 = vsel %vm1850, %v1852, %v1848
        %v1854 = vmul.f32 %v1818, %v1853
        %v1855 = vpack.c.bf16 %v1854, %v1839
        %v1856 = vpack.c.bf16 %v1779, %v1777
        %v1858 = vsel %vm1454, %v1855, 0
        %v1861 = vand.u32 %v1856, %v1652
        %1863 = vmatpush.bf16.msra.mxu0 0
        %1864 = vmatpush.bf16.msra.mxu0 0
        %1865 = vmatpush.bf16.msra.mxu0 0
        %1866 = vmatpush.bf16.msra.mxu0 0
        %1867 = vmatpush.bf16.msra.mxu0 0
        %1868 = vmatpush.bf16.msra.mxu0 0
        %1869 = vmatpush.bf16.msra.mxu0 0
        %1870 = vmatpush.bf16.msra.mxu0 %v1861
        %1871 = vmatmul.bf16.gmra.mxu0 %v1858
        %v1872 = vpop.f32.mrf.mxu0
        %v1873 = vadd.f32 0.0, %v1872
        %v1874 = vpop.f32.mrf.mxu0
        %v1875 = vadd.f32 0.0, %v1874
        %1876 = vdwg.mxu0
        %1879 = vrot.lane.b32.xlu0 %v1873, 8
        %v1880 = vpop.permute.xlu0 %1879
        %1881 = vrot.lane.b32.xlu0 %v1875, 8
        %v1882 = vpop.permute.xlu0 %1881
        %vm1885 = vcmask 130112
        %1886 = vst.msk [vmem:[#allocation3] sm:$0xff] %vm1885, %v1880
        %vm1887 = vcmask 122944
        %1888 = vst.msk [vmem:[#allocation3 + $0x8] sm:$0x1] %vm1887, %v1882
        %s1889 = scalar_lea.vmem %s19, 32
        %v1890 = vld [vmem:[%s1889] sm:$0xf]
        %v1891 = vld [vmem:[%s1889 + $0x4] sm:$0xf]
        %v1892 = vld [vmem:[%s1889 + $0x8] sm:$0xf]
        %v1893 = vld [vmem:[%s1889 + $0xc] sm:$0xf]
        %s1894 = scalar_lea.vmem %s21, 2
        %v1895 = vld [vmem:[%s1894] sm:$0x1]
        %v1897 = vperm.slane %v1895, 0
        %v1903 = vunpack.c.l.b16 %v1890
        %v1904 = vunpack.c.l.b16 %v1891
        %v1905 = vunpack.c.l.b16 %v1892
        %v1906 = vunpack.c.l.b16 %v1893
        %v1907 = vpack.c.b16 %v1904, %v1903
        %v1908 = vpack.c.b16 %v1906, %v1905
        %1911 = vmatpush.bf16.msra.mxu0 0
        %1912 = vmatpush.bf16.msra.mxu0 0
        %1913 = vmatpush.bf16.msra.mxu0 0
        %1914 = vmatpush.bf16.msra.mxu0 0
        %1915 = vmatpush.bf16.msra.mxu0 0
        %1916 = vmatpush.bf16.msra.mxu0 0
        %1917 = vmatpush.bf16.msra.mxu0 %v1908
        %1918 = vmatpush.bf16.msra.mxu0 %v1907
        %1919 = vmatmul.bf16.gmra.mxu0 %v1486
        %v1920 = vpop.f32.mrf.mxu0
        %v1921 = vadd.f32 %v1897, %v1920
        %v1922 = vpop.f32.mrf.mxu0
        %v1923 = vadd.f32 %v1897, %v1922
        %1924 = vdwg.mxu0
        %s1925 = scalar_lea.vmem %s23, 32
        %v1926 = vld [vmem:[%s1925] sm:$0xf]
        %v1927 = vld [vmem:[%s1925 + $0x4] sm:$0xf]
        %v1928 = vld [vmem:[%s1925 + $0x8] sm:$0xf]
        %v1929 = vld [vmem:[%s1925 + $0xc] sm:$0xf]
        %s1930 = scalar_lea.vmem %s25, 2
        %v1931 = vld [vmem:[%s1930] sm:$0x1]
        %v1933 = vperm.slane %v1931, 0
        %v1939 = vunpack.c.l.b16 %v1926
        %v1940 = vunpack.c.l.b16 %v1927
        %v1941 = vunpack.c.l.b16 %v1928
        %v1942 = vunpack.c.l.b16 %v1929
        %v1943 = vpack.c.b16 %v1940, %v1939
        %v1944 = vpack.c.b16 %v1942, %v1941
        %1947 = vmatpush.bf16.msra.mxu0 0
        %1948 = vmatpush.bf16.msra.mxu0 0
        %1949 = vmatpush.bf16.msra.mxu0 0
        %1950 = vmatpush.bf16.msra.mxu0 0
        %1951 = vmatpush.bf16.msra.mxu0 0
        %1952 = vmatpush.bf16.msra.mxu0 0
        %1953 = vmatpush.bf16.msra.mxu0 %v1944
        %1954 = vmatpush.bf16.msra.mxu0 %v1943
        %1955 = vmatmul.bf16.gmra.mxu0 %v1486
        %v1956 = vpop.f32.mrf.mxu0
        %v1957 = vadd.f32 %v1933, %v1956
        %v1958 = vpop.f32.mrf.mxu0
        %v1959 = vadd.f32 %v1933, %v1958
        %1960 = vdwg.mxu0
        %s1961 = scalar_lea.vmem %s27, 32
        %v1962 = vld [vmem:[%s1961] sm:$0xf]
        %v1963 = vld [vmem:[%s1961 + $0x4] sm:$0xf]
        %v1964 = vld [vmem:[%s1961 + $0x8] sm:$0xf]
        %v1965 = vld [vmem:[%s1961 + $0xc] sm:$0xf]
        %s1966 = scalar_lea.vmem %s29, 2
        %v1967 = vld [vmem:[%s1966] sm:$0x1]
        %v1969 = vperm.slane %v1967, 0
        %v1975 = vunpack.c.l.b16 %v1962
        %v1976 = vunpack.c.l.b16 %v1963
        %v1977 = vunpack.c.l.b16 %v1964
        %v1978 = vunpack.c.l.b16 %v1965
        %v1979 = vpack.c.b16 %v1976, %v1975
        %v1980 = vpack.c.b16 %v1978, %v1977
        %1983 = vmatpush.bf16.msra.mxu0 0
        %1984 = vmatpush.bf16.msra.mxu0 0
        %1985 = vmatpush.bf16.msra.mxu0 0
        %1986 = vmatpush.bf16.msra.mxu0 0
        %1987 = vmatpush.bf16.msra.mxu0 0
        %1988 = vmatpush.bf16.msra.mxu0 0
        %1989 = vmatpush.bf16.msra.mxu0 %v1980
        %1990 = vmatpush.bf16.msra.mxu0 %v1979
        %1991 = vmatmul.bf16.gmra.mxu0 %v1486
        %v1992 = vpop.f32.mrf.mxu0
        %v1993 = vadd.f32 %v1969, %v1992
        %v1994 = vpop.f32.mrf.mxu0
        %v1995 = vadd.f32 %v1969, %v1994
        %1996 = vdwg.mxu0
        %v1997 = vpack.c.bf16 %v1923, %v1921
        %v1998 = vpack.c.bf16 %v1959, %v1957
        %v2000 = vsel %vm1304, %v1997, 0
        %v2003 = vsel %vm1304, %v1998, 0
        %2005 = vmatpush.bf16.xpose.msra.mxu0 0
        %2006 = vmatpush.bf16.xpose.msra.mxu0 0
        %2007 = vmatpush.bf16.xpose.msra.mxu0 0
        %2008 = vmatpush.bf16.xpose.msra.mxu0 0
        %2009 = vmatpush.bf16.xpose.msra.mxu0 0
        %2010 = vmatpush.bf16.xpose.msra.mxu0 0
        %2011 = vmatpush.bf16.xpose.msra.mxu0 0
        %2012 = vmatpush.bf16.xpose.msra.mxu0 %v2003
        %2013 = vmatmul.bf16.gmra.mxu0 %v2000
        %v2014 = vpop.f32.mrf.mxu0
        %v2015 = vadd.f32 0.0, %v2014
        %v2016 = vpop.f32.mrf.mxu0
        %v2017 = vadd.f32 0.0, %v2016
        %2018 = vdwg.mxu0
        %v2019 = vmul.f32 %v2015, 0.35355338
        %v2020 = vmul.f32 %v2017, 0.35355338
        %v2021 = vadd.f32 %v2019, %v1461
        %v2022 = vadd.f32 %v2020, %v1462
        %v2023 = vsel %vm1454, %v2021, -inf
        %2024 = vmax.xlane.f32.xlu0 %v2023
        %v2025 = vpop.xlane.xlu0 %2024
        %v2026 = vsel %vm1456, %v2022, -inf
        %2027 = vmax.xlane.f32.xlu0 %v2026
        %v2028 = vpop.xlane.xlu0 %2027
        %v2029 = vsub.f32 %v2021, %v2025
        %v2030 = vsub.f32 %v2022, %v2028
        %v2031 = vmul.f32 %v2029, 1.442695
        %v2032 = vpow.pop %v2031
        %v2033 = vmul.f32 %v2030, 1.442695
        %v2034 = vpow.pop %v2033
        %v2035 = vsel %vm1454, %v2032, 0.0
        %2036 = vadd.xlane.f32.xlu0 %v2035
        %v2037 = vpop.xlane.xlu0 %2036
        %v2038 = vsel %vm1456, %v2034, 0.0
        %2039 = vadd.xlane.f32.xlu0 %v2038
        %v2040 = vpop.xlane.xlu0 %2039
        %v2041 = vrcp.pop %v2037
        %v2042 = vmul.f32 %v2037, %v2041
        %v2043 = vsub.f32 1.0, %v2042
        %v2044 = vmul.f32 %v2041, %v2043
        %v2045 = vadd.f32 %v2041, %v2044
        %vm2046 = vweird.f32 %v2037
        %vm2047 = vweird.f32 %v2041
        %vm2048 = vmor %vm2046, %vm2047
        %v2049 = vsel %vm2048, %v2041, %v2045
        %v2050 = vand.u32 2147483647, %v2037
        %vm2051 = vcmp.eq.f32.partialorder %v2050, 8.507059e+37
        %v2052 = vand.u32 %v2037, 2147483648
        %v2053 = vor.u32 1.1754944e-38, %v2052
        %v2054 = vsel %vm2051, %v2053, %v2049
        %v2055 = vmul.f32 %v2032, %v2054
        %v2056 = vrcp.pop %v2040
        %v2057 = vmul.f32 %v2040, %v2056
        %v2058 = vsub.f32 1.0, %v2057
        %v2059 = vmul.f32 %v2056, %v2058
        %v2060 = vadd.f32 %v2056, %v2059
        %vm2061 = vweird.f32 %v2040
        %vm2062 = vweird.f32 %v2056
        %vm2063 = vmor %vm2061, %vm2062
        %v2064 = vsel %vm2063, %v2056, %v2060
        %v2065 = vand.u32 2147483647, %v2040
        %vm2066 = vcmp.eq.f32.partialorder %v2065, 8.507059e+37
        %v2067 = vand.u32 %v2040, 2147483648
        %v2068 = vor.u32 1.1754944e-38, %v2067
        %v2069 = vsel %vm2066, %v2068, %v2064
        %v2070 = vmul.f32 %v2034, %v2069
        %v2071 = vpack.c.bf16 %v2070, %v2055
        %v2072 = vpack.c.bf16 %v1995, %v1993
        %v2074 = vsel %vm1454, %v2071, 0
        %v2077 = vand.u32 %v2072, %v1652
        %2079 = vmatpush.bf16.msra.mxu0 0
        %2080 = vmatpush.bf16.msra.mxu0 0
        %2081 = vmatpush.bf16.msra.mxu0 0
        %2082 = vmatpush.bf16.msra.mxu0 0
        %2083 = vmatpush.bf16.msra.mxu0 0
        %2084 = vmatpush.bf16.msra.mxu0 0
        %2085 = vmatpush.bf16.msra.mxu0 0
        %2086 = vmatpush.bf16.msra.mxu0 %v2077
        %2087 = vmatmul.bf16.gmra.mxu0 %v2074
        %v2088 = vpop.f32.mrf.mxu0
        %v2089 = vadd.f32 0.0, %v2088
        %v2090 = vpop.f32.mrf.mxu0
        %v2091 = vadd.f32 0.0, %v2090
        %2092 = vdwg.mxu0
        %2095 = vrot.lane.b32.xlu0 %v2089, 16
        %v2096 = vpop.permute.xlu0 %2095
        %2097 = vrot.lane.b32.xlu0 %v2091, 16
        %v2098 = vpop.permute.xlu0 %2097
        %vm2101 = vcmask 195712
        %2102 = vst.msk [vmem:[#allocation3] sm:$0xff] %vm2101, %v2096
        %vm2103 = vcmask 188544
        %2104 = vst.msk [vmem:[#allocation3 + $0x8] sm:$0x1] %vm2103, %v2098
        %s2105 = scalar_lea.vmem %s19, 48
        %v2106 = vld [vmem:[%s2105] sm:$0xf]
        %v2107 = vld [vmem:[%s2105 + $0x4] sm:$0xf]
        %v2108 = vld [vmem:[%s2105 + $0x8] sm:$0xf]
        %v2109 = vld [vmem:[%s2105 + $0xc] sm:$0xf]
        %s2110 = scalar_lea.vmem %s21, 3
        %v2111 = vld [vmem:[%s2110] sm:$0x1]
        %v2113 = vperm.slane %v2111, 0
        %v2119 = vunpack.c.l.b16 %v2106
        %v2120 = vunpack.c.l.b16 %v2107
        %v2121 = vunpack.c.l.b16 %v2108
        %v2122 = vunpack.c.l.b16 %v2109
        %v2123 = vpack.c.b16 %v2120, %v2119
        %v2124 = vpack.c.b16 %v2122, %v2121
        %2127 = vmatpush.bf16.msra.mxu0 0
        %2128 = vmatpush.bf16.msra.mxu0 0
        %2129 = vmatpush.bf16.msra.mxu0 0
        %2130 = vmatpush.bf16.msra.mxu0 0
        %2131 = vmatpush.bf16.msra.mxu0 0
        %2132 = vmatpush.bf16.msra.mxu0 0
        %2133 = vmatpush.bf16.msra.mxu0 %v2124
        %2134 = vmatpush.bf16.msra.mxu0 %v2123
        %2135 = vmatmul.bf16.gmra.mxu0 %v1486
        %v2136 = vpop.f32.mrf.mxu0
        %v2137 = vadd.f32 %v2113, %v2136
        %v2138 = vpop.f32.mrf.mxu0
        %v2139 = vadd.f32 %v2113, %v2138
        %2140 = vdwg.mxu0
        %s2141 = scalar_lea.vmem %s23, 48
        %v2142 = vld [vmem:[%s2141] sm:$0xf]
        %v2143 = vld [vmem:[%s2141 + $0x4] sm:$0xf]
        %v2144 = vld [vmem:[%s2141 + $0x8] sm:$0xf]
        %v2145 = vld [vmem:[%s2141 + $0xc] sm:$0xf]
        %s2146 = scalar_lea.vmem %s25, 3
        %v2147 = vld [vmem:[%s2146] sm:$0x1]
        %v2149 = vperm.slane %v2147, 0
        %v2155 = vunpack.c.l.b16 %v2142
        %v2156 = vunpack.c.l.b16 %v2143
        %v2157 = vunpack.c.l.b16 %v2144
        %v2158 = vunpack.c.l.b16 %v2145
        %v2159 = vpack.c.b16 %v2156, %v2155
        %v2160 = vpack.c.b16 %v2158, %v2157
        %2163 = vmatpush.bf16.msra.mxu0 0
        %2164 = vmatpush.bf16.msra.mxu0 0
        %2165 = vmatpush.bf16.msra.mxu0 0
        %2166 = vmatpush.bf16.msra.mxu0 0
        %2167 = vmatpush.bf16.msra.mxu0 0
        %2168 = vmatpush.bf16.msra.mxu0 0
        %2169 = vmatpush.bf16.msra.mxu0 %v2160
        %2170 = vmatpush.bf16.msra.mxu0 %v2159
        %2171 = vmatmul.bf16.gmra.mxu0 %v1486
        %v2172 = vpop.f32.mrf.mxu0
        %v2173 = vadd.f32 %v2149, %v2172
        %v2174 = vpop.f32.mrf.mxu0
        %v2175 = vadd.f32 %v2149, %v2174
        %2176 = vdwg.mxu0
        %s2177 = scalar_lea.vmem %s27, 48
        %v2178 = vld [vmem:[%s2177] sm:$0xf]
        %v2179 = vld [vmem:[%s2177 + $0x4] sm:$0xf]
        %v2180 = vld [vmem:[%s2177 + $0x8] sm:$0xf]
        %v2181 = vld [vmem:[%s2177 + $0xc] sm:$0xf]
        %s2182 = scalar_lea.vmem %s29, 3
        %v2183 = vld [vmem:[%s2182] sm:$0x1]
        %v2185 = vperm.slane %v2183, 0
        %v2191 = vunpack.c.l.b16 %v2178
        %v2192 = vunpack.c.l.b16 %v2179
        %v2193 = vunpack.c.l.b16 %v2180
        %v2194 = vunpack.c.l.b16 %v2181
        %v2195 = vpack.c.b16 %v2192, %v2191
        %v2196 = vpack.c.b16 %v2194, %v2193
        %2199 = vmatpush.bf16.msra.mxu0 0
        %2200 = vmatpush.bf16.msra.mxu0 0
        %2201 = vmatpush.bf16.msra.mxu0 0
        %2202 = vmatpush.bf16.msra.mxu0 0
        %2203 = vmatpush.bf16.msra.mxu0 0
        %2204 = vmatpush.bf16.msra.mxu0 0
        %2205 = vmatpush.bf16.msra.mxu0 %v2196
        %2206 = vmatpush.bf16.msra.mxu0 %v2195
        %2207 = vmatmul.bf16.gmra.mxu0 %v1486
        %v2208 = vpop.f32.mrf.mxu0
        %v2209 = vadd.f32 %v2185, %v2208
        %v2210 = vpop.f32.mrf.mxu0
        %v2211 = vadd.f32 %v2185, %v2210
        %2212 = vdwg.mxu0
        %v2213 = vpack.c.bf16 %v2139, %v2137
        %v2214 = vpack.c.bf16 %v2175, %v2173
        %v2216 = vsel %vm1304, %v2213, 0
        %v2219 = vsel %vm1304, %v2214, 0
        %2221 = vmatpush.bf16.xpose.msra.mxu0 0
        %2222 = vmatpush.bf16.xpose.msra.mxu0 0
        %2223 = vmatpush.bf16.xpose.msra.mxu0 0
        %2224 = vmatpush.bf16.xpose.msra.mxu0 0
        %2225 = vmatpush.bf16.xpose.msra.mxu0 0
        %2226 = vmatpush.bf16.xpose.msra.mxu0 0
        %2227 = vmatpush.bf16.xpose.msra.mxu0 0
        %2228 = vmatpush.bf16.xpose.msra.mxu0 %v2219
        %2229 = vmatmul.bf16.gmra.mxu0 %v2216
        %v2230 = vpop.f32.mrf.mxu0
        %v2231 = vadd.f32 0.0, %v2230
        %v2232 = vpop.f32.mrf.mxu0
        %v2233 = vadd.f32 0.0, %v2232
        %2234 = vdwg.mxu0
        %v2235 = vmul.f32 %v2231, 0.35355338
        %v2236 = vmul.f32 %v2233, 0.35355338
        %v2237 = vadd.f32 %v2235, %v1461
        %v2238 = vadd.f32 %v2236, %v1462
        %v2239 = vsel %vm1454, %v2237, -inf
        %2240 = vmax.xlane.f32.xlu0 %v2239
        %v2241 = vpop.xlane.xlu0 %2240
        %v2242 = vsel %vm1456, %v2238, -inf
        %2243 = vmax.xlane.f32.xlu0 %v2242
        %v2244 = vpop.xlane.xlu0 %2243
        %v2245 = vsub.f32 %v2237, %v2241
        %v2246 = vsub.f32 %v2238, %v2244
        %v2247 = vmul.f32 %v2245, 1.442695
        %v2248 = vpow.pop %v2247
        %v2249 = vmul.f32 %v2246, 1.442695
        %v2250 = vpow.pop %v2249
        %v2251 = vsel %vm1454, %v2248, 0.0
        %2252 = vadd.xlane.f32.xlu0 %v2251
        %v2253 = vpop.xlane.xlu0 %2252
        %v2254 = vsel %vm1456, %v2250, 0.0
        %2255 = vadd.xlane.f32.xlu0 %v2254
        %v2256 = vpop.xlane.xlu0 %2255
        %v2257 = vrcp.pop %v2253
        %v2258 = vmul.f32 %v2253, %v2257
        %v2259 = vsub.f32 1.0, %v2258
        %v2260 = vmul.f32 %v2257, %v2259
        %v2261 = vadd.f32 %v2257, %v2260
        %vm2262 = vweird.f32 %v2253
        %vm2263 = vweird.f32 %v2257
        %vm2264 = vmor %vm2262, %vm2263
        %v2265 = vsel %vm2264, %v2257, %v2261
        %v2266 = vand.u32 2147483647, %v2253
        %vm2267 = vcmp.eq.f32.partialorder %v2266, 8.507059e+37
        %v2268 = vand.u32 %v2253, 2147483648
        %v2269 = vor.u32 1.1754944e-38, %v2268
        %v2270 = vsel %vm2267, %v2269, %v2265
        %v2271 = vmul.f32 %v2248, %v2270
        %v2272 = vrcp.pop %v2256
        %v2273 = vmul.f32 %v2256, %v2272
        %v2274 = vsub.f32 1.0, %v2273
        %v2275 = vmul.f32 %v2272, %v2274
        %v2276 = vadd.f32 %v2272, %v2275
        %vm2277 = vweird.f32 %v2256
        %vm2278 = vweird.f32 %v2272
        %vm2279 = vmor %vm2277, %vm2278
        %v2280 = vsel %vm2279, %v2272, %v2276
        %v2281 = vand.u32 2147483647, %v2256
        %vm2282 = vcmp.eq.f32.partialorder %v2281, 8.507059e+37
        %v2283 = vand.u32 %v2256, 2147483648
        %v2284 = vor.u32 1.1754944e-38, %v2283
        %v2285 = vsel %vm2282, %v2284, %v2280
        %v2286 = vmul.f32 %v2250, %v2285
        %v2287 = vpack.c.bf16 %v2286, %v2271
        %v2288 = vpack.c.bf16 %v2211, %v2209
        %v2290 = vsel %vm1454, %v2287, 0
        %v2293 = vand.u32 %v2288, %v1652
        %2295 = vmatpush.bf16.msra.mxu0 0
        %2296 = vmatpush.bf16.msra.mxu0 0
        %2297 = vmatpush.bf16.msra.mxu0 0
        %2298 = vmatpush.bf16.msra.mxu0 0
        %2299 = vmatpush.bf16.msra.mxu0 0
        %2300 = vmatpush.bf16.msra.mxu0 0
        %2301 = vmatpush.bf16.msra.mxu0 0
        %2302 = vmatpush.bf16.msra.mxu0 %v2293
        %2303 = vmatmul.bf16.gmra.mxu0 %v2290
        %v2304 = vpop.f32.mrf.mxu0
        %v2305 = vadd.f32 0.0, %v2304
        %v2306 = vpop.f32.mrf.mxu0
        %v2307 = vadd.f32 0.0, %v2306
        %2308 = vdwg.mxu0
        %2311 = vrot.lane.b32.xlu0 %v2305, 24
        %v2312 = vpop.permute.xlu0 %2311
        %2313 = vrot.lane.b32.xlu0 %v2307, 24
        %v2314 = vpop.permute.xlu0 %2313
        %vm2317 = vcmask 261312
        %2318 = vst.msk [vmem:[#allocation3] sm:$0xff] %vm2317, %v2312
        %vm2319 = vcmask 254144
        %2320 = vst.msk [vmem:[#allocation3 + $0x8] sm:$0x1] %vm2319, %v2314
        %v2321 = vld [vmem:[#allocation3] sm:$0xff]
        %v2322 = vld [vmem:[#allocation3 + $0x8] sm:$0x1]
        %v2323 = vld [vmem:[%s31] sm:$0xf]
        %v2324 = vld [vmem:[%s31 + $0x4] sm:$0xf]
        %v2325 = vld [vmem:[%s31 + $0x8] sm:$0xf]
        %v2326 = vld [vmem:[%s31 + $0xc] sm:$0xf]
        %v2327 = vpack.c.bf16 %v2322, %v2321
        %v2328 = vld [vmem:[%s33] sm:$0x1]
        %v2330 = vperm.slane %v2328, 0
        %v2336 = vunpack.c.l.b16 %v2323
        %v2337 = vunpack.c.l.b16 %v2324
        %v2338 = vunpack.c.l.b16 %v2325
        %v2339 = vunpack.c.l.b16 %v2326
        %v2340 = vpack.c.b16 %v2337, %v2336
        %v2341 = vpack.c.b16 %v2339, %v2338
        %v2345 = vsel %vm1214, %v2327, 0
        %2347 = vmatpush.bf16.msra.mxu0 0
        %2348 = vmatpush.bf16.msra.mxu0 0
        %2349 = vmatpush.bf16.msra.mxu0 0
        %2350 = vmatpush.bf16.msra.mxu0 0
        %2351 = vmatpush.bf16.msra.mxu0 0
        %2352 = vmatpush.bf16.msra.mxu0 0
        %2353 = vmatpush.bf16.msra.mxu0 %v2341
        %2354 = vmatpush.bf16.msra.mxu0 %v2340
        %2355 = vmatmul.bf16.gmra.mxu0 %v2345
        %v2356 = vpop.f32.mrf.mxu0
        %v2357 = vadd.f32 %v2330, %v2356
        %v2358 = vpop.f32.mrf.mxu0
        %v2359 = vadd.f32 %v2330, %v2358
        %2360 = vdwg.mxu0
        %v2361 = vadd.f32 %v1408, %v2357
        %v2362 = vadd.f32 %v1463, %v2359
        %v2363 = vld [vmem:[%s35] sm:$0x1]
        %v2364 = vld [vmem:[%s37] sm:$0x1]
        %v2365 = vsel %vm1214, %v2361, 0.0
        %2366 = vadd.xlane.f32.xlu0 %v2365
        %v2367 = vpop.xlane.xlu0 %2366
        %vm2368 = vcmask 253952
        %v2369 = vsel %vm2368, %v2362, 0.0
        %2370 = vadd.xlane.f32.xlu0 %v2369
        %v2371 = vpop.xlane.xlu0 %2370
        %v2372 = vrcp.pop 32.0
        %v2373 = vmul.f32 32.0, %v2372
        %v2374 = vsub.f32 1.0, %v2373
        %v2375 = vmul.f32 %v2372, %v2374
        %v2376 = vadd.f32 %v2372, %v2375
        %vm2377 = vweird.f32 %v2372
        %v2378 = vsel %vm2377, %v2372, %v2376
        %v2379 = vmul.f32 %v2367, %v2378
        %v2380 = vmul.f32 %v2371, %v2378
        %v2381 = vsub.f32 %v2361, %v2379
        %v2382 = vsub.f32 %v2362, %v2380
        %v2383 = vmul.f32 %v2381, %v2381
        %v2384 = vmul.f32 %v2382, %v2382
        %v2385 = vsel %vm1214, %v2383, 0.0
        %2386 = vadd.xlane.f32.xlu0 %v2385
        %v2387 = vpop.xlane.xlu0 %2386
        %v2388 = vsel %vm2368, %v2384, 0.0
        %2389 = vadd.xlane.f32.xlu0 %v2388
        %v2390 = vpop.xlane.xlu0 %2389
        %v2391 = vmul.f32 %v2387, %v2378
        %v2392 = vmul.f32 %v2390, %v2378
        %v2393 = vadd.f32 %v2391, 1e-05
        %v2394 = vadd.f32 %v2392, 1e-05
        %v2395 = vrsqrt.pop %v2393
        %v2396 = vmul.f32 %v2395, %v2393
        %v2397 = vmul.f32 %v2396, %v2395
        %v2398 = vmul.f32 0.5, %v2397
        %v2399 = vsub.f32 1.5, %v2398
        %v2400 = vmul.f32 %v2395, %v2399
        %vm2401 = vweird.f32 %v2393
        %vm2402 = vweird.f32 %v2395
        %vm2403 = vmor %vm2401, %vm2402
        %v2404 = vsel %vm2403, %v2395, %v2400
        %v2405 = vrsqrt.pop %v2394
        %v2406 = vmul.f32 %v2405, %v2394
        %v2407 = vmul.f32 %v2406, %v2405
        %v2408 = vmul.f32 0.5, %v2407
        %v2409 = vsub.f32 1.5, %v2408
        %v2410 = vmul.f32 %v2405, %v2409
        %vm2411 = vweird.f32 %v2394
        %vm2412 = vweird.f32 %v2405
        %vm2413 = vmor %vm2411, %vm2412
        %v2414 = vsel %vm2413, %v2405, %v2410
        %v2415 = vmul.f32 %v2381, %v2404
        %v2416 = vmul.f32 %v2382, %v2414
        %v2418 = vperm.slane %v2363, 0
        %v2420 = vmul.f32 %v2415, %v2418
        %v2421 = vmul.f32 %v2416, %v2418
        %v2423 = vperm.slane %v2364, 0
        %v2425 = vadd.f32 %v2420, %v2423
        %v2426 = vadd.f32 %v2421, %v2423
        %v2427 = vld [vmem:[%s39] sm:$0xf]
        %v2428 = vld [vmem:[%s39 + $0x4] sm:$0xf]
        %v2429 = vld [vmem:[%s39 + $0x8] sm:$0xf]
        %v2430 = vld [vmem:[%s39 + $0xc] sm:$0xf]
        %v2431 = vpack.c.bf16 %v2426, %v2425
        %v2432 = vld [vmem:[%s41] sm:$0x1]
        %v2434 = vperm.slane %v2432, 0
        %v2440 = vunpack.c.l.b16 %v2427
        %v2441 = vunpack.c.l.b16 %v2428
        %v2442 = vunpack.c.l.b16 %v2429
        %v2443 = vunpack.c.l.b16 %v2430
        %v2444 = vpack.c.b16 %v2441, %v2440
        %v2445 = vpack.c.b16 %v2443, %v2442
        %v2449 = vsel %vm1214, %v2431, 0
        %2451 = vmatpush.bf16.msra.mxu0 0
        %2452 = vmatpush.bf16.msra.mxu0 0
        %2453 = vmatpush.bf16.msra.mxu0 0
        %2454 = vmatpush.bf16.msra.mxu0 0
        %2455 = vmatpush.bf16.msra.mxu0 0
        %2456 = vmatpush.bf16.msra.mxu0 0
        %2457 = vmatpush.bf16.msra.mxu0 %v2445
        %2458 = vmatpush.bf16.msra.mxu0 %v2444
        %2459 = vmatmul.bf16.gmra.mxu0 %v2449
        %v2460 = vpop.f32.mrf.mxu0
        %v2461 = vadd.f32 %v2434, %v2460
        %v2462 = vpop.f32.mrf.mxu0
        %v2463 = vadd.f32 %v2434, %v2462
        %2464 = vdwg.mxu0
        %v2465 = vmax.f32 %v2461, 0.0
        %v2466 = vmax.f32 %v2463, 0.0
        %v2467 = vld [vmem:[%s43] sm:$0xf]
        %v2468 = vld [vmem:[%s43 + $0x4] sm:$0xf]
        %v2469 = vld [vmem:[%s43 + $0x8] sm:$0xf]
        %v2470 = vld [vmem:[%s43 + $0xc] sm:$0xf]
        %v2471 = vld [vmem:[%s43 + $0x10] sm:$0xf]
        %v2472 = vld [vmem:[%s43 + $0x14] sm:$0xf]
        %v2473 = vld [vmem:[%s43 + $0x18] sm:$0xf]
        %v2474 = vld [vmem:[%s43 + $0x1c] sm:$0xf]
        %v2475 = vpack.c.bf16 %v2466, %v2465
        %v2476 = vld [vmem:[%s45] sm:$0x1]
        %v2478 = vperm.slane %v2476, 0
        %v2488 = vunpack.c.l.b16 %v2467
        %v2489 = vunpack.c.l.b16 %v2468
        %v2490 = vunpack.c.l.b16 %v2469
        %v2491 = vunpack.c.l.b16 %v2470
        %v2492 = vunpack.c.l.b16 %v2471
        %v2493 = vunpack.c.l.b16 %v2472
        %v2494 = vunpack.c.l.b16 %v2473
        %v2495 = vunpack.c.l.b16 %v2474
        %v2496 = vpack.c.b16 %v2489, %v2488
        %v2497 = vpack.c.b16 %v2491, %v2490
        %v2498 = vpack.c.b16 %v2493, %v2492
        %v2499 = vpack.c.b16 %v2495, %v2494
        %vm2504 = vcmask 523264
        %v2506 = vsel %vm2504, %v2475, 0
        %2508 = vmatpush.bf16.msra.mxu0 0
        %2509 = vmatpush.bf16.msra.mxu0 0
        %2510 = vmatpush.bf16.msra.mxu0 0
        %2511 = vmatpush.bf16.msra.mxu0 0
        %2512 = vmatpush.bf16.msra.mxu0 %v2499
        %2513 = vmatpush.bf16.msra.mxu0 %v2498
        %2514 = vmatpush.bf16.msra.mxu0 %v2497
        %2515 = vmatpush.bf16.msra.mxu0 %v2496
        %2516 = vmatmul.bf16.gmra.mxu0 %v2506
        %v2517 = vpop.f32.mrf.mxu0
        %v2518 = vadd.f32 %v2478, %v2517
        %v2519 = vpop.f32.mrf.mxu0
        %v2520 = vadd.f32 %v2478, %v2519
        %2521 = vdwg.mxu0
        %v2522 = vadd.f32 %v2425, %v2518
        %v2523 = vadd.f32 %v2426, %v2520
        %v2524 = vld [vmem:[%s47] sm:$0x1]
        %v2525 = vld [vmem:[%s49] sm:$0x1]
        %v2526 = vsel %vm1214, %v2522, 0.0
        %2527 = vadd.xlane.f32.xlu0 %v2526
        %v2528 = vpop.xlane.xlu0 %2527
        %v2529 = vsel %vm2368, %v2523, 0.0
        %2530 = vadd.xlane.f32.xlu0 %v2529
        %v2531 = vpop.xlane.xlu0 %2530
        %v2532 = vmul.f32 %v2528, %v2378
        %v2533 = vmul.f32 %v2531, %v2378
        %v2534 = vsub.f32 %v2522, %v2532
        %v2535 = vsub.f32 %v2523, %v2533
        %v2536 = vmul.f32 %v2534, %v2534
        %v2537 = vmul.f32 %v2535, %v2535
        %v2538 = vsel %vm1214, %v2536, 0.0
        %2539 = vadd.xlane.f32.xlu0 %v2538
        %v2540 = vpop.xlane.xlu0 %2539
        %v2541 = vsel %vm2368, %v2537, 0.0
        %2542 = vadd.xlane.f32.xlu0 %v2541
        %v2543 = vpop.xlane.xlu0 %2542
        %v2544 = vmul.f32 %v2540, %v2378
        %v2545 = vmul.f32 %v2543, %v2378
        %v2546 = vadd.f32 %v2544, 1e-05
        %v2547 = vadd.f32 %v2545, 1e-05
        %v2548 = vrsqrt.pop %v2546
        %v2549 = vmul.f32 %v2548, %v2546
        %v2550 = vmul.f32 %v2549, %v2548
        %v2551 = vmul.f32 0.5, %v2550
        %v2552 = vsub.f32 1.5, %v2551
        %v2553 = vmul.f32 %v2548, %v2552
        %vm2554 = vweird.f32 %v2546
        %vm2555 = vweird.f32 %v2548
        %vm2556 = vmor %vm2554, %vm2555
        %v2557 = vsel %vm2556, %v2548, %v2553
        %v2558 = vrsqrt.pop %v2547
        %v2559 = vmul.f32 %v2558, %v2547
        %v2560 = vmul.f32 %v2559, %v2558
        %v2561 = vmul.f32 0.5, %v2560
        %v2562 = vsub.f32 1.5, %v2561
        %v2563 = vmul.f32 %v2558, %v2562
        %vm2564 = vweird.f32 %v2547
        %vm2565 = vweird.f32 %v2558
        %vm2566 = vmor %vm2564, %vm2565
        %v2567 = vsel %vm2566, %v2558, %v2563
        %v2568 = vmul.f32 %v2534, %v2557
        %v2569 = vmul.f32 %v2535, %v2567
        %v2571 = vperm.slane %v2524, 0
        %v2573 = vmul.f32 %v2568, %v2571
        %v2574 = vmul.f32 %v2569, %v2571
        %v2576 = vperm.slane %v2525, 0
        %v2578 = vadd.f32 %v2573, %v2576
        %v2579 = vadd.f32 %v2574, %v2576
        %s2580 = scalar_lea.vmem %s19, 64
        %v2581 = vld [vmem:[%s2580] sm:$0xf]
        %v2582 = vld [vmem:[%s2580 + $0x4] sm:$0xf]
        %v2583 = vld [vmem:[%s2580 + $0x8] sm:$0xf]
        %v2584 = vld [vmem:[%s2580 + $0xc] sm:$0xf]
        %v2585 = vpack.c.bf16 %v2579, %v2578
        %s2586 = scalar_lea.vmem %s21, 4
        %v2587 = vld [vmem:[%s2586] sm:$0x1]
        %v2589 = vperm.slane %v2587, 0
        %v2595 = vunpack.c.l.b16 %v2581
        %v2596 = vunpack.c.l.b16 %v2582
        %v2597 = vunpack.c.l.b16 %v2583
        %v2598 = vunpack.c.l.b16 %v2584
        %v2599 = vpack.c.b16 %v2596, %v2595
        %v2600 = vpack.c.b16 %v2598, %v2597
        %v2604 = vsel %vm1214, %v2585, 0
        %2606 = vmatpush.bf16.msra.mxu0 0
        %2607 = vmatpush.bf16.msra.mxu0 0
        %2608 = vmatpush.bf16.msra.mxu0 0
        %2609 = vmatpush.bf16.msra.mxu0 0
        %2610 = vmatpush.bf16.msra.mxu0 0
        %2611 = vmatpush.bf16.msra.mxu0 0
        %2612 = vmatpush.bf16.msra.mxu0 %v2600
        %2613 = vmatpush.bf16.msra.mxu0 %v2599
        %2614 = vmatmul.bf16.gmra.mxu0 %v2604
        %v2615 = vpop.f32.mrf.mxu0
        %v2616 = vadd.f32 %v2589, %v2615
        %v2617 = vpop.f32.mrf.mxu0
        %v2618 = vadd.f32 %v2589, %v2617
        %2619 = vdwg.mxu0
        %s2620 = scalar_lea.vmem %s23, 64
        %v2621 = vld [vmem:[%s2620] sm:$0xf]
        %v2622 = vld [vmem:[%s2620 + $0x4] sm:$0xf]
        %v2623 = vld [vmem:[%s2620 + $0x8] sm:$0xf]
        %v2624 = vld [vmem:[%s2620 + $0xc] sm:$0xf]
        %s2625 = scalar_lea.vmem %s25, 4
        %v2626 = vld [vmem:[%s2625] sm:$0x1]
        %v2628 = vperm.slane %v2626, 0
        %v2634 = vunpack.c.l.b16 %v2621
        %v2635 = vunpack.c.l.b16 %v2622
        %v2636 = vunpack.c.l.b16 %v2623
        %v2637 = vunpack.c.l.b16 %v2624
        %v2638 = vpack.c.b16 %v2635, %v2634
        %v2639 = vpack.c.b16 %v2637, %v2636
        %2642 = vmatpush.bf16.msra.mxu0 0
        %2643 = vmatpush.bf16.msra.mxu0 0
        %2644 = vmatpush.bf16.msra.mxu0 0
        %2645 = vmatpush.bf16.msra.mxu0 0
        %2646 = vmatpush.bf16.msra.mxu0 0
        %2647 = vmatpush.bf16.msra.mxu0 0
        %2648 = vmatpush.bf16.msra.mxu0 %v2639
        %2649 = vmatpush.bf16.msra.mxu0 %v2638
        %2650 = vmatmul.bf16.gmra.mxu0 %v2604
        %v2651 = vpop.f32.mrf.mxu0
        %v2652 = vadd.f32 %v2628, %v2651
        %v2653 = vpop.f32.mrf.mxu0
        %v2654 = vadd.f32 %v2628, %v2653
        %2655 = vdwg.mxu0
        %s2656 = scalar_lea.vmem %s27, 64
        %v2657 = vld [vmem:[%s2656] sm:$0xf]
        %v2658 = vld [vmem:[%s2656 + $0x4] sm:$0xf]
        %v2659 = vld [vmem:[%s2656 + $0x8] sm:$0xf]
        %v2660 = vld [vmem:[%s2656 + $0xc] sm:$0xf]
        %s2661 = scalar_lea.vmem %s29, 4
        %v2662 = vld [vmem:[%s2661] sm:$0x1]
        %v2664 = vperm.slane %v2662, 0
        %v2670 = vunpack.c.l.b16 %v2657
        %v2671 = vunpack.c.l.b16 %v2658
        %v2672 = vunpack.c.l.b16 %v2659
        %v2673 = vunpack.c.l.b16 %v2660
        %v2674 = vpack.c.b16 %v2671, %v2670
        %v2675 = vpack.c.b16 %v2673, %v2672
        %2678 = vmatpush.bf16.msra.mxu0 0
        %2679 = vmatpush.bf16.msra.mxu0 0
        %2680 = vmatpush.bf16.msra.mxu0 0
        %2681 = vmatpush.bf16.msra.mxu0 0
        %2682 = vmatpush.bf16.msra.mxu0 0
        %2683 = vmatpush.bf16.msra.mxu0 0
        %2684 = vmatpush.bf16.msra.mxu0 %v2675
        %2685 = vmatpush.bf16.msra.mxu0 %v2674
        %2686 = vmatmul.bf16.gmra.mxu0 %v2604
        %v2687 = vpop.f32.mrf.mxu0
        %v2688 = vadd.f32 %v2664, %v2687
        %v2689 = vpop.f32.mrf.mxu0
        %v2690 = vadd.f32 %v2664, %v2689
        %2691 = vdwg.mxu0
        %v2692 = vpack.c.bf16 %v2618, %v2616
        %v2693 = vpack.c.bf16 %v2654, %v2652
        %v2695 = vsel %vm1304, %v2692, 0
        %v2698 = vsel %vm1304, %v2693, 0
        %2700 = vmatpush.bf16.xpose.msra.mxu0 0
        %2701 = vmatpush.bf16.xpose.msra.mxu0 0
        %2702 = vmatpush.bf16.xpose.msra.mxu0 0
        %2703 = vmatpush.bf16.xpose.msra.mxu0 0
        %2704 = vmatpush.bf16.xpose.msra.mxu0 0
        %2705 = vmatpush.bf16.xpose.msra.mxu0 0
        %2706 = vmatpush.bf16.xpose.msra.mxu0 0
        %2707 = vmatpush.bf16.xpose.msra.mxu0 %v2698
        %2708 = vmatmul.bf16.gmra.mxu0 %v2695
        %v2709 = vpop.f32.mrf.mxu0
        %v2710 = vadd.f32 0.0, %v2709
        %v2711 = vpop.f32.mrf.mxu0
        %v2712 = vadd.f32 0.0, %v2711
        %2713 = vdwg.mxu0
        %v2714 = vmul.f32 %v2710, 0.35355338
        %v2715 = vmul.f32 %v2712, 0.35355338
        %v2716 = vadd.f32 %v2714, %v1461
        %v2717 = vadd.f32 %v2715, %v1462
        %v2718 = vsel %vm1454, %v2716, -inf
        %2719 = vmax.xlane.f32.xlu0 %v2718
        %v2720 = vpop.xlane.xlu0 %2719
        %v2721 = vsel %vm1456, %v2717, -inf
        %2722 = vmax.xlane.f32.xlu0 %v2721
        %v2723 = vpop.xlane.xlu0 %2722
        %v2724 = vsub.f32 %v2716, %v2720
        %v2725 = vsub.f32 %v2717, %v2723
        %v2726 = vmul.f32 %v2724, 1.442695
        %v2727 = vpow.pop %v2726
        %v2728 = vmul.f32 %v2725, 1.442695
        %v2729 = vpow.pop %v2728
        %v2730 = vsel %vm1454, %v2727, 0.0
        %2731 = vadd.xlane.f32.xlu0 %v2730
        %v2732 = vpop.xlane.xlu0 %2731
        %v2733 = vsel %vm1456, %v2729, 0.0
        %2734 = vadd.xlane.f32.xlu0 %v2733
        %v2735 = vpop.xlane.xlu0 %2734
        %v2736 = vrcp.pop %v2732
        %v2737 = vmul.f32 %v2732, %v2736
        %v2738 = vsub.f32 1.0, %v2737
        %v2739 = vmul.f32 %v2736, %v2738
        %v2740 = vadd.f32 %v2736, %v2739
        %vm2741 = vweird.f32 %v2732
        %vm2742 = vweird.f32 %v2736
        %vm2743 = vmor %vm2741, %vm2742
        %v2744 = vsel %vm2743, %v2736, %v2740
        %v2745 = vand.u32 2147483647, %v2732
        %vm2746 = vcmp.eq.f32.partialorder %v2745, 8.507059e+37
        %v2747 = vand.u32 %v2732, 2147483648
        %v2748 = vor.u32 1.1754944e-38, %v2747
        %v2749 = vsel %vm2746, %v2748, %v2744
        %v2750 = vmul.f32 %v2727, %v2749
        %v2751 = vrcp.pop %v2735
        %v2752 = vmul.f32 %v2735, %v2751
        %v2753 = vsub.f32 1.0, %v2752
        %v2754 = vmul.f32 %v2751, %v2753
        %v2755 = vadd.f32 %v2751, %v2754
        %vm2756 = vweird.f32 %v2735
        %vm2757 = vweird.f32 %v2751
        %vm2758 = vmor %vm2756, %vm2757
        %v2759 = vsel %vm2758, %v2751, %v2755
        %v2760 = vand.u32 2147483647, %v2735
        %vm2761 = vcmp.eq.f32.partialorder %v2760, 8.507059e+37
        %v2762 = vand.u32 %v2735, 2147483648
        %v2763 = vor.u32 1.1754944e-38, %v2762
        %v2764 = vsel %vm2761, %v2763, %v2759
        %v2765 = vmul.f32 %v2729, %v2764
        %v2766 = vpack.c.bf16 %v2765, %v2750
        %v2767 = vpack.c.bf16 %v2690, %v2688
        %v2769 = vsel %vm1454, %v2766, 0
        %v2772 = vand.u32 %v2767, %v1652
        %2774 = vmatpush.bf16.msra.mxu0 0
        %2775 = vmatpush.bf16.msra.mxu0 0
        %2776 = vmatpush.bf16.msra.mxu0 0
        %2777 = vmatpush.bf16.msra.mxu0 0
        %2778 = vmatpush.bf16.msra.mxu0 0
        %2779 = vmatpush.bf16.msra.mxu0 0
        %2780 = vmatpush.bf16.msra.mxu0 0
        %2781 = vmatpush.bf16.msra.mxu0 %v2772
        %2782 = vmatmul.bf16.gmra.mxu0 %v2769
        %v2783 = vpop.f32.mrf.mxu0
        %v2784 = vadd.f32 0.0, %v2783
        %v2785 = vpop.f32.mrf.mxu0
        %v2786 = vadd.f32 0.0, %v2785
        %2787 = vdwg.mxu0
        %2788 = vst.msk [vmem:[#allocation3] sm:$0xff] %vm1304, %v2784
        %2789 = vst.msk [vmem:[#allocation3 + $0x8] sm:$0x1] %vm1671, %v2786
        %s2790 = scalar_lea.vmem %s19, 80
        %v2791 = vld [vmem:[%s2790] sm:$0xf]
        %v2792 = vld [vmem:[%s2790 + $0x4] sm:$0xf]
        %v2793 = vld [vmem:[%s2790 + $0x8] sm:$0xf]
        %v2794 = vld [vmem:[%s2790 + $0xc] sm:$0xf]
        %s2795 = scalar_lea.vmem %s21, 5
        %v2796 = vld [vmem:[%s2795] sm:$0x1]
        %v2798 = vperm.slane %v2796, 0
        %v2804 = vunpack.c.l.b16 %v2791
        %v2805 = vunpack.c.l.b16 %v2792
        %v2806 = vunpack.c.l.b16 %v2793
        %v2807 = vunpack.c.l.b16 %v2794
        %v2808 = vpack.c.b16 %v2805, %v2804
        %v2809 = vpack.c.b16 %v2807, %v2806
        %2812 = vmatpush.bf16.msra.mxu0 0
        %2813 = vmatpush.bf16.msra.mxu0 0
        %2814 = vmatpush.bf16.msra.mxu0 0
        %2815 = vmatpush.bf16.msra.mxu0 0
        %2816 = vmatpush.bf16.msra.mxu0 0
        %2817 = vmatpush.bf16.msra.mxu0 0
        %2818 = vmatpush.bf16.msra.mxu0 %v2809
        %2819 = vmatpush.bf16.msra.mxu0 %v2808
        %2820 = vmatmul.bf16.gmra.mxu0 %v2604
        %v2821 = vpop.f32.mrf.mxu0
        %v2822 = vadd.f32 %v2798, %v2821
        %v2823 = vpop.f32.mrf.mxu0
        %v2824 = vadd.f32 %v2798, %v2823
        %2825 = vdwg.mxu0
        %s2826 = scalar_lea.vmem %s23, 80
        %v2827 = vld [vmem:[%s2826] sm:$0xf]
        %v2828 = vld [vmem:[%s2826 + $0x4] sm:$0xf]
        %v2829 = vld [vmem:[%s2826 + $0x8] sm:$0xf]
        %v2830 = vld [vmem:[%s2826 + $0xc] sm:$0xf]
        %s2831 = scalar_lea.vmem %s25, 5
        %v2832 = vld [vmem:[%s2831] sm:$0x1]
        %v2834 = vperm.slane %v2832, 0
        %v2840 = vunpack.c.l.b16 %v2827
        %v2841 = vunpack.c.l.b16 %v2828
        %v2842 = vunpack.c.l.b16 %v2829
        %v2843 = vunpack.c.l.b16 %v2830
        %v2844 = vpack.c.b16 %v2841, %v2840
        %v2845 = vpack.c.b16 %v2843, %v2842
        %2848 = vmatpush.bf16.msra.mxu0 0
        %2849 = vmatpush.bf16.msra.mxu0 0
        %2850 = vmatpush.bf16.msra.mxu0 0
        %2851 = vmatpush.bf16.msra.mxu0 0
        %2852 = vmatpush.bf16.msra.mxu0 0
        %2853 = vmatpush.bf16.msra.mxu0 0
        %2854 = vmatpush.bf16.msra.mxu0 %v2845
        %2855 = vmatpush.bf16.msra.mxu0 %v2844
        %2856 = vmatmul.bf16.gmra.mxu0 %v2604
        %v2857 = vpop.f32.mrf.mxu0
        %v2858 = vadd.f32 %v2834, %v2857
        %v2859 = vpop.f32.mrf.mxu0
        %v2860 = vadd.f32 %v2834, %v2859
        %2861 = vdwg.mxu0
        %s2862 = scalar_lea.vmem %s27, 80
        %v2863 = vld [vmem:[%s2862] sm:$0xf]
        %v2864 = vld [vmem:[%s2862 + $0x4] sm:$0xf]
        %v2865 = vld [vmem:[%s2862 + $0x8] sm:$0xf]
        %v2866 = vld [vmem:[%s2862 + $0xc] sm:$0xf]
        %s2867 = scalar_lea.vmem %s29, 5
        %v2868 = vld [vmem:[%s2867] sm:$0x1]
        %v2870 = vperm.slane %v2868, 0
        %v2876 = vunpack.c.l.b16 %v2863
        %v2877 = vunpack.c.l.b16 %v2864
        %v2878 = vunpack.c.l.b16 %v2865
        %v2879 = vunpack.c.l.b16 %v2866
        %v2880 = vpack.c.b16 %v2877, %v2876
        %v2881 = vpack.c.b16 %v2879, %v2878
        %2884 = vmatpush.bf16.msra.mxu0 0
        %2885 = vmatpush.bf16.msra.mxu0 0
        %2886 = vmatpush.bf16.msra.mxu0 0
        %2887 = vmatpush.bf16.msra.mxu0 0
        %2888 = vmatpush.bf16.msra.mxu0 0
        %2889 = vmatpush.bf16.msra.mxu0 0
        %2890 = vmatpush.bf16.msra.mxu0 %v2881
        %2891 = vmatpush.bf16.msra.mxu0 %v2880
        %2892 = vmatmul.bf16.gmra.mxu0 %v2604
        %v2893 = vpop.f32.mrf.mxu0
        %v2894 = vadd.f32 %v2870, %v2893
        %v2895 = vpop.f32.mrf.mxu0
        %v2896 = vadd.f32 %v2870, %v2895
        %2897 = vdwg.mxu0
        %v2898 = vpack.c.bf16 %v2824, %v2822
        %v2899 = vpack.c.bf16 %v2860, %v2858
        %v2901 = vsel %vm1304, %v2898, 0
        %v2904 = vsel %vm1304, %v2899, 0
        %2906 = vmatpush.bf16.xpose.msra.mxu0 0
        %2907 = vmatpush.bf16.xpose.msra.mxu0 0
        %2908 = vmatpush.bf16.xpose.msra.mxu0 0
        %2909 = vmatpush.bf16.xpose.msra.mxu0 0
        %2910 = vmatpush.bf16.xpose.msra.mxu0 0
        %2911 = vmatpush.bf16.xpose.msra.mxu0 0
        %2912 = vmatpush.bf16.xpose.msra.mxu0 0
        %2913 = vmatpush.bf16.xpose.msra.mxu0 %v2904
        %2914 = vmatmul.bf16.gmra.mxu0 %v2901
        %v2915 = vpop.f32.mrf.mxu0
        %v2916 = vadd.f32 0.0, %v2915
        %v2917 = vpop.f32.mrf.mxu0
        %v2918 = vadd.f32 0.0, %v2917
        %2919 = vdwg.mxu0
        %v2920 = vmul.f32 %v2916, 0.35355338
        %v2921 = vmul.f32 %v2918, 0.35355338
        %v2922 = vadd.f32 %v2920, %v1461
        %v2923 = vadd.f32 %v2921, %v1462
        %v2924 = vsel %vm1454, %v2922, -inf
        %2925 = vmax.xlane.f32.xlu0 %v2924
        %v2926 = vpop.xlane.xlu0 %2925
        %v2927 = vsel %vm1456, %v2923, -inf
        %2928 = vmax.xlane.f32.xlu0 %v2927
        %v2929 = vpop.xlane.xlu0 %2928
        %v2930 = vsub.f32 %v2922, %v2926
        %v2931 = vsub.f32 %v2923, %v2929
        %v2932 = vmul.f32 %v2930, 1.442695
        %v2933 = vpow.pop %v2932
        %v2934 = vmul.f32 %v2931, 1.442695
        %v2935 = vpow.pop %v2934
        %v2936 = vsel %vm1454, %v2933, 0.0
        %2937 = vadd.xlane.f32.xlu0 %v2936
        %v2938 = vpop.xlane.xlu0 %2937
        %v2939 = vsel %vm1456, %v2935, 0.0
        %2940 = vadd.xlane.f32.xlu0 %v2939
        %v2941 = vpop.xlane.xlu0 %2940
        %v2942 = vrcp.pop %v2938
        %v2943 = vmul.f32 %v2938, %v2942
        %v2944 = vsub.f32 1.0, %v2943
        %v2945 = vmul.f32 %v2942, %v2944
        %v2946 = vadd.f32 %v2942, %v2945
        %vm2947 = vweird.f32 %v2938
        %vm2948 = vweird.f32 %v2942
        %vm2949 = vmor %vm2947, %vm2948
        %v2950 = vsel %vm2949, %v2942, %v2946
        %v2951 = vand.u32 2147483647, %v2938
        %vm2952 = vcmp.eq.f32.partialorder %v2951, 8.507059e+37
        %v2953 = vand.u32 %v2938, 2147483648
        %v2954 = vor.u32 1.1754944e-38, %v2953
        %v2955 = vsel %vm2952, %v2954, %v2950
        %v2956 = vmul.f32 %v2933, %v2955
        %v2957 = vrcp.pop %v2941
        %v2958 = vmul.f32 %v2941, %v2957
        %v2959 = vsub.f32 1.0, %v2958
        %v2960 = vmul.f32 %v2957, %v2959
        %v2961 = vadd.f32 %v2957, %v2960
        %vm2962 = vweird.f32 %v2941
        %vm2963 = vweird.f32 %v2957
        %vm2964 = vmor %vm2962, %vm2963
        %v2965 = vsel %vm2964, %v2957, %v2961
        %v2966 = vand.u32 2147483647, %v2941
        %vm2967 = vcmp.eq.f32.partialorder %v2966, 8.507059e+37
        %v2968 = vand.u32 %v2941, 2147483648
        %v2969 = vor.u32 1.1754944e-38, %v2968
        %v2970 = vsel %vm2967, %v2969, %v2965
        %v2971 = vmul.f32 %v2935, %v2970
        %v2972 = vpack.c.bf16 %v2971, %v2956
        %v2973 = vpack.c.bf16 %v2896, %v2894
        %v2975 = vsel %vm1454, %v2972, 0
        %v2978 = vand.u32 %v2973, %v1652
        %2980 = vmatpush.bf16.msra.mxu0 0
        %2981 = vmatpush.bf16.msra.mxu0 0
        %2982 = vmatpush.bf16.msra.mxu0 0
        %2983 = vmatpush.bf16.msra.mxu0 0
        %2984 = vmatpush.bf16.msra.mxu0 0
        %2985 = vmatpush.bf16.msra.mxu0 0
        %2986 = vmatpush.bf16.msra.mxu0 0
        %2987 = vmatpush.bf16.msra.mxu0 %v2978
        %2988 = vmatmul.bf16.gmra.mxu0 %v2975
        %v2989 = vpop.f32.mrf.mxu0
        %v2990 = vadd.f32 0.0, %v2989
        %v2991 = vpop.f32.mrf.mxu0
        %v2992 = vadd.f32 0.0, %v2991
        %2993 = vdwg.mxu0
        %2996 = vrot.lane.b32.xlu0 %v2990, 8
        %v2997 = vpop.permute.xlu0 %2996
        %2998 = vrot.lane.b32.xlu0 %v2992, 8
        %v2999 = vpop.permute.xlu0 %2998
        %3002 = vst.msk [vmem:[#allocation3] sm:$0xff] %vm1885, %v2997
        %3003 = vst.msk [vmem:[#allocation3 + $0x8] sm:$0x1] %vm1887, %v2999
        %s3004 = scalar_lea.vmem %s19, 96
        %v3005 = vld [vmem:[%s3004] sm:$0xf]
        %v3006 = vld [vmem:[%s3004 + $0x4] sm:$0xf]
        %v3007 = vld [vmem:[%s3004 + $0x8] sm:$0xf]
        %v3008 = vld [vmem:[%s3004 + $0xc] sm:$0xf]
        %s3009 = scalar_lea.vmem %s21, 6
        %v3010 = vld [vmem:[%s3009] sm:$0x1]
        %v3012 = vperm.slane %v3010, 0
        %v3018 = vunpack.c.l.b16 %v3005
        %v3019 = vunpack.c.l.b16 %v3006
        %v3020 = vunpack.c.l.b16 %v3007
        %v3021 = vunpack.c.l.b16 %v3008
        %v3022 = vpack.c.b16 %v3019, %v3018
        %v3023 = vpack.c.b16 %v3021, %v3020
        %3026 = vmatpush.bf16.msra.mxu0 0
        %3027 = vmatpush.bf16.msra.mxu0 0
        %3028 = vmatpush.bf16.msra.mxu0 0
        %3029 = vmatpush.bf16.msra.mxu0 0
        %3030 = vmatpush.bf16.msra.mxu0 0
        %3031 = vmatpush.bf16.msra.mxu0 0
        %3032 = vmatpush.bf16.msra.mxu0 %v3023
        %3033 = vmatpush.bf16.msra.mxu0 %v3022
        %3034 = vmatmul.bf16.gmra.mxu0 %v2604
        %v3035 = vpop.f32.mrf.mxu0
        %v3036 = vadd.f32 %v3012, %v3035
        %v3037 = vpop.f32.mrf.mxu0
        %v3038 = vadd.f32 %v3012, %v3037
        %3039 = vdwg.mxu0
        %s3040 = scalar_lea.vmem %s23, 96
        %v3041 = vld [vmem:[%s3040] sm:$0xf]
        %v3042 = vld [vmem:[%s3040 + $0x4] sm:$0xf]
        %v3043 = vld [vmem:[%s3040 + $0x8] sm:$0xf]
        %v3044 = vld [vmem:[%s3040 + $0xc] sm:$0xf]
        %s3045 = scalar_lea.vmem %s25, 6
        %v3046 = vld [vmem:[%s3045] sm:$0x1]
        %v3048 = vperm.slane %v3046, 0
        %v3054 = vunpack.c.l.b16 %v3041
        %v3055 = vunpack.c.l.b16 %v3042
        %v3056 = vunpack.c.l.b16 %v3043
        %v3057 = vunpack.c.l.b16 %v3044
        %v3058 = vpack.c.b16 %v3055, %v3054
        %v3059 = vpack.c.b16 %v3057, %v3056
        %3062 = vmatpush.bf16.msra.mxu0 0
        %3063 = vmatpush.bf16.msra.mxu0 0
        %3064 = vmatpush.bf16.msra.mxu0 0
        %3065 = vmatpush.bf16.msra.mxu0 0
        %3066 = vmatpush.bf16.msra.mxu0 0
        %3067 = vmatpush.bf16.msra.mxu0 0
        %3068 = vmatpush.bf16.msra.mxu0 %v3059
        %3069 = vmatpush.bf16.msra.mxu0 %v3058
        %3070 = vmatmul.bf16.gmra.mxu0 %v2604
        %v3071 = vpop.f32.mrf.mxu0
        %v3072 = vadd.f32 %v3048, %v3071
        %v3073 = vpop.f32.mrf.mxu0
        %v3074 = vadd.f32 %v3048, %v3073
        %3075 = vdwg.mxu0
        %s3076 = scalar_lea.vmem %s27, 96
        %v3077 = vld [vmem:[%s3076] sm:$0xf]
        %v3078 = vld [vmem:[%s3076 + $0x4] sm:$0xf]
        %v3079 = vld [vmem:[%s3076 + $0x8] sm:$0xf]
        %v3080 = vld [vmem:[%s3076 + $0xc] sm:$0xf]
        %s3081 = scalar_lea.vmem %s29, 6
        %v3082 = vld [vmem:[%s3081] sm:$0x1]
        %v3084 = vperm.slane %v3082, 0
        %v3090 = vunpack.c.l.b16 %v3077
        %v3091 = vunpack.c.l.b16 %v3078
        %v3092 = vunpack.c.l.b16 %v3079
        %v3093 = vunpack.c.l.b16 %v3080
        %v3094 = vpack.c.b16 %v3091, %v3090
        %v3095 = vpack.c.b16 %v3093, %v3092
        %3098 = vmatpush.bf16.msra.mxu0 0
        %3099 = vmatpush.bf16.msra.mxu0 0
        %3100 = vmatpush.bf16.msra.mxu0 0
        %3101 = vmatpush.bf16.msra.mxu0 0
        %3102 = vmatpush.bf16.msra.mxu0 0
        %3103 = vmatpush.bf16.msra.mxu0 0
        %3104 = vmatpush.bf16.msra.mxu0 %v3095
        %3105 = vmatpush.bf16.msra.mxu0 %v3094
        %3106 = vmatmul.bf16.gmra.mxu0 %v2604
        %v3107 = vpop.f32.mrf.mxu0
        %v3108 = vadd.f32 %v3084, %v3107
        %v3109 = vpop.f32.mrf.mxu0
        %v3110 = vadd.f32 %v3084, %v3109
        %3111 = vdwg.mxu0
        %v3112 = vpack.c.bf16 %v3038, %v3036
        %v3113 = vpack.c.bf16 %v3074, %v3072
        %v3115 = vsel %vm1304, %v3112, 0
        %v3118 = vsel %vm1304, %v3113, 0
        %3120 = vmatpush.bf16.xpose.msra.mxu0 0
        %3121 = vmatpush.bf16.xpose.msra.mxu0 0
        %3122 = vmatpush.bf16.xpose.msra.mxu0 0
        %3123 = vmatpush.bf16.xpose.msra.mxu0 0
        %3124 = vmatpush.bf16.xpose.msra.mxu0 0
        %3125 = vmatpush.bf16.xpose.msra.mxu0 0
        %3126 = vmatpush.bf16.xpose.msra.mxu0 0
        %3127 = vmatpush.bf16.xpose.msra.mxu0 %v3118
        %3128 = vmatmul.bf16.gmra.mxu0 %v3115
        %v3129 = vpop.f32.mrf.mxu0
        %v3130 = vadd.f32 0.0, %v3129
        %v3131 = vpop.f32.mrf.mxu0
        %v3132 = vadd.f32 0.0, %v3131
        %3133 = vdwg.mxu0
        %v3134 = vmul.f32 %v3130, 0.35355338
        %v3135 = vmul.f32 %v3132, 0.35355338
        %v3136 = vadd.f32 %v3134, %v1461
        %v3137 = vadd.f32 %v3135, %v1462
        %v3138 = vsel %vm1454, %v3136, -inf
        %3139 = vmax.xlane.f32.xlu0 %v3138
        %v3140 = vpop.xlane.xlu0 %3139
        %v3141 = vsel %vm1456, %v3137, -inf
        %3142 = vmax.xlane.f32.xlu0 %v3141
        %v3143 = vpop.xlane.xlu0 %3142
        %v3144 = vsub.f32 %v3136, %v3140
        %v3145 = vsub.f32 %v3137, %v3143
        %v3146 = vmul.f32 %v3144, 1.442695
        %v3147 = vpow.pop %v3146
        %v3148 = vmul.f32 %v3145, 1.442695
        %v3149 = vpow.pop %v3148
        %v3150 = vsel %vm1454, %v3147, 0.0
        %3151 = vadd.xlane.f32.xlu0 %v3150
        %v3152 = vpop.xlane.xlu0 %3151
        %v3153 = vsel %vm1456, %v3149, 0.0
        %3154 = vadd.xlane.f32.xlu0 %v3153
        %v3155 = vpop.xlane.xlu0 %3154
        %v3156 = vrcp.pop %v3152
        %v3157 = vmul.f32 %v3152, %v3156
        %v3158 = vsub.f32 1.0, %v3157
        %v3159 = vmul.f32 %v3156, %v3158
        %v3160 = vadd.f32 %v3156, %v3159
        %vm3161 = vweird.f32 %v3152
        %vm3162 = vweird.f32 %v3156
        %vm3163 = vmor %vm3161, %vm3162
        %v3164 = vsel %vm3163, %v3156, %v3160
        %v3165 = vand.u32 2147483647, %v3152
        %vm3166 = vcmp.eq.f32.partialorder %v3165, 8.507059e+37
        %v3167 = vand.u32 %v3152, 2147483648
        %v3168 = vor.u32 1.1754944e-38, %v3167
        %v3169 = vsel %vm3166, %v3168, %v3164
        %v3170 = vmul.f32 %v3147, %v3169
        %v3171 = vrcp.pop %v3155
        %v3172 = vmul.f32 %v3155, %v3171
        %v3173 = vsub.f32 1.0, %v3172
        %v3174 = vmul.f32 %v3171, %v3173
        %v3175 = vadd.f32 %v3171, %v3174
        %vm3176 = vweird.f32 %v3155
        %vm3177 = vweird.f32 %v3171
        %vm3178 = vmor %vm3176, %vm3177
        %v3179 = vsel %vm3178, %v3171, %v3175
        %v3180 = vand.u32 2147483647, %v3155
        %vm3181 = vcmp.eq.f32.partialorder %v3180, 8.507059e+37
        %v3182 = vand.u32 %v3155, 2147483648
        %v3183 = vor.u32 1.1754944e-38, %v3182
        %v3184 = vsel %vm3181, %v3183, %v3179
        %v3185 = vmul.f32 %v3149, %v3184
        %v3186 = vpack.c.bf16 %v3185, %v3170
        %v3187 = vpack.c.bf16 %v3110, %v3108
        %v3189 = vsel %vm1454, %v3186, 0
        %v3192 = vand.u32 %v3187, %v1652
        %3194 = vmatpush.bf16.msra.mxu0 0
        %3195 = vmatpush.bf16.msra.mxu0 0
        %3196 = vmatpush.bf16.msra.mxu0 0
        %3197 = vmatpush.bf16.msra.mxu0 0
        %3198 = vmatpush.bf16.msra.mxu0 0
        %3199 = vmatpush.bf16.msra.mxu0 0
        %3200 = vmatpush.bf16.msra.mxu0 0
        %3201 = vmatpush.bf16.msra.mxu0 %v3192
        %3202 = vmatmul.bf16.gmra.mxu0 %v3189
        %v3203 = vpop.f32.mrf.mxu0
        %v3204 = vadd.f32 0.0, %v3203
        %v3205 = vpop.f32.mrf.mxu0
        %v3206 = vadd.f32 0.0, %v3205
        %3207 = vdwg.mxu0
        %3210 = vrot.lane.b32.xlu0 %v3204, 16
        %v3211 = vpop.permute.xlu0 %3210
        %3212 = vrot.lane.b32.xlu0 %v3206, 16
        %v3213 = vpop.permute.xlu0 %3212
        %3216 = vst.msk [vmem:[#allocation3] sm:$0xff] %vm2101, %v3211
        %3217 = vst.msk [vmem:[#allocation3 + $0x8] sm:$0x1] %vm2103, %v3213
        %s3218 = scalar_lea.vmem %s19, 112
        %v3219 = vld [vmem:[%s3218] sm:$0xf]
        %v3220 = vld [vmem:[%s3218 + $0x4] sm:$0xf]
        %v3221 = vld [vmem:[%s3218 + $0x8] sm:$0xf]
        %v3222 = vld [vmem:[%s3218 + $0xc] sm:$0xf]
        %s3223 = scalar_lea.vmem %s21, 7
        %v3224 = vld [vmem:[%s3223] sm:$0x1]
        %v3226 = vperm.slane %v3224, 0
        %v3232 = vunpack.c.l.b16 %v3219
        %v3233 = vunpack.c.l.b16 %v3220
        %v3234 = vunpack.c.l.b16 %v3221
        %v3235 = vunpack.c.l.b16 %v3222
        %v3236 = vpack.c.b16 %v3233, %v3232
        %v3237 = vpack.c.b16 %v3235, %v3234
        %3240 = vmatpush.bf16.msra.mxu0 0
        %3241 = vmatpush.bf16.msra.mxu0 0
        %3242 = vmatpush.bf16.msra.mxu0 0
        %3243 = vmatpush.bf16.msra.mxu0 0
        %3244 = vmatpush.bf16.msra.mxu0 0
        %3245 = vmatpush.bf16.msra.mxu0 0
        %3246 = vmatpush.bf16.msra.mxu0 %v3237
        %3247 = vmatpush.bf16.msra.mxu0 %v3236
        %3248 = vmatmul.bf16.gmra.mxu0 %v2604
        %v3249 = vpop.f32.mrf.mxu0
        %v3250 = vadd.f32 %v3226, %v3249
        %v3251 = vpop.f32.mrf.mxu0
        %v3252 = vadd.f32 %v3226, %v3251
        %3253 = vdwg.mxu0
        %s3254 = scalar_lea.vmem %s23, 112
        %v3255 = vld [vmem:[%s3254] sm:$0xf]
        %v3256 = vld [vmem:[%s3254 + $0x4] sm:$0xf]
        %v3257 = vld [vmem:[%s3254 + $0x8] sm:$0xf]
        %v3258 = vld [vmem:[%s3254 + $0xc] sm:$0xf]
        %s3259 = scalar_lea.vmem %s25, 7
        %v3260 = vld [vmem:[%s3259] sm:$0x1]
        %v3262 = vperm.slane %v3260, 0
        %v3268 = vunpack.c.l.b16 %v3255
        %v3269 = vunpack.c.l.b16 %v3256
        %v3270 = vunpack.c.l.b16 %v3257
        %v3271 = vunpack.c.l.b16 %v3258
        %v3272 = vpack.c.b16 %v3269, %v3268
        %v3273 = vpack.c.b16 %v3271, %v3270
        %3276 = vmatpush.bf16.msra.mxu0 0
        %3277 = vmatpush.bf16.msra.mxu0 0
        %3278 = vmatpush.bf16.msra.mxu0 0
        %3279 = vmatpush.bf16.msra.mxu0 0
        %3280 = vmatpush.bf16.msra.mxu0 0
        %3281 = vmatpush.bf16.msra.mxu0 0
        %3282 = vmatpush.bf16.msra.mxu0 %v3273
        %3283 = vmatpush.bf16.msra.mxu0 %v3272
        %3284 = vmatmul.bf16.gmra.mxu0 %v2604
        %v3285 = vpop.f32.mrf.mxu0
        %v3286 = vadd.f32 %v3262, %v3285
        %v3287 = vpop.f32.mrf.mxu0
        %v3288 = vadd.f32 %v3262, %v3287
        %3289 = vdwg.mxu0
        %s3290 = scalar_lea.vmem %s27, 112
        %v3291 = vld [vmem:[%s3290] sm:$0xf]
        %v3292 = vld [vmem:[%s3290 + $0x4] sm:$0xf]
        %v3293 = vld [vmem:[%s3290 + $0x8] sm:$0xf]
        %v3294 = vld [vmem:[%s3290 + $0xc] sm:$0xf]
        %s3295 = scalar_lea.vmem %s29, 7
        %v3296 = vld [vmem:[%s3295] sm:$0x1]
        %v3298 = vperm.slane %v3296, 0
        %v3304 = vunpack.c.l.b16 %v3291
        %v3305 = vunpack.c.l.b16 %v3292
        %v3306 = vunpack.c.l.b16 %v3293
        %v3307 = vunpack.c.l.b16 %v3294
        %v3308 = vpack.c.b16 %v3305, %v3304
        %v3309 = vpack.c.b16 %v3307, %v3306
        %3312 = vmatpush.bf16.msra.mxu0 0
        %3313 = vmatpush.bf16.msra.mxu0 0
        %3314 = vmatpush.bf16.msra.mxu0 0
        %3315 = vmatpush.bf16.msra.mxu0 0
        %3316 = vmatpush.bf16.msra.mxu0 0
        %3317 = vmatpush.bf16.msra.mxu0 0
        %3318 = vmatpush.bf16.msra.mxu0 %v3309
        %3319 = vmatpush.bf16.msra.mxu0 %v3308
        %3320 = vmatmul.bf16.gmra.mxu0 %v2604
        %v3321 = vpop.f32.mrf.mxu0
        %v3322 = vadd.f32 %v3298, %v3321
        %v3323 = vpop.f32.mrf.mxu0
        %v3324 = vadd.f32 %v3298, %v3323
        %3325 = vdwg.mxu0
        %v3326 = vpack.c.bf16 %v3252, %v3250
        %v3327 = vpack.c.bf16 %v3288, %v3286
        %v3329 = vsel %vm1304, %v3326, 0
        %v3332 = vsel %vm1304, %v3327, 0
        %3334 = vmatpush.bf16.xpose.msra.mxu0 0
        %3335 = vmatpush.bf16.xpose.msra.mxu0 0
        %3336 = vmatpush.bf16.xpose.msra.mxu0 0
        %3337 = vmatpush.bf16.xpose.msra.mxu0 0
        %3338 = vmatpush.bf16.xpose.msra.mxu0 0
        %3339 = vmatpush.bf16.xpose.msra.mxu0 0
        %3340 = vmatpush.bf16.xpose.msra.mxu0 0
        %3341 = vmatpush.bf16.xpose.msra.mxu0 %v3332
        %3342 = vmatmul.bf16.gmra.mxu0 %v3329
        %v3343 = vpop.f32.mrf.mxu0
        %v3344 = vadd.f32 0.0, %v3343
        %v3345 = vpop.f32.mrf.mxu0
        %v3346 = vadd.f32 0.0, %v3345
        %3347 = vdwg.mxu0
        %v3348 = vmul.f32 %v3344, 0.35355338
        %v3349 = vmul.f32 %v3346, 0.35355338
        %v3350 = vadd.f32 %v3348, %v1461
        %v3351 = vadd.f32 %v3349, %v1462
        %v3352 = vsel %vm1454, %v3350, -inf
        %3353 = vmax.xlane.f32.xlu0 %v3352
        %v3354 = vpop.xlane.xlu0 %3353
        %v3355 = vsel %vm1456, %v3351, -inf
        %3356 = vmax.xlane.f32.xlu0 %v3355
        %v3357 = vpop.xlane.xlu0 %3356
        %v3358 = vsub.f32 %v3350, %v3354
        %v3359 = vsub.f32 %v3351, %v3357
        %v3360 = vmul.f32 %v3358, 1.442695
        %v3361 = vpow.pop %v3360
        %v3362 = vmul.f32 %v3359, 1.442695
        %v3363 = vpow.pop %v3362
        %v3364 = vsel %vm1454, %v3361, 0.0
        %3365 = vadd.xlane.f32.xlu0 %v3364
        %v3366 = vpop.xlane.xlu0 %3365
        %v3367 = vsel %vm1456, %v3363, 0.0
        %3368 = vadd.xlane.f32.xlu0 %v3367
        %v3369 = vpop.xlane.xlu0 %3368
        %v3370 = vrcp.pop %v3366
        %v3371 = vmul.f32 %v3366, %v3370
        %v3372 = vsub.f32 1.0, %v3371
        %v3373 = vmul.f32 %v3370, %v3372
        %v3374 = vadd.f32 %v3370, %v3373
        %vm3375 = vweird.f32 %v3366
        %vm3376 = vweird.f32 %v3370
        %vm3377 = vmor %vm3375, %vm3376
        %v3378 = vsel %vm3377, %v3370, %v3374
        %v3379 = vand.u32 2147483647, %v3366
        %vm3380 = vcmp.eq.f32.partialorder %v3379, 8.507059e+37
        %v3381 = vand.u32 %v3366, 2147483648
        %v3382 = vor.u32 1.1754944e-38, %v3381
        %v3383 = vsel %vm3380, %v3382, %v3378
        %v3384 = vmul.f32 %v3361, %v3383
        %v3385 = vrcp.pop %v3369
        %v3386 = vmul.f32 %v3369, %v3385
        %v3387 = vsub.f32 1.0, %v3386
        %v3388 = vmul.f32 %v3385, %v3387
        %v3389 = vadd.f32 %v3385, %v3388
        %vm3390 = vweird.f32 %v3369
        %vm3391 = vweird.f32 %v3385
        %vm3392 = vmor %vm3390, %vm3391
        %v3393 = vsel %vm3392, %v3385, %v3389
        %v3394 = vand.u32 2147483647, %v3369
        %vm3395 = vcmp.eq.f32.partialorder %v3394, 8.507059e+37
        %v3396 = vand.u32 %v3369, 2147483648
        %v3397 = vor.u32 1.1754944e-38, %v3396
        %v3398 = vsel %vm3395, %v3397, %v3393
        %v3399 = vmul.f32 %v3363, %v3398
        %v3400 = vpack.c.bf16 %v3399, %v3384
        %v3401 = vpack.c.bf16 %v3324, %v3322
        %v3403 = vsel %vm1454, %v3400, 0
        %v3406 = vand.u32 %v3401, %v1652
        %3408 = vmatpush.bf16.msra.mxu0 0
        %3409 = vmatpush.bf16.msra.mxu0 0
        %3410 = vmatpush.bf16.msra.mxu0 0
        %3411 = vmatpush.bf16.msra.mxu0 0
        %3412 = vmatpush.bf16.msra.mxu0 0
        %3413 = vmatpush.bf16.msra.mxu0 0
        %3414 = vmatpush.bf16.msra.mxu0 0
        %3415 = vmatpush.bf16.msra.mxu0 %v3406
        %3416 = vmatmul.bf16.gmra.mxu0 %v3403
        %v3417 = vpop.f32.mrf.mxu0
        %v3418 = vadd.f32 0.0, %v3417
        %v3419 = vpop.f32.mrf.mxu0
        %v3420 = vadd.f32 0.0, %v3419
        %3421 = vdwg.mxu0
        %3424 = vrot.lane.b32.xlu0 %v3418, 24
        %v3425 = vpop.permute.xlu0 %3424
        %3426 = vrot.lane.b32.xlu0 %v3420, 24
        %v3427 = vpop.permute.xlu0 %3426
        %3430 = vst.msk [vmem:[#allocation3] sm:$0xff] %vm2317, %v3425
        %3431 = vst.msk [vmem:[#allocation3 + $0x8] sm:$0x1] %vm2319, %v3427
        %v3432 = vld [vmem:[#allocation3] sm:$0xff]
        %v3433 = vld [vmem:[#allocation3 + $0x8] sm:$0x1]
        %s3434 = scalar_lea.vmem %s31, 16
        %v3435 = vld [vmem:[%s3434] sm:$0xf]
        %v3436 = vld [vmem:[%s3434 + $0x4] sm:$0xf]
        %v3437 = vld [vmem:[%s3434 + $0x8] sm:$0xf]
        %v3438 = vld [vmem:[%s3434 + $0xc] sm:$0xf]
        %v3439 = vpack.c.bf16 %v3433, %v3432
        %s3440 = scalar_lea.vmem %s33, 1
        %v3441 = vld [vmem:[%s3440] sm:$0x1]
        %v3443 = vperm.slane %v3441, 0
        %v3449 = vunpack.c.l.b16 %v3435
        %v3450 = vunpack.c.l.b16 %v3436
        %v3451 = vunpack.c.l.b16 %v3437
        %v3452 = vunpack.c.l.b16 %v3438
        %v3453 = vpack.c.b16 %v3450, %v3449
        %v3454 = vpack.c.b16 %v3452, %v3451
        %v3458 = vsel %vm1214, %v3439, 0
        %3460 = vmatpush.bf16.msra.mxu0 0
        %3461 = vmatpush.bf16.msra.mxu0 0
        %3462 = vmatpush.bf16.msra.mxu0 0
        %3463 = vmatpush.bf16.msra.mxu0 0
        %3464 = vmatpush.bf16.msra.mxu0 0
        %3465 = vmatpush.bf16.msra.mxu0 0
        %3466 = vmatpush.bf16.msra.mxu0 %v3454
        %3467 = vmatpush.bf16.msra.mxu0 %v3453
        %3468 = vmatmul.bf16.gmra.mxu0 %v3458
        %v3469 = vpop.f32.mrf.mxu0
        %v3470 = vadd.f32 %v3443, %v3469
        %v3471 = vpop.f32.mrf.mxu0
        %v3472 = vadd.f32 %v3443, %v3471
        %3473 = vdwg.mxu0
        %v3474 = vadd.f32 %v2578, %v3470
        %v3475 = vadd.f32 %v2579, %v3472
        %s3476 = scalar_lea.vmem %s35, 1
        %v3477 = vld [vmem:[%s3476] sm:$0x1]
        %s3478 = scalar_lea.vmem %s37, 1
        %v3479 = vld [vmem:[%s3478] sm:$0x1]
        %v3480 = vsel %vm1214, %v3474, 0.0
        %3481 = vadd.xlane.f32.xlu0 %v3480
        %v3482 = vpop.xlane.xlu0 %3481
        %v3483 = vsel %vm2368, %v3475, 0.0
        %3484 = vadd.xlane.f32.xlu0 %v3483
        %v3485 = vpop.xlane.xlu0 %3484
        %v3486 = vmul.f32 %v3482, %v2378
        %v3487 = vmul.f32 %v3485, %v2378
        %v3488 = vsub.f32 %v3474, %v3486
        %v3489 = vsub.f32 %v3475, %v3487
        %v3490 = vmul.f32 %v3488, %v3488
        %v3491 = vmul.f32 %v3489, %v3489
        %v3492 = vsel %vm1214, %v3490, 0.0
        %3493 = vadd.xlane.f32.xlu0 %v3492
        %v3494 = vpop.xlane.xlu0 %3493
        %v3495 = vsel %vm2368, %v3491, 0.0
        %3496 = vadd.xlane.f32.xlu0 %v3495
        %v3497 = vpop.xlane.xlu0 %3496
        %v3498 = vmul.f32 %v3494, %v2378
        %v3499 = vmul.f32 %v3497, %v2378
        %v3500 = vadd.f32 %v3498, 1e-05
        %v3501 = vadd.f32 %v3499, 1e-05
        %v3502 = vrsqrt.pop %v3500
        %v3503 = vmul.f32 %v3502, %v3500
        %v3504 = vmul.f32 %v3503, %v3502
        %v3505 = vmul.f32 0.5, %v3504
        %v3506 = vsub.f32 1.5, %v3505
        %v3507 = vmul.f32 %v3502, %v3506
        %vm3508 = vweird.f32 %v3500
        %vm3509 = vweird.f32 %v3502
        %vm3510 = vmor %vm3508, %vm3509
        %v3511 = vsel %vm3510, %v3502, %v3507
        %v3512 = vrsqrt.pop %v3501
        %v3513 = vmul.f32 %v3512, %v3501
        %v3514 = vmul.f32 %v3513, %v3512
        %v3515 = vmul.f32 0.5, %v3514
        %v3516 = vsub.f32 1.5, %v3515
        %v3517 = vmul.f32 %v3512, %v3516
        %vm3518 = vweird.f32 %v3501
        %vm3519 = vweird.f32 %v3512
        %vm3520 = vmor %vm3518, %vm3519
        %v3521 = vsel %vm3520, %v3512, %v3517
        %v3522 = vmul.f32 %v3488, %v3511
        %v3523 = vmul.f32 %v3489, %v3521
        %v3525 = vperm.slane %v3477, 0
        %v3527 = vmul.f32 %v3522, %v3525
        %v3528 = vmul.f32 %v3523, %v3525
        %v3530 = vperm.slane %v3479, 0
        %v3532 = vadd.f32 %v3527, %v3530
        %v3533 = vadd.f32 %v3528, %v3530
        %s3534 = scalar_lea.vmem %s39, 16
        %v3535 = vld [vmem:[%s3534] sm:$0xf]
        %v3536 = vld [vmem:[%s3534 + $0x4] sm:$0xf]
        %v3537 = vld [vmem:[%s3534 + $0x8] sm:$0xf]
        %v3538 = vld [vmem:[%s3534 + $0xc] sm:$0xf]
        %v3539 = vpack.c.bf16 %v3533, %v3532
        %s3540 = scalar_lea.vmem %s41, 1
        %v3541 = vld [vmem:[%s3540] sm:$0x1]
        %v3543 = vperm.slane %v3541, 0
        %v3549 = vunpack.c.l.b16 %v3535
        %v3550 = vunpack.c.l.b16 %v3536
        %v3551 = vunpack.c.l.b16 %v3537
        %v3552 = vunpack.c.l.b16 %v3538
        %v3553 = vpack.c.b16 %v3550, %v3549
        %v3554 = vpack.c.b16 %v3552, %v3551
        %v3558 = vsel %vm1214, %v3539, 0
        %3560 = vmatpush.bf16.msra.mxu0 0
        %3561 = vmatpush.bf16.msra.mxu0 0
        %3562 = vmatpush.bf16.msra.mxu0 0
        %3563 = vmatpush.bf16.msra.mxu0 0
        %3564 = vmatpush.bf16.msra.mxu0 0
        %3565 = vmatpush.bf16.msra.mxu0 0
        %3566 = vmatpush.bf16.msra.mxu0 %v3554
        %3567 = vmatpush.bf16.msra.mxu0 %v3553
        %3568 = vmatmul.bf16.gmra.mxu0 %v3558
        %v3569 = vpop.f32.mrf.mxu0
        %v3570 = vadd.f32 %v3543, %v3569
        %v3571 = vpop.f32.mrf.mxu0
        %v3572 = vadd.f32 %v3543, %v3571
        %3573 = vdwg.mxu0
        %v3574 = vmax.f32 %v3570, 0.0
        %v3575 = vmax.f32 %v3572, 0.0
        %s3576 = scalar_lea.vmem %s43, 32
        %v3577 = vld [vmem:[%s3576] sm:$0xf]
        %v3578 = vld [vmem:[%s3576 + $0x4] sm:$0xf]
        %v3579 = vld [vmem:[%s3576 + $0x8] sm:$0xf]
        %v3580 = vld [vmem:[%s3576 + $0xc] sm:$0xf]
        %v3581 = vld [vmem:[%s3576 + $0x10] sm:$0xf]
        %v3582 = vld [vmem:[%s3576 + $0x14] sm:$0xf]
        %v3583 = vld [vmem:[%s3576 + $0x18] sm:$0xf]
        %v3584 = vld [vmem:[%s3576 + $0x1c] sm:$0xf]
        %v3585 = vpack.c.bf16 %v3575, %v3574
        %s3586 = scalar_lea.vmem %s45, 1
        %v3587 = vld [vmem:[%s3586] sm:$0x1]
        %v3589 = vperm.slane %v3587, 0
        %v3599 = vunpack.c.l.b16 %v3577
        %v3600 = vunpack.c.l.b16 %v3578
        %v3601 = vunpack.c.l.b16 %v3579
        %v3602 = vunpack.c.l.b16 %v3580
        %v3603 = vunpack.c.l.b16 %v3581
        %v3604 = vunpack.c.l.b16 %v3582
        %v3605 = vunpack.c.l.b16 %v3583
        %v3606 = vunpack.c.l.b16 %v3584
        %v3607 = vpack.c.b16 %v3600, %v3599
        %v3608 = vpack.c.b16 %v3602, %v3601
        %v3609 = vpack.c.b16 %v3604, %v3603
        %v3610 = vpack.c.b16 %v3606, %v3605
        %v3616 = vsel %vm2504, %v3585, 0
        %3618 = vmatpush.bf16.msra.mxu0 0
        %3619 = vmatpush.bf16.msra.mxu0 0
        %3620 = vmatpush.bf16.msra.mxu0 0
        %3621 = vmatpush.bf16.msra.mxu0 0
        %3622 = vmatpush.bf16.msra.mxu0 %v3610
        %3623 = vmatpush.bf16.msra.mxu0 %v3609
        %3624 = vmatpush.bf16.msra.mxu0 %v3608
        %3625 = vmatpush.bf16.msra.mxu0 %v3607
        %3626 = vmatmul.bf16.gmra.mxu0 %v3616
        %v3627 = vpop.f32.mrf.mxu0
        %v3628 = vadd.f32 %v3589, %v3627
        %v3629 = vpop.f32.mrf.mxu0
        %v3630 = vadd.f32 %v3589, %v3629
        %3631 = vdwg.mxu0
        %v3632 = vadd.f32 %v3532, %v3628
        %v3633 = vadd.f32 %v3533, %v3630
        %s3634 = scalar_lea.vmem %s47, 1
        %v3635 = vld [vmem:[%s3634] sm:$0x1]
        %s3636 = scalar_lea.vmem %s49, 1
        %v3637 = vld [vmem:[%s3636] sm:$0x1]
        %v3638 = vsel %vm1214, %v3632, 0.0
        %3639 = vadd.xlane.f32.xlu0 %v3638
        %v3640 = vpop.xlane.xlu0 %3639
        %v3641 = vsel %vm2368, %v3633, 0.0
        %3642 = vadd.xlane.f32.xlu0 %v3641
        %v3643 = vpop.xlane.xlu0 %3642
        %v3644 = vmul.f32 %v3640, %v2378
        %v3645 = vmul.f32 %v3643, %v2378
        %v3646 = vsub.f32 %v3632, %v3644
        %v3647 = vsub.f32 %v3633, %v3645
        %v3648 = vmul.f32 %v3646, %v3646
        %v3649 = vmul.f32 %v3647, %v3647
        %v3650 = vsel %vm1214, %v3648, 0.0
        %3651 = vadd.xlane.f32.xlu0 %v3650
        %v3652 = vpop.xlane.xlu0 %3651
        %v3653 = vsel %vm2368, %v3649, 0.0
        %3654 = vadd.xlane.f32.xlu0 %v3653
        %v3655 = vpop.xlane.xlu0 %3654
        %v3656 = vmul.f32 %v3652, %v2378
        %v3657 = vmul.f32 %v3655, %v2378
        %v3658 = vadd.f32 %v3656, 1e-05
        %v3659 = vadd.f32 %v3657, 1e-05
        %v3660 = vrsqrt.pop %v3658
        %v3661 = vmul.f32 %v3660, %v3658
        %v3662 = vmul.f32 %v3661, %v3660
        %v3663 = vmul.f32 0.5, %v3662
        %v3664 = vsub.f32 1.5, %v3663
        %v3665 = vmul.f32 %v3660, %v3664
        %vm3666 = vweird.f32 %v3658
        %vm3667 = vweird.f32 %v3660
        %vm3668 = vmor %vm3666, %vm3667
        %v3669 = vsel %vm3668, %v3660, %v3665
        %v3670 = vrsqrt.pop %v3659
        %v3671 = vmul.f32 %v3670, %v3659
        %v3672 = vmul.f32 %v3671, %v3670
        %v3673 = vmul.f32 0.5, %v3672
        %v3674 = vsub.f32 1.5, %v3673
        %v3675 = vmul.f32 %v3670, %v3674
        %vm3676 = vweird.f32 %v3659
        %vm3677 = vweird.f32 %v3670
        %vm3678 = vmor %vm3676, %vm3677
        %v3679 = vsel %vm3678, %v3670, %v3675
        %v3680 = vmul.f32 %v3646, %v3669
        %v3681 = vmul.f32 %v3647, %v3679
        %v3683 = vperm.slane %v3635, 0
        %v3685 = vmul.f32 %v3680, %v3683
        %v3686 = vmul.f32 %v3681, %v3683
        %v3688 = vperm.slane %v3637, 0
        %v3690 = vadd.f32 %v3685, %v3688
        %v3691 = vadd.f32 %v3686, %v3688
        %v3692 = vsel %vm1214, %v3690, 0.0
        %v3693 = vrot.slane %v3692, 4
        %v3694 = vadd.f32 %v3692, %v3693
        %v3695 = vrot.slane %v3694, 2
        %v3696 = vadd.f32 %v3694, %v3695
        %v3697 = vrot.slane %v3696, 1
        %v3698 = vadd.f32 %v3696, %v3697
        %v3699 = vrcp.pop 8.0
        %v3700 = vmul.f32 8.0, %v3699
        %v3701 = vsub.f32 1.0, %v3700
        %v3702 = vmul.f32 %v3699, %v3701
        %v3703 = vadd.f32 %v3699, %v3702
        %vm3704 = vweird.f32 %v3699
        %v3705 = vsel %vm3704, %v3699, %v3703
        %v3706 = vmul.f32 %v3698, %v3705
        %3707 = vst.msk [vmem:[%s1076] sm:$0x1] %vm2368, %v3706
        %v3708 = vld [vmem:[%s51] sm:$0x1]
        %v3709 = vld [vmem:[%s53] sm:$0x1]
        %v3710 = vsel %vm2368, %v3691, 0.0
        %3711 = vadd.xlane.f32.xlu0 %v3710
        %v3712 = vpop.xlane.xlu0 %3711
        %v3713 = vmul.f32 %v3712, %v2378
        %v3714 = vsub.f32 %v3691, %v3713
        %v3715 = vmul.f32 %v3714, %v3714
        %v3716 = vsel %vm2368, %v3715, 0.0
        %3717 = vadd.xlane.f32.xlu0 %v3716
        %v3718 = vpop.xlane.xlu0 %3717
        %v3719 = vmul.f32 %v3718, %v2378
        %v3720 = vadd.f32 %v3719, 1e-05
        %v3721 = vrsqrt.pop %v3720
        %v3722 = vmul.f32 %v3721, %v3720
        %v3723 = vmul.f32 %v3722, %v3721
        %v3724 = vmul.f32 0.5, %v3723
        %v3725 = vsub.f32 1.5, %v3724
        %v3726 = vmul.f32 %v3721, %v3725
        %vm3727 = vweird.f32 %v3720
        %vm3728 = vweird.f32 %v3721
        %vm3729 = vmor %vm3727, %vm3728
        %v3730 = vsel %vm3729, %v3721, %v3726
        %v3731 = vmul.f32 %v3714, %v3730
        %v3732 = vmul.f32 %v3731, %v3708
        %v3733 = vadd.f32 %v3732, %v3709
        %v3734 = vld [vmem:[%s55] sm:$0xf]
        %v3735 = vld [vmem:[%s55 + $0x4] sm:$0xf]
        %v3736 = vld [vmem:[%s55 + $0x8] sm:$0xf]
        %v3737 = vld [vmem:[%s55 + $0xc] sm:$0xf]
        %v3738 = vpack.c.bf16 %v3733, %v3733
        %v3739 = vld [vmem:[%s57] sm:$0x1]
        %v3744 = vunpack.c.l.b16 %v3734
        %v3745 = vunpack.c.l.b16 %v3735
        %v3746 = vunpack.c.l.b16 %v3736
        %v3747 = vunpack.c.l.b16 %v3737
        %v3748 = vpack.c.b16 %v3745, %v3744
        %v3749 = vpack.c.b16 %v3747, %v3746
        %v3753 = vsel %vm1214, %v3738, 0
        %3755 = vmatpush.bf16.msra.mxu0 0
        %3756 = vmatpush.bf16.msra.mxu0 0
        %3757 = vmatpush.bf16.msra.mxu0 0
        %3758 = vmatpush.bf16.msra.mxu0 0
        %3759 = vmatpush.bf16.msra.mxu0 0
        %3760 = vmatpush.bf16.msra.mxu0 0
        %3761 = vmatpush.bf16.msra.mxu0 %v3749
        %3762 = vmatpush.bf16.msra.mxu0 %v3748
        %3763 = vmatmul.bf16.gmra.mxu0 %v3753
        %v3764 = vpop.f32.mrf.mxu0
        %v3765 = vadd.f32 %v3739, %v3764
        %v3766 = vpop.f32.mrf.mxu0
        %3767 = vdwg.mxu0
        %v3768 = vmul.f32 %v3765, %v3765
        %v3769 = vmul.f32 %v3765, %v3768
        %v3770 = vmul.f32 %v3769, 0.044715
        %v3771 = vadd.f32 %v3765, %v3770
        %v3772 = vmul.f32 %v3771, 0.7978846
        %v3773 = vtanh.pop %v3772
        %v3774 = vadd.f32 %v3773, 1.0
        %v3775 = vmul.f32 %v3774, 0.5
        %v3776 = vmul.f32 %v3765, %v3775
        %v3777 = vld [vmem:[%s59] sm:$0xf]
        %v3778 = vld [vmem:[%s59 + $0x4] sm:$0xf]
        %v3779 = vld [vmem:[%s59 + $0x8] sm:$0xf]
        %v3780 = vld [vmem:[%s59 + $0xc] sm:$0xf]
        %v3781 = vpack.c.bf16 %v3776, %v3776
        %v3782 = vld [vmem:[%s61] sm:$0x1]
        %v3787 = vunpack.c.l.b16 %v3777
        %v3788 = vunpack.c.l.b16 %v3778
        %v3789 = vunpack.c.l.b16 %v3779
        %v3790 = vunpack.c.l.b16 %v3780
        %v3791 = vpack.c.b16 %v3788, %v3787
        %v3792 = vpack.c.b16 %v3790, %v3789
        %v3796 = vsel %vm1214, %v3781, 0
        %3798 = vmatpush.bf16.msra.mxu0 0
        %3799 = vmatpush.bf16.msra.mxu0 0
        %3800 = vmatpush.bf16.msra.mxu0 0
        %3801 = vmatpush.bf16.msra.mxu0 0
        %3802 = vmatpush.bf16.msra.mxu0 0
        %3803 = vmatpush.bf16.msra.mxu0 0
        %3804 = vmatpush.bf16.msra.mxu0 %v3792
        %3805 = vmatpush.bf16.msra.mxu0 %v3791
        %3806 = vmatmul.bf16.gmra.mxu0 %v3796
        %v3807 = vpop.f32.mrf.mxu0
        %v3808 = vadd.f32 %v3782, %v3807
        %v3809 = vpop.f32.mrf.mxu0
        %3810 = vdwg.mxu0
        %3811 = vst.msk [vmem:[%s1070] sm:$0x1] %vm2368, %v3808
        %s3812 = sand.u32 %s759, 1
        %s3813 = scalar_lea.sflag [#allocation5], %s3812
        %s3814 = sand.u32 %s759, 1
        %s3815 = smul.addr %s3814, 16
        %s3816 = scalar_lea.vmem [#allocation4], %s3815
        %s3817 = sand.u32 %s90, 1
        %s3818 = scalar_lea.sflag [#allocation7], %s3817
        %s3819 = sand.u32 %s785, 1
        %s3820 = smul.addr %s3819, 8
        %s3821 = scalar_lea.vmem [#allocation6], %s3820
        %s3822 = sand.u32 %s90, 1
        %s3823 = scalar_lea.sflag [#allocation7], %s3822
        %s3824 = sand.u32 %s811, 1
        %s3825 = scalar_lea.vmem [#allocation8], %s3824
        %s3826 = sand.u32 %s837, 1
        %s3827 = scalar_lea.sflag [#allocation10], %s3826
        %s3828 = sand.u32 %s837, 1
        %s3829 = scalar_lea.vmem [#allocation9], %s3828
        // Predicated region
        $region145: #{model_forward.1} parent=143 // pred_check
          %p3830 = pneg %p769
        $region146: #{model_forward.1} parent=143 // pred_check_branch
          %3832 = sbr.rel (%p3830) target = $region148
        $region147: #{model_forward.1} parent=143 // pred_region
          %3834 = vsyncadd %s3813, 0
          %s3835 = smul.addr %s90, 2
          %s3836 = smul.addr %s3835, 8
          %s3837 = scalar_lea.hbm %s63, %s3836
          %s3838 = sshll.u32 %s3816, 4
          %s3839 = int_to_ptr.vmem [resolvable:$true] %s3838
          %s3840 = sshll.u32 %s3837, 4
          %s3841 = int_to_ptr.hbm [resolvable:$true] %s3840
          %3846 = dma.vmem_to_hbm [thread:$0]  %s3839, 256, %s3841, %s3813, 128, 128, 8
        $region148: #{model_forward.1} parent=143 // pred_fallthru
          _
        // Predicated region
        $region149: #{model_forward.1} parent=143 // pred_check
          %p3847 = pneg %p795
        $region150: #{model_forward.1} parent=143 // pred_check_branch
          %3849 = sbr.rel (%p3847) target = $region152
        $region151: #{model_forward.1} parent=143 // pred_region
          %3851 = vsyncadd %s3818, 0
          %s3852 = smul.addr %s90, 8
          %s3853 = scalar_lea.hbm %s65, %s3852
          %s3855 = sshll.u32 %s3821, 4
          %s3856 = int_to_ptr.vmem [resolvable:$true] %s3855
          %s3857 = sshll.u32 %s3853, 4
          %s3858 = int_to_ptr.hbm [resolvable:$true] %s3857
          %3860 = dma.vmem_to_hbm [thread:$0]  %s3856, 128, %s3858, %s3818
        $region152: #{model_forward.1} parent=143 // pred_fallthru
          _
        // Predicated region
        $region153: #{model_forward.1} parent=143 // pred_check
          %p3861 = pneg %p821
        $region154: #{model_forward.1} parent=143 // pred_check_branch
          %3863 = sbr.rel (%p3861) target = $region156
        $region155: #{model_forward.1} parent=143 // pred_region
          %3865 = vsyncadd %s3823, 0
          %s3866 = scalar_lea.hbm %s67, %s90
          %s3868 = sshll.u32 %s3825, 4
          %s3869 = int_to_ptr.vmem [resolvable:$true] %s3868
          %s3870 = sshll.u32 %s3866, 4
          %s3871 = int_to_ptr.hbm [resolvable:$true] %s3870
          %3873 = dma.vmem_to_hbm [thread:$0]  %s3869, 16, %s3871, %s3823
        $region156: #{model_forward.1} parent=143 // pred_fallthru
          _
        // Predicated region
        $region157: #{model_forward.1} parent=143 // pred_check
          %p3874 = pneg %p847
        $region158: #{model_forward.1} parent=143 // pred_check_branch
          %3876 = sbr.rel (%p3874) target = $region160
        $region159: #{model_forward.1} parent=143 // pred_region
          %3878 = vsyncadd %s3827, 0
          %s3879 = scalar_lea.hbm %s69, %s90
          %s3881 = sshll.u32 %s3829, 4
          %s3882 = int_to_ptr.vmem [resolvable:$true] %s3881
          %s3883 = sshll.u32 %s3879, 4
          %s3884 = int_to_ptr.hbm [resolvable:$true] %s3883
          %3886 = dma.vmem_to_hbm [thread:$0]  %s3882, 16, %s3884, %s3827
        $region160: #{model_forward.1} parent=143 // pred_fallthru
          _
      $region144: #{model_forward.1} parent=5 // pred_fallthru
        _
      %p3887 = scmp.le.s32.totalorder 2, %s85
      // Predicated region
      $region161: #{model_forward.1} parent=5 // pred_check
        %p3888 = pneg %p3887
      $region162: #{model_forward.1} parent=5 // pred_check_branch
        %3890 = sbr.rel (%p3888) target = $region164
      $region163: #{model_forward.1} parent=5 // pred_region
        %s3891 = ssub.s32 %s85, 2
        // Predicated region
        $region165: #{model_forward.1} parent=163 // pred_check
          %p3892 = pneg %p775
        $region166: #{model_forward.1} parent=163 // pred_check_branch
          %3894 = sbr.rel (%p3892) target = $region168
        $region167: #{model_forward.1} parent=163 // pred_region
          %s3895 = sand.u32 %s760, 1
          %s3896 = scalar_lea.sflag [#allocation5], %s3895
          %s3897 = sand.u32 %s760, 1
          %s3898 = smul.addr %s3897, 16
          %s3899 = scalar_lea.vmem [#allocation4], %s3898
          %3901 = dma.done %s3896, 256
        $region168: #{model_forward.1} parent=163 // pred_fallthru
          _
        // Predicated region
        $region169: #{model_forward.1} parent=163 // pred_check
          %p3902 = pneg %p801
        $region170: #{model_forward.1} parent=163 // pred_check_branch
          %3904 = sbr.rel (%p3902) target = $region172
        $region171: #{model_forward.1} parent=163 // pred_region
          %s3905 = sand.u32 %s91, 1
          %s3906 = scalar_lea.sflag [#allocation7], %s3905
          %s3907 = sand.u32 %s786, 1
          %s3908 = smul.addr %s3907, 8
          %s3909 = scalar_lea.vmem [#allocation6], %s3908
          %3911 = dma.done %s3906, 128
        $region172: #{model_forward.1} parent=163 // pred_fallthru
          _
        // Predicated region
        $region173: #{model_forward.1} parent=163 // pred_check
          %p3912 = pneg %p827
        $region174: #{model_forward.1} parent=163 // pred_check_branch
          %3914 = sbr.rel (%p3912) target = $region176
        $region175: #{model_forward.1} parent=163 // pred_region
          %s3915 = sand.u32 %s91, 1
          %s3916 = scalar_lea.sflag [#allocation7], %s3915
          %s3917 = sand.u32 %s812, 1
          %s3918 = scalar_lea.vmem [#allocation8], %s3917
          %3920 = dma.done %s3916, 16
        $region176: #{model_forward.1} parent=163 // pred_fallthru
          _
        // Predicated region
        $region177: #{model_forward.1} parent=163 // pred_check
          %p3921 = pneg %p853
        $region178: #{model_forward.1} parent=163 // pred_check_branch
          %3923 = sbr.rel (%p3921) target = $region180
        $region179: #{model_forward.1} parent=163 // pred_region
          %s3924 = sand.u32 %s838, 1
          %s3925 = scalar_lea.sflag [#allocation10], %s3924
          %s3926 = sand.u32 %s838, 1
          %s3927 = scalar_lea.vmem [#allocation9], %s3926
          %3929 = dma.done %s3925, 16
        $region180: #{model_forward.1} parent=163 // pred_fallthru
          _
      $region164: #{model_forward.1} parent=5 // pred_fallthru
        _
    $region6: #{model_forward.1} parent=1 // loop_footer
      %s89 = sadd.s32 1, %s85
    $region7: #{model_forward.1} parent=1 // loop_footer_branch
      %84 = sbr.rel target = $region3
    $region8: #{model_forward.1} parent=1 // loop_exit
      _
    %3930 = vsyncpa [#allocation5], 1
    %s3931 = scalar_lea.sflag [#allocation5], 1
    %3932 = vsyncpa %s3931, 1
    %3933 = vsyncpa [#allocation7], 1
    %s3934 = scalar_lea.sflag [#allocation7], 1
    %3935 = vsyncpa %s3934, 1
    %3936 = vsyncpa [#allocation10], 1
    %s3937 = scalar_lea.sflag [#allocation10], 1
    %3938 = vsyncpa %s3937, 1

</llo_original>
